<compile_context>
chip_gen: v7x
topology: tpu7x:2x2x1
jax: 0.10.0
libtpu: 0.0.40
codegen_flags: <defaults>
</compile_context>

<pallas_src>
import math
from functools import partial

import jax
import jax.numpy as jnp
from jax.experimental import pallas as pl

# ----- config (small, consistent with the module's forward) -----
VOCAB = 50
EMBED = 32            # embed_size / input_size
HIDDEN = 64           # ff hidden_size
N_LAYERS = 2
N_HEADS = 4           # EMBED % N_HEADS == 0
HEAD_DIM = EMBED // N_HEADS
PAD_IDX = 0
MAX_SEQ_LEN = 16
LN_EPS = 1e-5

# packed-slab geometry
W_ROWS = 3 * EMBED + HIDDEN      # 160 rows / layer: [wqkv(32) | wo(32) | w1(32) | w2(64)]
W_COLS = 3 * EMBED               # 96 lanes (widest weight)
P_ROWS_PER_LAYER = 8             # bqkv, bo, ln1g, ln1b, ln2g, ln2b, b1, b2
P_COLS = 3 * EMBED               # 96 lanes (widest vector param)


def _layernorm(v, g, b):
    mu = jnp.mean(v, axis=-1, keepdims=True)
    var = jnp.mean((v - mu) ** 2, axis=-1, keepdims=True)
    return (v - mu) * jax.lax.rsqrt(var + LN_EPS) * g + b


def _gelu(x):
    # TODO(synk): torch nn.GELU() default is the exact erf form; tanh approximation
    # used since erf lowering support on Mosaic varies (~1e-3 difference).
    c = math.sqrt(2.0 / math.pi)
    return 0.5 * x * (1.0 + jnp.tanh(c * (x + 0.044715 * x * x * x)))


# ---------------------------------------------------------------------------
# Fused Pallas kernel: all layers + final LayerNorm, everything VMEM-resident
# ---------------------------------------------------------------------------
def fused_encoder_kernel(x_ref, bias_ref, w_ref, p_ref, out_ref, *,
                         n_layers, n_heads, batch, seq):
    E = EMBED
    dh = HEAD_DIM

    x = x_ref[...]                                   # (B*T, E) f32 activation slab
    # additive key-padding bias (B, T) -> head-major (H*B, 1, T), hoisted out of loop
    bias_b = bias_ref[...][:, None, :]               # (B, 1, T)
    bias_hb = jnp.concatenate([bias_b] * n_heads, axis=0)   # (H*B, 1, T)

    for l in range(n_layers):
        # ---- static slices out of the two packed slabs (no per-param DMAs) ----
        wqkv = w_ref[l, 0:E, :]                          # (E, 3E) bf16, Q cols pre-scaled
        wo = w_ref[l, E:2 * E, 0:E]                      # (E, E)   bf16
        w1 = w_ref[l, 2 * E:3 * E, 0:HIDDEN]             # (E, H)   bf16
        w2 = w_ref[l, 3 * E:3 * E + HIDDEN, 0:E]         # (H, E)   bf16
        base = l * P_ROWS_PER_LAYER
        bqkv = p_ref[base + 0:base + 1, :]               # (1, 3E) f32, Q part pre-scaled
        bo = p_ref[base + 1:base + 2, 0:E]
        ln1g = p_ref[base + 2:base + 3, 0:E]
        ln1b = p_ref[base + 3:base + 4, 0:E]
        ln2g = p_ref[base + 4:base + 5, 0:E]
        ln2b = p_ref[base + 5:base + 6, 0:E]
        b1 = p_ref[base + 6:base + 7, 0:HIDDEN]
        b2 = p_ref[base + 7:base + 8, 0:E]

        # ---- pre-norm + fused QKV projection (one MXU pass, bf16 operands, f32 acc) ----
        xn = _layernorm(x, ln1g, ln1b)
        qkv = jnp.dot(xn.astype(jnp.bfloat16), wqkv,
                      preferred_element_type=jnp.float32) + bqkv       # (BT, 3E) f32

        # ---- head-major stack (H*B, T, dh); scale already folded into wqkv/bqkv ----
        # (kept as slice+concat: Mosaic does not lower non-minor-dim transposes or
        #  multi-batch-dim dot_general needed for the pure reshape/4-D-einsum form)
        def head_stack(off):
            return jnp.concatenate(
                [qkv[:, off + h * dh: off + (h + 1) * dh].reshape(batch, seq, dh)
                 for h in range(n_heads)], axis=0)

        q_st = head_stack(0).astype(jnp.bfloat16)
        k_st = head_stack(E).astype(jnp.bfloat16)
        v_st = head_stack(2 * E).astype(jnp.bfloat16)

        # ---- attention batched over (head, batch): one softmax for all heads ----
        s = jnp.einsum('btd,bsd->bts', q_st, k_st,
                       preferred_element_type=jnp.float32) + bias_hb   # (H*B, T, T) f32
        s_max = jnp.max(s, axis=-1, keepdims=True)
        e = jnp.exp(s - s_max)
        p = e * pl.reciprocal(jnp.sum(e, axis=-1, keepdims=True), approx=True)
        o_st = jnp.einsum('bts,bsd->btd', p.astype(jnp.bfloat16), v_st,
                          preferred_element_type=jnp.float32)          # (H*B, T, dh) f32

        # ---- concat heads back to (BT, E), single output projection ----
        attn = jnp.concatenate(
            [o_st[h * batch:(h + 1) * batch].reshape(batch * seq, dh)
             for h in range(n_heads)], axis=-1)                        # (BT, E) f32
        attn = jnp.dot(attn.astype(jnp.bfloat16), wo,
                       preferred_element_type=jnp.float32) + bo
        x = x + attn

        # ---- feed-forward, then norm2 AFTER ff (reference: x = x + norm2(ff(x))) ----
        h1 = _gelu(jnp.dot(x.astype(jnp.bfloat16), w1,
                           preferred_element_type=jnp.float32) + b1)
        ff = jnp.dot(h1.astype(jnp.bfloat16), w2,
                     preferred_element_type=jnp.float32) + b2
        x = x + _layernorm(ff, ln2g, ln2b)

    # final LayerNorm (norm_first => final_norm) from the last two slab rows
    fbase = n_layers * P_ROWS_PER_LAYER
    fg = p_ref[fbase:fbase + 1, 0:E]
    fb = p_ref[fbase + 1:fbase + 2, 0:E]
    out_ref[...] = _layernorm(x, fg, fb)


def run_fused_encoder(x_flat, key_bias, w_slab, p_slab, *, batch, seq):
    BT, E = x_flat.shape
    kernel = partial(fused_encoder_kernel,
                     n_layers=N_LAYERS, n_heads=N_HEADS, batch=batch, seq=seq)
    # No grid: single invocation, 4 operands, everything full-resident in VMEM.
    return pl.pallas_call(
        kernel,
        out_shape=jax.ShapeDtypeStruct((BT, E), jnp.float32),
    )(x_flat, key_bias, w_slab, p_slab)


# ---------------------------------------------------------------------------
# Parameter construction (deterministic, synthetic) — packed into 2 slabs
# ---------------------------------------------------------------------------
def sinusoidal_pe(max_len, d):
    # TODO(synk): PositionalEncoding(mixed=True) source unavailable; using the
    # standard interleaved sinusoidal encoding (dropout is identity at eval).
    pos = jnp.arange(max_len, dtype=jnp.float32)[:, None]
    div = jnp.exp(jnp.arange(0, d, 2, dtype=jnp.float32) * (-math.log(10000.0) / d))
    pe = jnp.zeros((max_len, d), jnp.float32)
    pe = pe.at[:, 0::2].set(jnp.sin(pos * div))
    pe = pe.at[:, 1::2].set(jnp.cos(pos * div))
    return pe


def _pad_row(vec):
    r = jnp.zeros((P_COLS,), jnp.float32)
    return r.at[0:vec.shape[0]].set(vec.astype(jnp.float32))


def init_params(key):
    keys = jax.random.split(key, 2 + N_LAYERS)

    emb = jax.random.normal(keys[0], (VOCAB, EMBED), jnp.float32) * 0.02
    emb = emb.at[PAD_IDX].set(0.0)               # Embedding(padding_idx=0)
    pe = sinusoidal_pe(MAX_SEQ_LEN, EMBED)

    def linear(k, fan_in, fan_out):
        kw, kb = jax.random.split(k)
        w = jax.random.normal(kw, (fan_in, fan_out), jnp.float32) * 0.05
        b = jax.random.normal(kb, (fan_out,), jnp.float32) * 0.01
        return w, b

    scale = 1.0 / math.sqrt(HEAD_DIM)            # folded into Q weight/bias at init
    w_layers, p_rows = [], []
    for i in range(N_LAYERS):
        lk = jax.random.split(keys[2 + i], 6)
        wq, bq = linear(lk[0], EMBED, EMBED)
        wk, bk = linear(lk[1], EMBED, EMBED)
        wv, bv = linear(lk[2], EMBED, EMBED)
        wo, bo = linear(lk[3], EMBED, EMBED)
        w1, b1 = linear(lk[4], EMBED, HIDDEN)
        w2, b2 = linear(lk[5], HIDDEN, EMBED)

        wqkv = jnp.concatenate([wq * scale, wk, wv], axis=1)      # (E, 3E)
        bqkv = jnp.concatenate([bq * scale, bk, bv], axis=0)      # (3E,)

        # bf16 matmul-weight slab rows for this layer: (160, 96)
        ws = jnp.zeros((W_ROWS, W_COLS), jnp.float32)
        ws = ws.at[0:EMBED, :].set(wqkv)
        ws = ws.at[EMBED:2 * EMBED, 0:EMBED].set(wo)
        ws = ws.at[2 * EMBED:3 * EMBED, 0:HIDDEN].set(w1)
        ws = ws.at[3 * EMBED:3 * EMBED + HIDDEN, 0:EMBED].set(w2)
        w_layers.append(ws)

        # f32 bias/LayerNorm slab rows for this layer (8 rows x 96)
        p_rows += [
            _pad_row(bqkv),
            _pad_row(bo),
            _pad_row(jnp.ones((EMBED,), jnp.float32)),    # ln1 gamma
            _pad_row(jnp.zeros((EMBED,), jnp.float32)),   # ln1 beta
            _pad_row(jnp.ones((EMBED,), jnp.float32)),    # ln2 gamma
            _pad_row(jnp.zeros((EMBED,), jnp.float32)),   # ln2 beta
            _pad_row(b1),
            _pad_row(b2),
        ]

    # final LayerNorm params (last two rows)
    p_rows += [_pad_row(jnp.ones((EMBED,), jnp.float32)),
               _pad_row(jnp.zeros((EMBED,), jnp.float32))]

    w_slab = jnp.stack(w_layers, axis=0).astype(jnp.bfloat16)    # (L, 160, 96) bf16
    p_slab = jnp.stack(p_rows, axis=0)                           # (L*8+2, 96) f32
    return emb, pe, w_slab, p_slab


# ---------------------------------------------------------------------------
# Full forward (mirrors TransformerEncoder.forward; dropout = identity at eval)
# ---------------------------------------------------------------------------
def transformer_encoder(ids, params):
    emb, pe, w_slab, p_slab = params
    B, T = ids.shape

    pad_mask = (ids == PAD_IDX)                                  # (B, T)
    # ein.repeat 'b t -> (b h) 1 t'  (context output, PyTorch convention: b-major)
    attn_pad_mask = jnp.repeat(pad_mask, N_HEADS, axis=0)[:, None, :]

    # embedding gather (plain-JAX glue); emb_scale_factor = 1 (scale_up_embeddings=False)
    x = emb[ids].astype(jnp.float32) * 1.0
    x = x + pe[:T][None, :, :]                                   # PositionalEncoding
    x_flat = x.reshape(B * T, EMBED)

    # key-padding bias as a single (B, T) array; expanded once inside the kernel
    key_bias = pad_mask.astype(jnp.float32) * (-1e30)

    out_flat = run_fused_encoder(x_flat, key_bias, w_slab, p_slab, batch=B, seq=T)
    out = out_flat.reshape(B, T, EMBED)
    # Context(memory=out, memory_attn_pad_mask=attn_mask, cached_targets=None)
    return out, (out, attn_pad_mask, None)


if __name__ == "__main__":
    B, T = 2, 8
    key = jax.random.PRNGKey(0)
    k_params, k_ids = jax.random.split(key)

    params = init_params(k_params)

    ids = jax.random.randint(k_ids, (B, T), 1, VOCAB, dtype=jnp.int32)
    ids = ids.at[0, -2:].set(PAD_IDX)   # exercise the key padding mask

    out, ctx = transformer_encoder(ids, params)
    jax.block_until_ready(out)

    assert out.shape == (B, T, EMBED)
    assert ctx[1].shape == (B * N_HEADS, 1, T)
    assert bool(jnp.all(jnp.isfinite(out)))
    print("KERNEL_OK")
</pallas_src>

<mosaic_0001>
module attributes {stable_mosaic.version = 11 : i64} {
  func.func @fused_encoder_kernel(%arg0: memref<16x32xf32, #tpu.memory_space<vmem>>, %arg1: memref<2x8xf32, #tpu.memory_space<vmem>>, %arg2: memref<2x160x96xbf16, #tpu.memory_space<vmem>>, %arg3: memref<18x96xf32, #tpu.memory_space<vmem>>, %arg4: memref<16x32xf32, #tpu.memory_space<vmem>>) attributes {dimension_semantics = [], scalar_prefetch = 0 : i64, scratch_operands = 0 : i64, tpu.core_type = #tpu.core_type<tc>} {
    %c0 = arith.constant 0 : index
    %c0_0 = arith.constant 0 : index
    %0 = vector.load %arg0[%c0, %c0_0] : memref<16x32xf32, #tpu.memory_space<vmem>>, vector<16x32xf32>
    %c0_1 = arith.constant 0 : index
    %c0_2 = arith.constant 0 : index
    %1 = vector.load %arg1[%c0_1, %c0_2] : memref<2x8xf32, #tpu.memory_space<vmem>>, vector<2x8xf32>
    %2 = vector.shape_cast %1 : vector<2x8xf32> to vector<2x1x8xf32>
    %3 = tpu.concatenate %2, %2, %2, %2 in 0 : vector<2x1x8xf32>, vector<2x1x8xf32>, vector<2x1x8xf32>, vector<2x1x8xf32> -> vector<8x1x8xf32>
    %c0_3 = arith.constant 0 : index
    %c0_4 = arith.constant 0 : index
    %c0_5 = arith.constant 0 : index
    %4 = vector.load %arg2[%c0_3, %c0_4, %c0_5] : memref<2x160x96xbf16, #tpu.memory_space<vmem>>, vector<1x32x96xbf16>
    %5 = vector.shape_cast %4 : vector<1x32x96xbf16> to vector<32x96xbf16>
    %c0_6 = arith.constant 0 : index
    %c32 = arith.constant 32 : index
    %c0_7 = arith.constant 0 : index
    %6 = vector.load %arg2[%c0_6, %c32, %c0_7] : memref<2x160x96xbf16, #tpu.memory_space<vmem>>, vector<1x32x32xbf16>
    %7 = vector.shape_cast %6 : vector<1x32x32xbf16> to vector<32x32xbf16>
    %c0_8 = arith.constant 0 : index
    %c64 = arith.constant 64 : index
    %c0_9 = arith.constant 0 : index
    %8 = vector.load %arg2[%c0_8, %c64, %c0_9] : memref<2x160x96xbf16, #tpu.memory_space<vmem>>, vector<1x32x64xbf16>
    %9 = vector.shape_cast %8 : vector<1x32x64xbf16> to vector<32x64xbf16>
    %c0_10 = arith.constant 0 : index
    %c96 = arith.constant 96 : index
    %c0_11 = arith.constant 0 : index
    %10 = vector.load %arg2[%c0_10, %c96, %c0_11] : memref<2x160x96xbf16, #tpu.memory_space<vmem>>, vector<1x64x32xbf16>
    %11 = vector.shape_cast %10 : vector<1x64x32xbf16> to vector<64x32xbf16>
    %c0_12 = arith.constant 0 : index
    %c0_13 = arith.constant 0 : index
    %12 = vector.load %arg3[%c0_12, %c0_13] : memref<18x96xf32, #tpu.memory_space<vmem>>, vector<1x96xf32>
    %c1 = arith.constant 1 : index
    %c0_14 = arith.constant 0 : index
    %13 = vector.load %arg3[%c1, %c0_14] : memref<18x96xf32, #tpu.memory_space<vmem>>, vector<1x32xf32>
    %c2 = arith.constant 2 : index
    %c0_15 = arith.constant 0 : index
    %14 = vector.load %arg3[%c2, %c0_15] : memref<18x96xf32, #tpu.memory_space<vmem>>, vector<1x32xf32>
    %c3 = arith.constant 3 : index
    %c0_16 = arith.constant 0 : index
    %15 = vector.load %arg3[%c3, %c0_16] : memref<18x96xf32, #tpu.memory_space<vmem>>, vector<1x32xf32>
    %c4 = arith.constant 4 : index
    %c0_17 = arith.constant 0 : index
    %16 = vector.load %arg3[%c4, %c0_17] : memref<18x96xf32, #tpu.memory_space<vmem>>, vector<1x32xf32>
    %c5 = arith.constant 5 : index
    %c0_18 = arith.constant 0 : index
    %17 = vector.load %arg3[%c5, %c0_18] : memref<18x96xf32, #tpu.memory_space<vmem>>, vector<1x32xf32>
    %c6 = arith.constant 6 : index
    %c0_19 = arith.constant 0 : index
    %18 = vector.load %arg3[%c6, %c0_19] : memref<18x96xf32, #tpu.memory_space<vmem>>, vector<1x64xf32>
    %c7 = arith.constant 7 : index
    %c0_20 = arith.constant 0 : index
    %19 = vector.load %arg3[%c7, %c0_20] : memref<18x96xf32, #tpu.memory_space<vmem>>, vector<1x32xf32>
    %cst = arith.constant dense<0.000000e+00> : vector<16xf32>
    %20 = vector.multi_reduction <add>, %0, %cst [1] : vector<16x32xf32> to vector<16xf32>
    %21 = vector.shape_cast %20 : vector<16xf32> to vector<16x1xf32>
    %cst_21 = arith.constant 3.200000e+01 : f32
    %22 = vector.broadcast %cst_21 : f32 to vector<16x1xf32>
    %23 = arith.divf %21, %22 : vector<16x1xf32>
    %24 = vector.broadcast %23 : vector<16x1xf32> to vector<16x32xf32>
    %25 = arith.subf %0, %24 : vector<16x32xf32>
    %26 = arith.mulf %25, %25 : vector<16x32xf32>
    %cst_22 = arith.constant dense<0.000000e+00> : vector<16xf32>
    %27 = vector.multi_reduction <add>, %26, %cst_22 [1] : vector<16x32xf32> to vector<16xf32>
    %28 = vector.shape_cast %27 : vector<16xf32> to vector<16x1xf32>
    %cst_23 = arith.constant 3.200000e+01 : f32
    %29 = vector.broadcast %cst_23 : f32 to vector<16x1xf32>
    %30 = arith.divf %28, %29 : vector<16x1xf32>
    %31 = vector.broadcast %23 : vector<16x1xf32> to vector<16x32xf32>
    %32 = arith.subf %0, %31 : vector<16x32xf32>
    %cst_24 = arith.constant 9.99999974E-6 : f32
    %33 = vector.broadcast %cst_24 : f32 to vector<16x1xf32>
    %34 = arith.addf %30, %33 : vector<16x1xf32>
    %35 = math.rsqrt %34 : vector<16x1xf32>
    %36 = vector.broadcast %35 : vector<16x1xf32> to vector<16x32xf32>
    %37 = arith.mulf %32, %36 : vector<16x32xf32>
    %38 = vector.broadcast %14 : vector<1x32xf32> to vector<16x32xf32>
    %39 = arith.mulf %37, %38 : vector<16x32xf32>
    %40 = vector.broadcast %15 : vector<1x32xf32> to vector<16x32xf32>
    %41 = arith.addf %39, %40 : vector<16x32xf32>
    %42 = arith.truncf %41 : vector<16x32xf32> to vector<16x32xbf16>
    %cst_25 = arith.constant dense<0.000000e+00> : vector<16x96xf32>
    %43 = tpu.matmul %42, %5, %cst_25 {dimension_numbers = #tpu.dot_dimension_numbers<[1], [0], [0], [1], [0, 0, 1, 1], [], []>} : vector<16x32xbf16>, vector<32x96xbf16>, vector<16x96xf32> -> vector<16x96xf32>
    %44 = vector.broadcast %12 : vector<1x96xf32> to vector<16x96xf32>
    %45 = arith.addf %43, %44 : vector<16x96xf32>
    %46 = vector.extract_strided_slice %45 {offsets = [0, 0], sizes = [16, 8], strides = [1, 1]} : vector<16x96xf32> to vector<16x8xf32>
    %47 = vector.shape_cast %46 : vector<16x8xf32> to vector<2x8x8xf32>
    %48 = vector.extract_strided_slice %45 {offsets = [0, 8], sizes = [16, 8], strides = [1, 1]} : vector<16x96xf32> to vector<16x8xf32>
    %49 = vector.shape_cast %48 : vector<16x8xf32> to vector<2x8x8xf32>
    %50 = vector.extract_strided_slice %45 {offsets = [0, 16], sizes = [16, 8], strides = [1, 1]} : vector<16x96xf32> to vector<16x8xf32>
    %51 = vector.shape_cast %50 : vector<16x8xf32> to vector<2x8x8xf32>
    %52 = vector.extract_strided_slice %45 {offsets = [0, 24], sizes = [16, 8], strides = [1, 1]} : vector<16x96xf32> to vector<16x8xf32>
    %53 = vector.shape_cast %52 : vector<16x8xf32> to vector<2x8x8xf32>
    %54 = tpu.concatenate %47, %49, %51, %53 in 0 : vector<2x8x8xf32>, vector<2x8x8xf32>, vector<2x8x8xf32>, vector<2x8x8xf32> -> vector<8x8x8xf32>
    %55 = arith.truncf %54 : vector<8x8x8xf32> to vector<8x8x8xbf16>
    %56 = vector.extract_strided_slice %45 {offsets = [0, 32], sizes = [16, 8], strides = [1, 1]} : vector<16x96xf32> to vector<16x8xf32>
    %57 = vector.shape_cast %56 : vector<16x8xf32> to vector<2x8x8xf32>
    %58 = vector.extract_strided_slice %45 {offsets = [0, 40], sizes = [16, 8], strides = [1, 1]} : vector<16x96xf32> to vector<16x8xf32>
    %59 = vector.shape_cast %58 : vector<16x8xf32> to vector<2x8x8xf32>
    %60 = vector.extract_strided_slice %45 {offsets = [0, 48], sizes = [16, 8], strides = [1, 1]} : vector<16x96xf32> to vector<16x8xf32>
    %61 = vector.shape_cast %60 : vector<16x8xf32> to vector<2x8x8xf32>
    %62 = vector.extract_strided_slice %45 {offsets = [0, 56], sizes = [16, 8], strides = [1, 1]} : vector<16x96xf32> to vector<16x8xf32>
    %63 = vector.shape_cast %62 : vector<16x8xf32> to vector<2x8x8xf32>
    %64 = tpu.concatenate %57, %59, %61, %63 in 0 : vector<2x8x8xf32>, vector<2x8x8xf32>, vector<2x8x8xf32>, vector<2x8x8xf32> -> vector<8x8x8xf32>
    %65 = arith.truncf %64 : vector<8x8x8xf32> to vector<8x8x8xbf16>
    %66 = vector.extract_strided_slice %45 {offsets = [0, 64], sizes = [16, 8], strides = [1, 1]} : vector<16x96xf32> to vector<16x8xf32>
    %67 = vector.shape_cast %66 : vector<16x8xf32> to vector<2x8x8xf32>
    %68 = vector.extract_strided_slice %45 {offsets = [0, 72], sizes = [16, 8], strides = [1, 1]} : vector<16x96xf32> to vector<16x8xf32>
    %69 = vector.shape_cast %68 : vector<16x8xf32> to vector<2x8x8xf32>
    %70 = vector.extract_strided_slice %45 {offsets = [0, 80], sizes = [16, 8], strides = [1, 1]} : vector<16x96xf32> to vector<16x8xf32>
    %71 = vector.shape_cast %70 : vector<16x8xf32> to vector<2x8x8xf32>
    %72 = vector.extract_strided_slice %45 {offsets = [0, 88], sizes = [16, 8], strides = [1, 1]} : vector<16x96xf32> to vector<16x8xf32>
    %73 = vector.shape_cast %72 : vector<16x8xf32> to vector<2x8x8xf32>
    %74 = tpu.concatenate %67, %69, %71, %73 in 0 : vector<2x8x8xf32>, vector<2x8x8xf32>, vector<2x8x8xf32>, vector<2x8x8xf32> -> vector<8x8x8xf32>
    %75 = arith.truncf %74 : vector<8x8x8xf32> to vector<8x8x8xbf16>
    "tpu.trace_start"() <{level = 10 : i32, message = "btd,bsd->bts"}> : () -> ()
    %cst_26 = arith.constant dense<0.000000e+00> : vector<8x8x8xf32>
    %76 = tpu.matmul %55, %65, %cst_26 {dimension_numbers = #tpu.dot_dimension_numbers<[2], [2], [1], [1], [0, 0, 0, 1, 1, 1], [0], [0]>} : vector<8x8x8xbf16>, vector<8x8x8xbf16>, vector<8x8x8xf32> -> vector<8x8x8xf32>
    "tpu.trace_stop"() : () -> ()
    %77 = vector.broadcast %3 : vector<8x1x8xf32> to vector<8x8x8xf32>
    %78 = arith.addf %76, %77 : vector<8x8x8xf32>
    %cst_27 = arith.constant dense<0xFF800000> : vector<8x8xf32>
    %79 = vector.multi_reduction <maximumf>, %78, %cst_27 [2] : vector<8x8x8xf32> to vector<8x8xf32>
    %80 = vector.shape_cast %79 : vector<8x8xf32> to vector<8x8x1xf32>
    %81 = vector.broadcast %80 : vector<8x8x1xf32> to vector<8x8x8xf32>
    %82 = arith.subf %78, %81 : vector<8x8x8xf32>
    %83 = math.exp %82 : vector<8x8x8xf32>
    %cst_28 = arith.constant dense<0.000000e+00> : vector<8x8xf32>
    %84 = vector.multi_reduction <add>, %83, %cst_28 [2] : vector<8x8x8xf32> to vector<8x8xf32>
    %85 = vector.shape_cast %84 : vector<8x8xf32> to vector<8x8x1xf32>
    %86 = tpu.reciprocal %85 {approx = true} : vector<8x8x1xf32> -> vector<8x8x1xf32>
    %87 = vector.broadcast %86 : vector<8x8x1xf32> to vector<8x8x8xf32>
    %88 = arith.mulf %83, %87 : vector<8x8x8xf32>
    %89 = arith.truncf %88 : vector<8x8x8xf32> to vector<8x8x8xbf16>
    "tpu.trace_start"() <{level = 10 : i32, message = "bts,bsd->btd"}> : () -> ()
    %cst_29 = arith.constant dense<0.000000e+00> : vector<8x8x8xf32>
    %90 = tpu.matmul %89, %75, %cst_29 {dimension_numbers = #tpu.dot_dimension_numbers<[2], [1], [1], [2], [0, 0, 0, 1, 1, 2], [0], [0]>} : vector<8x8x8xbf16>, vector<8x8x8xbf16>, vector<8x8x8xf32> -> vector<8x8x8xf32>
    "tpu.trace_stop"() : () -> ()
    %91 = vector.extract_strided_slice %90 {offsets = [0, 0, 0], sizes = [2, 8, 8], strides = [1, 1, 1]} : vector<8x8x8xf32> to vector<2x8x8xf32>
    %92 = vector.shape_cast %91 : vector<2x8x8xf32> to vector<16x8xf32>
    %93 = vector.extract_strided_slice %90 {offsets = [2, 0, 0], sizes = [2, 8, 8], strides = [1, 1, 1]} : vector<8x8x8xf32> to vector<2x8x8xf32>
    %94 = vector.shape_cast %93 : vector<2x8x8xf32> to vector<16x8xf32>
    %95 = vector.extract_strided_slice %90 {offsets = [4, 0, 0], sizes = [2, 8, 8], strides = [1, 1, 1]} : vector<8x8x8xf32> to vector<2x8x8xf32>
    %96 = vector.shape_cast %95 : vector<2x8x8xf32> to vector<16x8xf32>
    %97 = vector.extract_strided_slice %90 {offsets = [6, 0, 0], sizes = [2, 8, 8], strides = [1, 1, 1]} : vector<8x8x8xf32> to vector<2x8x8xf32>
    %98 = vector.shape_cast %97 : vector<2x8x8xf32> to vector<16x8xf32>
    %99 = tpu.concatenate %92, %94, %96, %98 in 1 : vector<16x8xf32>, vector<16x8xf32>, vector<16x8xf32>, vector<16x8xf32> -> vector<16x32xf32>
    %100 = arith.truncf %99 : vector<16x32xf32> to vector<16x32xbf16>
    %cst_30 = arith.constant dense<0.000000e+00> : vector<16x32xf32>
    %101 = tpu.matmul %100, %7, %cst_30 {dimension_numbers = #tpu.dot_dimension_numbers<[1], [0], [0], [1], [0, 0, 1, 1], [], []>} : vector<16x32xbf16>, vector<32x32xbf16>, vector<16x32xf32> -> vector<16x32xf32>
    %102 = vector.broadcast %13 : vector<1x32xf32> to vector<16x32xf32>
    %103 = arith.addf %101, %102 : vector<16x32xf32>
    %104 = arith.addf %0, %103 : vector<16x32xf32>
    %105 = arith.truncf %104 : vector<16x32xf32> to vector<16x32xbf16>
    %cst_31 = arith.constant dense<0.000000e+00> : vector<16x64xf32>
    %106 = tpu.matmul %105, %9, %cst_31 {dimension_numbers = #tpu.dot_dimension_numbers<[1], [0], [0], [1], [0, 0, 1, 1], [], []>} : vector<16x32xbf16>, vector<32x64xbf16>, vector<16x64xf32> -> vector<16x64xf32>
    %107 = vector.broadcast %18 : vector<1x64xf32> to vector<16x64xf32>
    %108 = arith.addf %106, %107 : vector<16x64xf32>
    %cst_32 = arith.constant 5.000000e-01 : f32
    %109 = vector.broadcast %cst_32 : f32 to vector<16x64xf32>
    %110 = arith.mulf %109, %108 : vector<16x64xf32>
    %cst_33 = arith.constant 4.471500e-02 : f32
    %111 = vector.broadcast %cst_33 : f32 to vector<16x64xf32>
    %112 = arith.mulf %111, %108 : vector<16x64xf32>
    %113 = arith.mulf %112, %108 : vector<16x64xf32>
    %114 = arith.mulf %113, %108 : vector<16x64xf32>
    %115 = arith.addf %108, %114 : vector<16x64xf32>
    %cst_34 = arith.constant 0.797884583 : f32
    %116 = vector.broadcast %cst_34 : f32 to vector<16x64xf32>
    %117 = arith.mulf %116, %115 : vector<16x64xf32>
    %118 = math.tanh %117 : vector<16x64xf32>
    %cst_35 = arith.constant 1.000000e+00 : f32
    %119 = vector.broadcast %cst_35 : f32 to vector<16x64xf32>
    %120 = arith.addf %119, %118 : vector<16x64xf32>
    %121 = arith.mulf %110, %120 : vector<16x64xf32>
    %122 = arith.truncf %121 : vector<16x64xf32> to vector<16x64xbf16>
    %cst_36 = arith.constant dense<0.000000e+00> : vector<16x32xf32>
    %123 = tpu.matmul %122, %11, %cst_36 {dimension_numbers = #tpu.dot_dimension_numbers<[1], [0], [0], [1], [0, 0, 1, 1], [], []>} : vector<16x64xbf16>, vector<64x32xbf16>, vector<16x32xf32> -> vector<16x32xf32>
    %124 = vector.broadcast %19 : vector<1x32xf32> to vector<16x32xf32>
    %125 = arith.addf %123, %124 : vector<16x32xf32>
    %cst_37 = arith.constant dense<0.000000e+00> : vector<16xf32>
    %126 = vector.multi_reduction <add>, %125, %cst_37 [1] : vector<16x32xf32> to vector<16xf32>
    %127 = vector.shape_cast %126 : vector<16xf32> to vector<16x1xf32>
    %cst_38 = arith.constant 3.200000e+01 : f32
    %128 = vector.broadcast %cst_38 : f32 to vector<16x1xf32>
    %129 = arith.divf %127, %128 : vector<16x1xf32>
    %130 = vector.broadcast %129 : vector<16x1xf32> to vector<16x32xf32>
    %131 = arith.subf %125, %130 : vector<16x32xf32>
    %132 = arith.mulf %131, %131 : vector<16x32xf32>
    %cst_39 = arith.constant dense<0.000000e+00> : vector<16xf32>
    %133 = vector.multi_reduction <add>, %132, %cst_39 [1] : vector<16x32xf32> to vector<16xf32>
    %134 = vector.shape_cast %133 : vector<16xf32> to vector<16x1xf32>
    %cst_40 = arith.constant 3.200000e+01 : f32
    %135 = vector.broadcast %cst_40 : f32 to vector<16x1xf32>
    %136 = arith.divf %134, %135 : vector<16x1xf32>
    %137 = vector.broadcast %129 : vector<16x1xf32> to vector<16x32xf32>
    %138 = arith.subf %125, %137 : vector<16x32xf32>
    %cst_41 = arith.constant 9.99999974E-6 : f32
    %139 = vector.broadcast %cst_41 : f32 to vector<16x1xf32>
    %140 = arith.addf %136, %139 : vector<16x1xf32>
    %141 = math.rsqrt %140 : vector<16x1xf32>
    %142 = vector.broadcast %141 : vector<16x1xf32> to vector<16x32xf32>
    %143 = arith.mulf %138, %142 : vector<16x32xf32>
    %144 = vector.broadcast %16 : vector<1x32xf32> to vector<16x32xf32>
    %145 = arith.mulf %143, %144 : vector<16x32xf32>
    %146 = vector.broadcast %17 : vector<1x32xf32> to vector<16x32xf32>
    %147 = arith.addf %145, %146 : vector<16x32xf32>
    %148 = arith.addf %104, %147 : vector<16x32xf32>
    %c1_42 = arith.constant 1 : index
    %c0_43 = arith.constant 0 : index
    %c0_44 = arith.constant 0 : index
    %149 = vector.load %arg2[%c1_42, %c0_43, %c0_44] : memref<2x160x96xbf16, #tpu.memory_space<vmem>>, vector<1x32x96xbf16>
    %150 = vector.shape_cast %149 : vector<1x32x96xbf16> to vector<32x96xbf16>
    %c1_45 = arith.constant 1 : index
    %c32_46 = arith.constant 32 : index
    %c0_47 = arith.constant 0 : index
    %151 = vector.load %arg2[%c1_45, %c32_46, %c0_47] : memref<2x160x96xbf16, #tpu.memory_space<vmem>>, vector<1x32x32xbf16>
    %152 = vector.shape_cast %151 : vector<1x32x32xbf16> to vector<32x32xbf16>
    %c1_48 = arith.constant 1 : index
    %c64_49 = arith.constant 64 : index
    %c0_50 = arith.constant 0 : index
    %153 = vector.load %arg2[%c1_48, %c64_49, %c0_50] : memref<2x160x96xbf16, #tpu.memory_space<vmem>>, vector<1x32x64xbf16>
    %154 = vector.shape_cast %153 : vector<1x32x64xbf16> to vector<32x64xbf16>
    %c1_51 = arith.constant 1 : index
    %c96_52 = arith.constant 96 : index
    %c0_53 = arith.constant 0 : index
    %155 = vector.load %arg2[%c1_51, %c96_52, %c0_53] : memref<2x160x96xbf16, #tpu.memory_space<vmem>>, vector<1x64x32xbf16>
    %156 = vector.shape_cast %155 : vector<1x64x32xbf16> to vector<64x32xbf16>
    %c8 = arith.constant 8 : index
    %c0_54 = arith.constant 0 : index
    %157 = vector.load %arg3[%c8, %c0_54] : memref<18x96xf32, #tpu.memory_space<vmem>>, vector<1x96xf32>
    %c9 = arith.constant 9 : index
    %c0_55 = arith.constant 0 : index
    %158 = vector.load %arg3[%c9, %c0_55] : memref<18x96xf32, #tpu.memory_space<vmem>>, vector<1x32xf32>
    %c10 = arith.constant 10 : index
    %c0_56 = arith.constant 0 : index
    %159 = vector.load %arg3[%c10, %c0_56] : memref<18x96xf32, #tpu.memory_space<vmem>>, vector<1x32xf32>
    %c11 = arith.constant 11 : index
    %c0_57 = arith.constant 0 : index
    %160 = vector.load %arg3[%c11, %c0_57] : memref<18x96xf32, #tpu.memory_space<vmem>>, vector<1x32xf32>
    %c12 = arith.constant 12 : index
    %c0_58 = arith.constant 0 : index
    %161 = vector.load %arg3[%c12, %c0_58] : memref<18x96xf32, #tpu.memory_space<vmem>>, vector<1x32xf32>
    %c13 = arith.constant 13 : index
    %c0_59 = arith.constant 0 : index
    %162 = vector.load %arg3[%c13, %c0_59] : memref<18x96xf32, #tpu.memory_space<vmem>>, vector<1x32xf32>
    %c14 = arith.constant 14 : index
    %c0_60 = arith.constant 0 : index
    %163 = vector.load %arg3[%c14, %c0_60] : memref<18x96xf32, #tpu.memory_space<vmem>>, vector<1x64xf32>
    %c15 = arith.constant 15 : index
    %c0_61 = arith.constant 0 : index
    %164 = vector.load %arg3[%c15, %c0_61] : memref<18x96xf32, #tpu.memory_space<vmem>>, vector<1x32xf32>
    %cst_62 = arith.constant dense<0.000000e+00> : vector<16xf32>
    %165 = vector.multi_reduction <add>, %148, %cst_62 [1] : vector<16x32xf32> to vector<16xf32>
    %166 = vector.shape_cast %165 : vector<16xf32> to vector<16x1xf32>
    %cst_63 = arith.constant 3.200000e+01 : f32
    %167 = vector.broadcast %cst_63 : f32 to vector<16x1xf32>
    %168 = arith.divf %166, %167 : vector<16x1xf32>
    %169 = vector.broadcast %168 : vector<16x1xf32> to vector<16x32xf32>
    %170 = arith.subf %148, %169 : vector<16x32xf32>
    %171 = arith.mulf %170, %170 : vector<16x32xf32>
    %cst_64 = arith.constant dense<0.000000e+00> : vector<16xf32>
    %172 = vector.multi_reduction <add>, %171, %cst_64 [1] : vector<16x32xf32> to vector<16xf32>
    %173 = vector.shape_cast %172 : vector<16xf32> to vector<16x1xf32>
    %cst_65 = arith.constant 3.200000e+01 : f32
    %174 = vector.broadcast %cst_65 : f32 to vector<16x1xf32>
    %175 = arith.divf %173, %174 : vector<16x1xf32>
    %176 = vector.broadcast %168 : vector<16x1xf32> to vector<16x32xf32>
    %177 = arith.subf %148, %176 : vector<16x32xf32>
    %cst_66 = arith.constant 9.99999974E-6 : f32
    %178 = vector.broadcast %cst_66 : f32 to vector<16x1xf32>
    %179 = arith.addf %175, %178 : vector<16x1xf32>
    %180 = math.rsqrt %179 : vector<16x1xf32>
    %181 = vector.broadcast %180 : vector<16x1xf32> to vector<16x32xf32>
    %182 = arith.mulf %177, %181 : vector<16x32xf32>
    %183 = vector.broadcast %159 : vector<1x32xf32> to vector<16x32xf32>
    %184 = arith.mulf %182, %183 : vector<16x32xf32>
    %185 = vector.broadcast %160 : vector<1x32xf32> to vector<16x32xf32>
    %186 = arith.addf %184, %185 : vector<16x32xf32>
    %187 = arith.truncf %186 : vector<16x32xf32> to vector<16x32xbf16>
    %cst_67 = arith.constant dense<0.000000e+00> : vector<16x96xf32>
    %188 = tpu.matmul %187, %150, %cst_67 {dimension_numbers = #tpu.dot_dimension_numbers<[1], [0], [0], [1], [0, 0, 1, 1], [], []>} : vector<16x32xbf16>, vector<32x96xbf16>, vector<16x96xf32> -> vector<16x96xf32>
    %189 = vector.broadcast %157 : vector<1x96xf32> to vector<16x96xf32>
    %190 = arith.addf %188, %189 : vector<16x96xf32>
    %191 = vector.extract_strided_slice %190 {offsets = [0, 0], sizes = [16, 8], strides = [1, 1]} : vector<16x96xf32> to vector<16x8xf32>
    %192 = vector.shape_cast %191 : vector<16x8xf32> to vector<2x8x8xf32>
    %193 = vector.extract_strided_slice %190 {offsets = [0, 8], sizes = [16, 8], strides = [1, 1]} : vector<16x96xf32> to vector<16x8xf32>
    %194 = vector.shape_cast %193 : vector<16x8xf32> to vector<2x8x8xf32>
    %195 = vector.extract_strided_slice %190 {offsets = [0, 16], sizes = [16, 8], strides = [1, 1]} : vector<16x96xf32> to vector<16x8xf32>
    %196 = vector.shape_cast %195 : vector<16x8xf32> to vector<2x8x8xf32>
    %197 = vector.extract_strided_slice %190 {offsets = [0, 24], sizes = [16, 8], strides = [1, 1]} : vector<16x96xf32> to vector<16x8xf32>
    %198 = vector.shape_cast %197 : vector<16x8xf32> to vector<2x8x8xf32>
    %199 = tpu.concatenate %192, %194, %196, %198 in 0 : vector<2x8x8xf32>, vector<2x8x8xf32>, vector<2x8x8xf32>, vector<2x8x8xf32> -> vector<8x8x8xf32>
    %200 = arith.truncf %199 : vector<8x8x8xf32> to vector<8x8x8xbf16>
    %201 = vector.extract_strided_slice %190 {offsets = [0, 32], sizes = [16, 8], strides = [1, 1]} : vector<16x96xf32> to vector<16x8xf32>
    %202 = vector.shape_cast %201 : vector<16x8xf32> to vector<2x8x8xf32>
    %203 = vector.extract_strided_slice %190 {offsets = [0, 40], sizes = [16, 8], strides = [1, 1]} : vector<16x96xf32> to vector<16x8xf32>
    %204 = vector.shape_cast %203 : vector<16x8xf32> to vector<2x8x8xf32>
    %205 = vector.extract_strided_slice %190 {offsets = [0, 48], sizes = [16, 8], strides = [1, 1]} : vector<16x96xf32> to vector<16x8xf32>
    %206 = vector.shape_cast %205 : vector<16x8xf32> to vector<2x8x8xf32>
    %207 = vector.extract_strided_slice %190 {offsets = [0, 56], sizes = [16, 8], strides = [1, 1]} : vector<16x96xf32> to vector<16x8xf32>
    %208 = vector.shape_cast %207 : vector<16x8xf32> to vector<2x8x8xf32>
    %209 = tpu.concatenate %202, %204, %206, %208 in 0 : vector<2x8x8xf32>, vector<2x8x8xf32>, vector<2x8x8xf32>, vector<2x8x8xf32> -> vector<8x8x8xf32>
    %210 = arith.truncf %209 : vector<8x8x8xf32> to vector<8x8x8xbf16>
    %211 = vector.extract_strided_slice %190 {offsets = [0, 64], sizes = [16, 8], strides = [1, 1]} : vector<16x96xf32> to vector<16x8xf32>
    %212 = vector.shape_cast %211 : vector<16x8xf32> to vector<2x8x8xf32>
    %213 = vector.extract_strided_slice %190 {offsets = [0, 72], sizes = [16, 8], strides = [1, 1]} : vector<16x96xf32> to vector<16x8xf32>
    %214 = vector.shape_cast %213 : vector<16x8xf32> to vector<2x8x8xf32>
    %215 = vector.extract_strided_slice %190 {offsets = [0, 80], sizes = [16, 8], strides = [1, 1]} : vector<16x96xf32> to vector<16x8xf32>
    %216 = vector.shape_cast %215 : vector<16x8xf32> to vector<2x8x8xf32>
    %217 = vector.extract_strided_slice %190 {offsets = [0, 88], sizes = [16, 8], strides = [1, 1]} : vector<16x96xf32> to vector<16x8xf32>
    %218 = vector.shape_cast %217 : vector<16x8xf32> to vector<2x8x8xf32>
    %219 = tpu.concatenate %212, %214, %216, %218 in 0 : vector<2x8x8xf32>, vector<2x8x8xf32>, vector<2x8x8xf32>, vector<2x8x8xf32> -> vector<8x8x8xf32>
    %220 = arith.truncf %219 : vector<8x8x8xf32> to vector<8x8x8xbf16>
    "tpu.trace_start"() <{level = 10 : i32, message = "btd,bsd->bts"}> : () -> ()
    %cst_68 = arith.constant dense<0.000000e+00> : vector<8x8x8xf32>
    %221 = tpu.matmul %200, %210, %cst_68 {dimension_numbers = #tpu.dot_dimension_numbers<[2], [2], [1], [1], [0, 0, 0, 1, 1, 1], [0], [0]>} : vector<8x8x8xbf16>, vector<8x8x8xbf16>, vector<8x8x8xf32> -> vector<8x8x8xf32>
    "tpu.trace_stop"() : () -> ()
    %222 = vector.broadcast %3 : vector<8x1x8xf32> to vector<8x8x8xf32>
    %223 = arith.addf %221, %222 : vector<8x8x8xf32>
    %cst_69 = arith.constant dense<0xFF800000> : vector<8x8xf32>
    %224 = vector.multi_reduction <maximumf>, %223, %cst_69 [2] : vector<8x8x8xf32> to vector<8x8xf32>
    %225 = vector.shape_cast %224 : vector<8x8xf32> to vector<8x8x1xf32>
    %226 = vector.broadcast %225 : vector<8x8x1xf32> to vector<8x8x8xf32>
    %227 = arith.subf %223, %226 : vector<8x8x8xf32>
    %228 = math.exp %227 : vector<8x8x8xf32>
    %cst_70 = arith.constant dense<0.000000e+00> : vector<8x8xf32>
    %229 = vector.multi_reduction <add>, %228, %cst_70 [2] : vector<8x8x8xf32> to vector<8x8xf32>
    %230 = vector.shape_cast %229 : vector<8x8xf32> to vector<8x8x1xf32>
    %231 = tpu.reciprocal %230 {approx = true} : vector<8x8x1xf32> -> vector<8x8x1xf32>
    %232 = vector.broadcast %231 : vector<8x8x1xf32> to vector<8x8x8xf32>
    %233 = arith.mulf %228, %232 : vector<8x8x8xf32>
    %234 = arith.truncf %233 : vector<8x8x8xf32> to vector<8x8x8xbf16>
    "tpu.trace_start"() <{level = 10 : i32, message = "bts,bsd->btd"}> : () -> ()
    %cst_71 = arith.constant dense<0.000000e+00> : vector<8x8x8xf32>
    %235 = tpu.matmul %234, %220, %cst_71 {dimension_numbers = #tpu.dot_dimension_numbers<[2], [1], [1], [2], [0, 0, 0, 1, 1, 2], [0], [0]>} : vector<8x8x8xbf16>, vector<8x8x8xbf16>, vector<8x8x8xf32> -> vector<8x8x8xf32>
    "tpu.trace_stop"() : () -> ()
    %236 = vector.extract_strided_slice %235 {offsets = [0, 0, 0], sizes = [2, 8, 8], strides = [1, 1, 1]} : vector<8x8x8xf32> to vector<2x8x8xf32>
    %237 = vector.shape_cast %236 : vector<2x8x8xf32> to vector<16x8xf32>
    %238 = vector.extract_strided_slice %235 {offsets = [2, 0, 0], sizes = [2, 8, 8], strides = [1, 1, 1]} : vector<8x8x8xf32> to vector<2x8x8xf32>
    %239 = vector.shape_cast %238 : vector<2x8x8xf32> to vector<16x8xf32>
    %240 = vector.extract_strided_slice %235 {offsets = [4, 0, 0], sizes = [2, 8, 8], strides = [1, 1, 1]} : vector<8x8x8xf32> to vector<2x8x8xf32>
    %241 = vector.shape_cast %240 : vector<2x8x8xf32> to vector<16x8xf32>
    %242 = vector.extract_strided_slice %235 {offsets = [6, 0, 0], sizes = [2, 8, 8], strides = [1, 1, 1]} : vector<8x8x8xf32> to vector<2x8x8xf32>
    %243 = vector.shape_cast %242 : vector<2x8x8xf32> to vector<16x8xf32>
    %244 = tpu.concatenate %237, %239, %241, %243 in 1 : vector<16x8xf32>, vector<16x8xf32>, vector<16x8xf32>, vector<16x8xf32> -> vector<16x32xf32>
    %245 = arith.truncf %244 : vector<16x32xf32> to vector<16x32xbf16>
    %cst_72 = arith.constant dense<0.000000e+00> : vector<16x32xf32>
    %246 = tpu.matmul %245, %152, %cst_72 {dimension_numbers = #tpu.dot_dimension_numbers<[1], [0], [0], [1], [0, 0, 1, 1], [], []>} : vector<16x32xbf16>, vector<32x32xbf16>, vector<16x32xf32> -> vector<16x32xf32>
    %247 = vector.broadcast %158 : vector<1x32xf32> to vector<16x32xf32>
    %248 = arith.addf %246, %247 : vector<16x32xf32>
    %249 = arith.addf %148, %248 : vector<16x32xf32>
    %250 = arith.truncf %249 : vector<16x32xf32> to vector<16x32xbf16>
    %cst_73 = arith.constant dense<0.000000e+00> : vector<16x64xf32>
    %251 = tpu.matmul %250, %154, %cst_73 {dimension_numbers = #tpu.dot_dimension_numbers<[1], [0], [0], [1], [0, 0, 1, 1], [], []>} : vector<16x32xbf16>, vector<32x64xbf16>, vector<16x64xf32> -> vector<16x64xf32>
    %252 = vector.broadcast %163 : vector<1x64xf32> to vector<16x64xf32>
    %253 = arith.addf %251, %252 : vector<16x64xf32>
    %cst_74 = arith.constant 5.000000e-01 : f32
    %254 = vector.broadcast %cst_74 : f32 to vector<16x64xf32>
    %255 = arith.mulf %254, %253 : vector<16x64xf32>
    %cst_75 = arith.constant 4.471500e-02 : f32
    %256 = vector.broadcast %cst_75 : f32 to vector<16x64xf32>
    %257 = arith.mulf %256, %253 : vector<16x64xf32>
    %258 = arith.mulf %257, %253 : vector<16x64xf32>
    %259 = arith.mulf %258, %253 : vector<16x64xf32>
    %260 = arith.addf %253, %259 : vector<16x64xf32>
    %cst_76 = arith.constant 0.797884583 : f32
    %261 = vector.broadcast %cst_76 : f32 to vector<16x64xf32>
    %262 = arith.mulf %261, %260 : vector<16x64xf32>
    %263 = math.tanh %262 : vector<16x64xf32>
    %cst_77 = arith.constant 1.000000e+00 : f32
    %264 = vector.broadcast %cst_77 : f32 to vector<16x64xf32>
    %265 = arith.addf %264, %263 : vector<16x64xf32>
    %266 = arith.mulf %255, %265 : vector<16x64xf32>
    %267 = arith.truncf %266 : vector<16x64xf32> to vector<16x64xbf16>
    %cst_78 = arith.constant dense<0.000000e+00> : vector<16x32xf32>
    %268 = tpu.matmul %267, %156, %cst_78 {dimension_numbers = #tpu.dot_dimension_numbers<[1], [0], [0], [1], [0, 0, 1, 1], [], []>} : vector<16x64xbf16>, vector<64x32xbf16>, vector<16x32xf32> -> vector<16x32xf32>
    %269 = vector.broadcast %164 : vector<1x32xf32> to vector<16x32xf32>
    %270 = arith.addf %268, %269 : vector<16x32xf32>
    %cst_79 = arith.constant dense<0.000000e+00> : vector<16xf32>
    %271 = vector.multi_reduction <add>, %270, %cst_79 [1] : vector<16x32xf32> to vector<16xf32>
    %272 = vector.shape_cast %271 : vector<16xf32> to vector<16x1xf32>
    %cst_80 = arith.constant 3.200000e+01 : f32
    %273 = vector.broadcast %cst_80 : f32 to vector<16x1xf32>
    %274 = arith.divf %272, %273 : vector<16x1xf32>
    %275 = vector.broadcast %274 : vector<16x1xf32> to vector<16x32xf32>
    %276 = arith.subf %270, %275 : vector<16x32xf32>
    %277 = arith.mulf %276, %276 : vector<16x32xf32>
    %cst_81 = arith.constant dense<0.000000e+00> : vector<16xf32>
    %278 = vector.multi_reduction <add>, %277, %cst_81 [1] : vector<16x32xf32> to vector<16xf32>
    %279 = vector.shape_cast %278 : vector<16xf32> to vector<16x1xf32>
    %cst_82 = arith.constant 3.200000e+01 : f32
    %280 = vector.broadcast %cst_82 : f32 to vector<16x1xf32>
    %281 = arith.divf %279, %280 : vector<16x1xf32>
    %282 = vector.broadcast %274 : vector<16x1xf32> to vector<16x32xf32>
    %283 = arith.subf %270, %282 : vector<16x32xf32>
    %cst_83 = arith.constant 9.99999974E-6 : f32
    %284 = vector.broadcast %cst_83 : f32 to vector<16x1xf32>
    %285 = arith.addf %281, %284 : vector<16x1xf32>
    %286 = math.rsqrt %285 : vector<16x1xf32>
    %287 = vector.broadcast %286 : vector<16x1xf32> to vector<16x32xf32>
    %288 = arith.mulf %283, %287 : vector<16x32xf32>
    %289 = vector.broadcast %161 : vector<1x32xf32> to vector<16x32xf32>
    %290 = arith.mulf %288, %289 : vector<16x32xf32>
    %291 = vector.broadcast %162 : vector<1x32xf32> to vector<16x32xf32>
    %292 = arith.addf %290, %291 : vector<16x32xf32>
    %293 = arith.addf %249, %292 : vector<16x32xf32>
    %c16 = arith.constant 16 : index
    %c0_84 = arith.constant 0 : index
    %294 = vector.load %arg3[%c16, %c0_84] : memref<18x96xf32, #tpu.memory_space<vmem>>, vector<1x32xf32>
    %c17 = arith.constant 17 : index
    %c0_85 = arith.constant 0 : index
    %295 = vector.load %arg3[%c17, %c0_85] : memref<18x96xf32, #tpu.memory_space<vmem>>, vector<1x32xf32>
    %cst_86 = arith.constant dense<0.000000e+00> : vector<16xf32>
    %296 = vector.multi_reduction <add>, %293, %cst_86 [1] : vector<16x32xf32> to vector<16xf32>
    %297 = vector.shape_cast %296 : vector<16xf32> to vector<16x1xf32>
    %cst_87 = arith.constant 3.200000e+01 : f32
    %298 = vector.broadcast %cst_87 : f32 to vector<16x1xf32>
    %299 = arith.divf %297, %298 : vector<16x1xf32>
    %300 = vector.broadcast %299 : vector<16x1xf32> to vector<16x32xf32>
    %301 = arith.subf %293, %300 : vector<16x32xf32>
    %302 = arith.mulf %301, %301 : vector<16x32xf32>
    %cst_88 = arith.constant dense<0.000000e+00> : vector<16xf32>
    %303 = vector.multi_reduction <add>, %302, %cst_88 [1] : vector<16x32xf32> to vector<16xf32>
    %304 = vector.shape_cast %303 : vector<16xf32> to vector<16x1xf32>
    %cst_89 = arith.constant 3.200000e+01 : f32
    %305 = vector.broadcast %cst_89 : f32 to vector<16x1xf32>
    %306 = arith.divf %304, %305 : vector<16x1xf32>
    %307 = vector.broadcast %299 : vector<16x1xf32> to vector<16x32xf32>
    %308 = arith.subf %293, %307 : vector<16x32xf32>
    %cst_90 = arith.constant 9.99999974E-6 : f32
    %309 = vector.broadcast %cst_90 : f32 to vector<16x1xf32>
    %310 = arith.addf %306, %309 : vector<16x1xf32>
    %311 = math.rsqrt %310 : vector<16x1xf32>
    %312 = vector.broadcast %311 : vector<16x1xf32> to vector<16x32xf32>
    %313 = arith.mulf %308, %312 : vector<16x32xf32>
    %314 = vector.broadcast %294 : vector<1x32xf32> to vector<16x32xf32>
    %315 = arith.mulf %313, %314 : vector<16x32xf32>
    %316 = vector.broadcast %295 : vector<1x32xf32> to vector<16x32xf32>
    %317 = arith.addf %315, %316 : vector<16x32xf32>
    %c0_91 = arith.constant 0 : index
    %c0_92 = arith.constant 0 : index
    %318 = vector.load %arg4[%c0_91, %c0_92] : memref<16x32xf32, #tpu.memory_space<vmem>>, vector<16x32xf32>
    tpu.vector_store %arg4[%c0_91, %c0_92], %317 {strides = array<i32>} : memref<16x32xf32, #tpu.memory_space<vmem>>, vector<16x32xf32>,
    return
  }
}

</mosaic_0001>

<llo_original>
// kernel: tpu_custom_call.1
$region0: #{tpu_custom_call.1}
  #allocation0 [shape = 'u32[]', space=smem, size = 0x4, offset = 0x4, fixed_abs, tag = 'smem constant byte address 0x4 - core index']
  #allocation1 [shape = 'u32[144,128]{1,0:T(1,128)}', space=vmem, size = 0x12000, scoped, tag = 'internal scratch']
  %s0 = inlined_call_operand.hbm [shape: f32[16,32], index: 0, kind: input, shape index: {}]
  %s1 = inlined_call_operand.vmem [shape: f32[2,8], index: 1, kind: input, shape index: {}]
  %s2 = inlined_call_operand.hbm [shape: bf16[2,160,96], index: 2, kind: input, shape index: {}]
  %s3 = inlined_call_operand.hbm [shape: f32[18,96], index: 3, kind: input, shape index: {}]
  %s4 = inlined_call_operand.hbm [shape: f32[16,32], index: 4, kind: output, shape index: {}]
  %s5 = sld [smem:[#allocation0]]
  $region38: #{tpu_custom_call.1} parent=0
    _
  %s7 = ssub.s32 1, %s5
  %s8 = scalar_select 0, %s7, %s5
  $region1: #{tpu_custom_call.1} parent=0
    #allocation2 [shape = 'u8[8192]{0}', space=vmem, size = 0x2000, scoped, tag = 'input window, operand 0, single buffered']
    #allocation3 [shape = 's32[1]{0}', space=sflag, size = 0x4, scoped, tag = 'scoped memory for tpu_custom_call.1']
    #allocation4 [shape = 's32[1]{0}', space=sflag, size = 0x4, scoped, tag = 'scoped memory for tpu_custom_call.1']
    #allocation5 [shape = 'u8[81920]{0}', space=vmem, size = 0x14000, scoped, tag = 'input window, operand 2, single buffered']
    #allocation6 [shape = 's32[1]{0}', space=sflag, size = 0x4, scoped, tag = 'scoped memory for tpu_custom_call.1']
    #allocation7 [shape = 'u8[12288]{0}', space=vmem, size = 0x3000, scoped, tag = 'input window, operand 3, single buffered']
    #allocation8 [shape = 'u8[8192]{0}', space=vmem, size = 0x2000, scoped, tag = 'output window, operand 0, single buffered']
    %9 = vsyncpa [#allocation3], 0
    %10 = vsyncpa [#allocation6], 0
    %11 = vsyncpa [#allocation4], 0
    // Predicated region
    $region2: #{tpu_custom_call.1} parent=1 // pred_check
      _
    $region3: #{tpu_custom_call.1} parent=1 // pred_check_branch
      %13 = sbr.rel (0) target = $region5
    $region4: #{tpu_custom_call.1} parent=1 // pred_region
      %s15 = ssub.s32 256, 256
      %16 = vsyncadd [#allocation3], %s15
      %s17 = sshll.u32 [#allocation2], 4
      %s18 = int_to_ptr.vmem [resolvable:$true] %s17
      %23 = dma.hbm_to_vmem [thread:$0]  %s0, 256, %s18, [#allocation3], 128, 128, 8
    $region5: #{tpu_custom_call.1} parent=1 // pred_fallthru
      _
    // Predicated region
    $region6: #{tpu_custom_call.1} parent=1 // pred_check
      _
    $region7: #{tpu_custom_call.1} parent=1 // pred_check_branch
      %25 = sbr.rel (0) target = $region9
    $region8: #{tpu_custom_call.1} parent=1 // pred_region
      _
    $region9: #{tpu_custom_call.1} parent=1 // pred_fallthru
      _
    // Predicated region
    $region10: #{tpu_custom_call.1} parent=1 // pred_check
      _
    $region11: #{tpu_custom_call.1} parent=1 // pred_check_branch
      %27 = sbr.rel (0) target = $region13
    $region12: #{tpu_custom_call.1} parent=1 // pred_region
      %s29 = ssub.s32 2560, 2560
      %30 = vsyncadd [#allocation6], %s29
      %s31 = sshll.u32 [#allocation5], 4
      %s32 = int_to_ptr.vmem [resolvable:$true] %s31
      %37 = dma.hbm_to_vmem [thread:$0]  %s2, 2560, %s32, [#allocation6], 64, 64, 4
    $region13: #{tpu_custom_call.1} parent=1 // pred_fallthru
      _
    // Predicated region
    $region14: #{tpu_custom_call.1} parent=1 // pred_check
      _
    $region15: #{tpu_custom_call.1} parent=1 // pred_check_branch
      %39 = sbr.rel (0) target = $region17
    $region16: #{tpu_custom_call.1} parent=1 // pred_region
      %s41 = ssub.s32 384, 384
      %42 = vsyncadd [#allocation6], %s41
      %s43 = sshll.u32 [#allocation7], 4
      %s44 = int_to_ptr.vmem [resolvable:$true] %s43
      %49 = dma.hbm_to_vmem [thread:$0]  %s3, 384, %s44, [#allocation6], 128, 128, 8
    $region17: #{tpu_custom_call.1} parent=1 // pred_fallthru
      _
    // Predicated region
    $region18: #{tpu_custom_call.1} parent=1 // pred_check
      _
    $region19: #{tpu_custom_call.1} parent=1 // pred_check_branch
      %51 = sbr.rel (0) target = $region21
    $region20: #{tpu_custom_call.1} parent=1 // pred_region
      %52 = dma.done [#allocation3], 256
    $region21: #{tpu_custom_call.1} parent=1 // pred_fallthru
      _
    // Predicated region
    $region22: #{tpu_custom_call.1} parent=1 // pred_check
      _
    $region23: #{tpu_custom_call.1} parent=1 // pred_check_branch
      %54 = sbr.rel (0) target = $region25
    $region24: #{tpu_custom_call.1} parent=1 // pred_region
      %55 = dma.done [#allocation6], 2560
    $region25: #{tpu_custom_call.1} parent=1 // pred_fallthru
      _
    // Predicated region
    $region26: #{tpu_custom_call.1} parent=1 // pred_check
      _
    $region27: #{tpu_custom_call.1} parent=1 // pred_check_branch
      %57 = sbr.rel (0) target = $region29
    $region28: #{tpu_custom_call.1} parent=1 // pred_region
      %58 = dma.done [#allocation6], 384
    $region29: #{tpu_custom_call.1} parent=1 // pred_fallthru
      _
    %v60 = vld [vmem:[#allocation2] sm:$0xff]
    %v61 = vld [vmem:[#allocation2 + $0x8] sm:$0xff]
    %v62 = vld [vmem:[%s1] sm:$0x3]
    %v65 = vunpack.c.l.s4 1966171168
    %v66 = vunpack.c.0.s8 %v65
    %v67 = vlaneseq
    %v68 = vshrl.u32 %v67, 7
    %v69 = vsub.s32 %v66, %v68
    %v70 = vrot.slane %v62, %v69
    %v71 = vcombine.high %v70, %v70
    %v73 = vunpack.c.l.s4 1966171168
    %v74 = vunpack.c.0.s8 %v73
    %v75 = vlaneseq
    %v76 = vshrl.u32 %v75, 7
    %v77 = vsub.s32 %v74, %v76
    %v78 = vrot.slane %v70, %v77
    %v80 = vunpack.c.l.s4 1966171168
    %v81 = vunpack.c.0.s8 %v80
    %v82 = vlaneseq
    %v83 = vshrl.u32 %v82, 7
    %v84 = vsub.s32 %v81, %v83
    %v85 = vrot.slane %v71, %v84
    %v86 = vld [vmem:[#allocation5] sm:$0xf]
    %v87 = vld [vmem:[#allocation5 + $0x4] sm:$0xf]
    %v88 = vld [vmem:[#allocation5 + $0x8] sm:$0xf]
    %v89 = vld [vmem:[#allocation5 + $0xc] sm:$0xf]
    %v90 = vld [vmem:[#allocation5 + $0x10] sm:$0xf]
    %v91 = vld [vmem:[#allocation5 + $0x14] sm:$0xf]
    %v92 = vld [vmem:[#allocation5 + $0x18] sm:$0xf]
    %v93 = vld [vmem:[#allocation5 + $0x1c] sm:$0xf]
    %v94 = vld [vmem:[#allocation5 + $0x20] sm:$0xf]
    %v95 = vld [vmem:[#allocation5 + $0x24] sm:$0xf]
    %v96 = vld [vmem:[#allocation5 + $0x28] sm:$0xf]
    %v97 = vld [vmem:[#allocation5 + $0x2c] sm:$0xf]
    %v98 = vld [vmem:[#allocation5 + $0x30] sm:$0xf]
    %v99 = vld [vmem:[#allocation5 + $0x34] sm:$0xf]
    %v100 = vld [vmem:[#allocation5 + $0x38] sm:$0xf]
    %v101 = vld [vmem:[#allocation5 + $0x3c] sm:$0xf]
    %v102 = vld [vmem:[#allocation5 + $0x40] sm:$0xf]
    %v103 = vld [vmem:[#allocation5 + $0x44] sm:$0xf]
    %v104 = vld [vmem:[#allocation5 + $0x48] sm:$0xf]
    %v105 = vld [vmem:[#allocation5 + $0x4c] sm:$0xf]
    %v106 = vld [vmem:[#allocation7] sm:$0x1]
    %v107 = vld [vmem:[#allocation7 + $0x1] sm:$0x1]
    %v108 = vld [vmem:[#allocation7 + $0x2] sm:$0x1]
    %v109 = vld [vmem:[#allocation7 + $0x3] sm:$0x1]
    %v110 = vld [vmem:[#allocation7 + $0x4] sm:$0x1]
    %v111 = vld [vmem:[#allocation7 + $0x5] sm:$0x1]
    %v112 = vld [vmem:[#allocation7 + $0x6] sm:$0x1]
    %v113 = vld [vmem:[#allocation7 + $0x7] sm:$0x1]
    %vm114 = vcmask 261120
    %v115 = vsel %vm114, %v60, 0.0
    %116 = vadd.xlane.f32.xlu0 %v115
    %v117 = vpop.xlane.xlu0 %116
    %v118 = vsel %vm114, %v61, 0.0
    %119 = vadd.xlane.f32.xlu0 %v118
    %v120 = vpop.xlane.xlu0 %119
    %v121 = vrcp.pop 32.0
    %v122 = vmul.f32 %v117, %v121
    %v123 = vmul.f32 %v120, %v121
    %v124 = vsub.f32 %v60, %v122
    %v125 = vsub.f32 %v61, %v123
    %v126 = vmul.f32 %v124, %v124
    %v127 = vmul.f32 %v125, %v125
    %v128 = vsel %vm114, %v126, 0.0
    %129 = vadd.xlane.f32.xlu0 %v128
    %v130 = vpop.xlane.xlu0 %129
    %v131 = vsel %vm114, %v127, 0.0
    %132 = vadd.xlane.f32.xlu0 %v131
    %v133 = vpop.xlane.xlu0 %132
    %v134 = vmul.f32 %v130, %v121
    %v135 = vmul.f32 %v133, %v121
    %v136 = vadd.f32 %v134, 1e-05
    %v137 = vadd.f32 %v135, 1e-05
    %v138 = vrsqrt.pop %v136
    %v139 = vrsqrt.pop %v137
    %v140 = vmul.f32 %v124, %v138
    %v141 = vmul.f32 %v125, %v139
    %v142 = vlaneseq
    %v143 = vshrl.u32 %v142, 7
    %v144 = vsub.s32 0, %v143
    %v145 = vrot.slane %v108, %v144
    %v146 = vmul.f32 %v140, %v145
    %v147 = vmul.f32 %v141, %v145
    %v148 = vlaneseq
    %v149 = vshrl.u32 %v148, 7
    %v150 = vsub.s32 0, %v149
    %v151 = vrot.slane %v109, %v150
    %v152 = vadd.f32 %v146, %v151
    %v153 = vadd.f32 %v147, %v151
    %v154 = vpack.c.bf16 %v153, %v152
    %v155 = vlaneseq
    %v156 = vshrl.u32 %v155, 7
    %v157 = vsub.s32 0, %v156
    %v158 = vrot.slane %v106, %v157
    %v163 = vunpack.c.l.b16 %v86
    %v164 = vunpack.c.l.b16 %v87
    %v165 = vunpack.c.l.b16 %v88
    %v166 = vunpack.c.l.b16 %v89
    %v167 = vpack.c.b16 %v164, %v163
    %v168 = vpack.c.b16 %v166, %v165
    %v172 = vsel %vm114, %v154, 0
    %174 = vmatprep.subr.bf16.mxu0 0
    %175 = vmatpush1.bf16.msra.mxu0 %v167
    %176 = vmatprep.subr.bf16.mxu0 0
    %177 = vmatpush1.bf16.msra.mxu0 %v168
    %178 = vmatprep.subr.bf16.mxu0 0
    %179 = vmatpush1.bf16.msra.mxu0 0
    %180 = vmatprep.subr.bf16.mxu0 0
    %181 = vmatpush1.bf16.msra.mxu0 0
    %182 = vmatprep.subr.bf16.mxu0 0
    %183 = vmatpush1.bf16.msra.mxu0 0
    %184 = vmatprep.subr.bf16.mxu0 0
    %185 = vmatpush1.bf16.msra.mxu0 0
    %186 = vmatprep.subr.bf16.mxu0 0
    %187 = vmatpush1.bf16.msra.mxu0 0
    %188 = vmatprep.subr.bf16.mxu0 0
    %189 = vmatpush1.bf16.msra.mxu0 0
    %190 = vmatprep.subr.bf16.mxu0 0
    %191 = vmatpush1.bf16.msra.mxu0 0
    %192 = vmatprep.subr.bf16.mxu0 0
    %193 = vmatpush1.bf16.msra.mxu0 0
    %194 = vmatprep.subr.bf16.mxu0 0
    %195 = vmatpush1.bf16.msra.mxu0 0
    %196 = vmatprep.subr.bf16.mxu0 0
    %197 = vmatpush1.bf16.msra.mxu0 0
    %198 = vmatprep.subr.bf16.mxu0 0
    %199 = vmatpush1.bf16.msra.mxu0 0
    %200 = vmatprep.subr.bf16.mxu0 0
    %201 = vmatpush1.bf16.msra.mxu0 0
    %202 = vmatprep.subr.bf16.mxu0 0
    %203 = vmatpush1.bf16.msra.mxu0 0
    %204 = vmatprep.subr.bf16.mxu0 0
    %205 = vmatpush1.bf16.msra.mxu0 0
    %206 = vmatprep.mubr.bf16.mxu0 0
    %207 = vmatmul.mubr.bf16.gmra.mrb[0].mxu0 %v172
    %v208 = vpop.f32.mrb[0].mxu0
    %v209 = vadd.f32 %v158, %v208
    %v210 = vpop.f32.mrb[0].mxu0
    %v211 = vpop.f32.mrb[0].mxu0
    %v212 = vadd.f32 %v158, %v211
    %v213 = vpop.f32.mrb[0].mxu0
    %214 = vdwg.mxu0
    %217 = vrot.lane.b32.xlu0 %v209, 120
    %v218 = vpop.permute.xlu0 %217
    %219 = vrot.lane.b32.xlu0 %v212, 120
    %v220 = vpop.permute.xlu0 %219
    %223 = vrot.lane.b32.xlu0 %v209, 112
    %v224 = vpop.permute.xlu0 %223
    %225 = vrot.lane.b32.xlu0 %v212, 112
    %v226 = vpop.permute.xlu0 %225
    %229 = vrot.lane.b32.xlu0 %v209, 104
    %v230 = vpop.permute.xlu0 %229
    %231 = vrot.lane.b32.xlu0 %v212, 104
    %v232 = vpop.permute.xlu0 %231
    %v235 = vpack.c.bf16 %v209, %v209
    %v236 = vpack.c.bf16 %v212, %v212
    %v237 = vpack.c.bf16 %v218, %v218
    %v238 = vpack.c.bf16 %v220, %v220
    %v239 = vpack.c.bf16 %v224, %v224
    %v240 = vpack.c.bf16 %v226, %v226
    %v241 = vpack.c.bf16 %v230, %v230
    %v242 = vpack.c.bf16 %v232, %v232
    %v243 = vlaneseq
    %v244 = vshrl.u32 %v243, 7
    %v245 = vsub.s32 0, %v244
    %v246 = vrot.slane %v78, %v245
    %v247 = vlaneseq
    %v248 = vshrl.u32 %v247, 7
    %v249 = vsub.s32 0, %v248
    %v250 = vrot.slane %v85, %v249
    %254 = vrot.lane.b32.xlu0 %v235, 96
    %v255 = vpop.permute.xlu0 %254
    %vm256 = vcmask 64512
    %v258 = vsel %vm256, %v235, 0
    %v261 = vsel %vm256, %v255, 0
    %263 = vmatprep.subr.bf16.mxu0 0
    %264 = vmatpush1.bf16.xpose.msra.mxu0 %v261
    %265 = vmatprep.subr.bf16.mxu0 0
    %266 = vmatpush1.bf16.xpose.msra.mxu0 0
    %267 = vmatprep.subr.bf16.mxu0 0
    %268 = vmatpush1.bf16.xpose.msra.mxu0 0
    %269 = vmatprep.subr.bf16.mxu0 0
    %270 = vmatpush1.bf16.xpose.msra.mxu0 0
    %271 = vmatprep.subr.bf16.mxu0 0
    %272 = vmatpush1.bf16.xpose.msra.mxu0 0
    %273 = vmatprep.subr.bf16.mxu0 0
    %274 = vmatpush1.bf16.xpose.msra.mxu0 0
    %275 = vmatprep.subr.bf16.mxu0 0
    %276 = vmatpush1.bf16.xpose.msra.mxu0 0
    %277 = vmatprep.subr.bf16.mxu0 0
    %278 = vmatpush1.bf16.xpose.msra.mxu0 0
    %279 = vmatprep.subr.bf16.mxu0 0
    %280 = vmatpush1.bf16.xpose.msra.mxu0 0
    %281 = vmatprep.subr.bf16.mxu0 0
    %282 = vmatpush1.bf16.xpose.msra.mxu0 0
    %283 = vmatprep.subr.bf16.mxu0 0
    %284 = vmatpush1.bf16.xpose.msra.mxu0 0
    %285 = vmatprep.subr.bf16.mxu0 0
    %286 = vmatpush1.bf16.xpose.msra.mxu0 0
    %287 = vmatprep.subr.bf16.mxu0 0
    %288 = vmatpush1.bf16.xpose.msra.mxu0 0
    %289 = vmatprep.subr.bf16.mxu0 0
    %290 = vmatpush1.bf16.xpose.msra.mxu0 0
    %291 = vmatprep.subr.bf16.mxu0 0
    %292 = vmatpush1.bf16.xpose.msra.mxu0 0
    %293 = vmatprep.subr.bf16.mxu0 0
    %294 = vmatpush1.bf16.xpose.msra.mxu0 0
    %295 = vmatprep.mubr.bf16.mxu0 0
    %296 = vmatmul.mubr.bf16.gmra.mrb[0].mxu0 %v258
    %v297 = vpop.f32.mrb[0].mxu0
    %v298 = vadd.f32 %v246, %v297
    %v299 = vpop.f32.mrb[0].mxu0
    %v300 = vpop.f32.mrb[0].mxu0
    %v301 = vpop.f32.mrb[0].mxu0
    %302 = vdwg.mxu0
    %304 = vrot.lane.b32.xlu0 %v236, 96
    %v305 = vpop.permute.xlu0 %304
    %v307 = vsel %vm256, %v236, 0
    %v310 = vsel %vm256, %v305, 0
    %312 = vmatprep.subr.bf16.mxu0 0
    %313 = vmatpush1.bf16.xpose.msra.mxu0 %v310
    %314 = vmatprep.subr.bf16.mxu0 0
    %315 = vmatpush1.bf16.xpose.msra.mxu0 0
    %316 = vmatprep.subr.bf16.mxu0 0
    %317 = vmatpush1.bf16.xpose.msra.mxu0 0
    %318 = vmatprep.subr.bf16.mxu0 0
    %319 = vmatpush1.bf16.xpose.msra.mxu0 0
    %320 = vmatprep.subr.bf16.mxu0 0
    %321 = vmatpush1.bf16.xpose.msra.mxu0 0
    %322 = vmatprep.subr.bf16.mxu0 0
    %323 = vmatpush1.bf16.xpose.msra.mxu0 0
    %324 = vmatprep.subr.bf16.mxu0 0
    %325 = vmatpush1.bf16.xpose.msra.mxu0 0
    %326 = vmatprep.subr.bf16.mxu0 0
    %327 = vmatpush1.bf16.xpose.msra.mxu0 0
    %328 = vmatprep.subr.bf16.mxu0 0
    %329 = vmatpush1.bf16.xpose.msra.mxu0 0
    %330 = vmatprep.subr.bf16.mxu0 0
    %331 = vmatpush1.bf16.xpose.msra.mxu0 0
    %332 = vmatprep.subr.bf16.mxu0 0
    %333 = vmatpush1.bf16.xpose.msra.mxu0 0
    %334 = vmatprep.subr.bf16.mxu0 0
    %335 = vmatpush1.bf16.xpose.msra.mxu0 0
    %336 = vmatprep.subr.bf16.mxu0 0
    %337 = vmatpush1.bf16.xpose.msra.mxu0 0
    %338 = vmatprep.subr.bf16.mxu0 0
    %339 = vmatpush1.bf16.xpose.msra.mxu0 0
    %340 = vmatprep.subr.bf16.mxu0 0
    %341 = vmatpush1.bf16.xpose.msra.mxu0 0
    %342 = vmatprep.subr.bf16.mxu0 0
    %343 = vmatpush1.bf16.xpose.msra.mxu0 0
    %344 = vmatprep.mubr.bf16.mxu0 0
    %345 = vmatmul.mubr.bf16.gmra.mrb[0].mxu0 %v307
    %v346 = vpop.f32.mrb[0].mxu0
    %v347 = vadd.f32 %v250, %v346
    %v348 = vpop.f32.mrb[0].mxu0
    %v349 = vpop.f32.mrb[0].mxu0
    %v350 = vpop.f32.mrb[0].mxu0
    %351 = vdwg.mxu0
    %353 = vrot.lane.b32.xlu0 %v237, 96
    %v354 = vpop.permute.xlu0 %353
    %v356 = vsel %vm256, %v237, 0
    %v359 = vsel %vm256, %v354, 0
    %361 = vmatprep.subr.bf16.mxu0 0
    %362 = vmatpush1.bf16.xpose.msra.mxu0 %v359
    %363 = vmatprep.subr.bf16.mxu0 0
    %364 = vmatpush1.bf16.xpose.msra.mxu0 0
    %365 = vmatprep.subr.bf16.mxu0 0
    %366 = vmatpush1.bf16.xpose.msra.mxu0 0
    %367 = vmatprep.subr.bf16.mxu0 0
    %368 = vmatpush1.bf16.xpose.msra.mxu0 0
    %369 = vmatprep.subr.bf16.mxu0 0
    %370 = vmatpush1.bf16.xpose.msra.mxu0 0
    %371 = vmatprep.subr.bf16.mxu0 0
    %372 = vmatpush1.bf16.xpose.msra.mxu0 0
    %373 = vmatprep.subr.bf16.mxu0 0
    %374 = vmatpush1.bf16.xpose.msra.mxu0 0
    %375 = vmatprep.subr.bf16.mxu0 0
    %376 = vmatpush1.bf16.xpose.msra.mxu0 0
    %377 = vmatprep.subr.bf16.mxu0 0
    %378 = vmatpush1.bf16.xpose.msra.mxu0 0
    %379 = vmatprep.subr.bf16.mxu0 0
    %380 = vmatpush1.bf16.xpose.msra.mxu0 0
    %381 = vmatprep.subr.bf16.mxu0 0
    %382 = vmatpush1.bf16.xpose.msra.mxu0 0
    %383 = vmatprep.subr.bf16.mxu0 0
    %384 = vmatpush1.bf16.xpose.msra.mxu0 0
    %385 = vmatprep.subr.bf16.mxu0 0
    %386 = vmatpush1.bf16.xpose.msra.mxu0 0
    %387 = vmatprep.subr.bf16.mxu0 0
    %388 = vmatpush1.bf16.xpose.msra.mxu0 0
    %389 = vmatprep.subr.bf16.mxu0 0
    %390 = vmatpush1.bf16.xpose.msra.mxu0 0
    %391 = vmatprep.subr.bf16.mxu0 0
    %392 = vmatpush1.bf16.xpose.msra.mxu0 0
    %393 = vmatprep.mubr.bf16.mxu0 0
    %394 = vmatmul.mubr.bf16.gmra.mrb[0].mxu0 %v356
    %v395 = vpop.f32.mrb[0].mxu0
    %v396 = vadd.f32 %v246, %v395
    %v397 = vpop.f32.mrb[0].mxu0
    %v398 = vpop.f32.mrb[0].mxu0
    %v399 = vpop.f32.mrb[0].mxu0
    %400 = vdwg.mxu0
    %402 = vrot.lane.b32.xlu0 %v238, 96
    %v403 = vpop.permute.xlu0 %402
    %v405 = vsel %vm256, %v238, 0
    %v408 = vsel %vm256, %v403, 0
    %410 = vmatprep.subr.bf16.mxu0 0
    %411 = vmatpush1.bf16.xpose.msra.mxu0 %v408
    %412 = vmatprep.subr.bf16.mxu0 0
    %413 = vmatpush1.bf16.xpose.msra.mxu0 0
    %414 = vmatprep.subr.bf16.mxu0 0
    %415 = vmatpush1.bf16.xpose.msra.mxu0 0
    %416 = vmatprep.subr.bf16.mxu0 0
    %417 = vmatpush1.bf16.xpose.msra.mxu0 0
    %418 = vmatprep.subr.bf16.mxu0 0
    %419 = vmatpush1.bf16.xpose.msra.mxu0 0
    %420 = vmatprep.subr.bf16.mxu0 0
    %421 = vmatpush1.bf16.xpose.msra.mxu0 0
    %422 = vmatprep.subr.bf16.mxu0 0
    %423 = vmatpush1.bf16.xpose.msra.mxu0 0
    %424 = vmatprep.subr.bf16.mxu0 0
    %425 = vmatpush1.bf16.xpose.msra.mxu0 0
    %426 = vmatprep.subr.bf16.mxu0 0
    %427 = vmatpush1.bf16.xpose.msra.mxu0 0
    %428 = vmatprep.subr.bf16.mxu0 0
    %429 = vmatpush1.bf16.xpose.msra.mxu0 0
    %430 = vmatprep.subr.bf16.mxu0 0
    %431 = vmatpush1.bf16.xpose.msra.mxu0 0
    %432 = vmatprep.subr.bf16.mxu0 0
    %433 = vmatpush1.bf16.xpose.msra.mxu0 0
    %434 = vmatprep.subr.bf16.mxu0 0
    %435 = vmatpush1.bf16.xpose.msra.mxu0 0
    %436 = vmatprep.subr.bf16.mxu0 0
    %437 = vmatpush1.bf16.xpose.msra.mxu0 0
    %438 = vmatprep.subr.bf16.mxu0 0
    %439 = vmatpush1.bf16.xpose.msra.mxu0 0
    %440 = vmatprep.subr.bf16.mxu0 0
    %441 = vmatpush1.bf16.xpose.msra.mxu0 0
    %442 = vmatprep.mubr.bf16.mxu0 0
    %443 = vmatmul.mubr.bf16.gmra.mrb[0].mxu0 %v405
    %v444 = vpop.f32.mrb[0].mxu0
    %v445 = vadd.f32 %v250, %v444
    %v446 = vpop.f32.mrb[0].mxu0
    %v447 = vpop.f32.mrb[0].mxu0
    %v448 = vpop.f32.mrb[0].mxu0
    %449 = vdwg.mxu0
    %451 = vrot.lane.b32.xlu0 %v239, 96
    %v452 = vpop.permute.xlu0 %451
    %v454 = vsel %vm256, %v239, 0
    %v457 = vsel %vm256, %v452, 0
    %459 = vmatprep.subr.bf16.mxu0 0
    %460 = vmatpush1.bf16.xpose.msra.mxu0 %v457
    %461 = vmatprep.subr.bf16.mxu0 0
    %462 = vmatpush1.bf16.xpose.msra.mxu0 0
    %463 = vmatprep.subr.bf16.mxu0 0
    %464 = vmatpush1.bf16.xpose.msra.mxu0 0
    %465 = vmatprep.subr.bf16.mxu0 0
    %466 = vmatpush1.bf16.xpose.msra.mxu0 0
    %467 = vmatprep.subr.bf16.mxu0 0
    %468 = vmatpush1.bf16.xpose.msra.mxu0 0
    %469 = vmatprep.subr.bf16.mxu0 0
    %470 = vmatpush1.bf16.xpose.msra.mxu0 0
    %471 = vmatprep.subr.bf16.mxu0 0
    %472 = vmatpush1.bf16.xpose.msra.mxu0 0
    %473 = vmatprep.subr.bf16.mxu0 0
    %474 = vmatpush1.bf16.xpose.msra.mxu0 0
    %475 = vmatprep.subr.bf16.mxu0 0
    %476 = vmatpush1.bf16.xpose.msra.mxu0 0
    %477 = vmatprep.subr.bf16.mxu0 0
    %478 = vmatpush1.bf16.xpose.msra.mxu0 0
    %479 = vmatprep.subr.bf16.mxu0 0
    %480 = vmatpush1.bf16.xpose.msra.mxu0 0
    %481 = vmatprep.subr.bf16.mxu0 0
    %482 = vmatpush1.bf16.xpose.msra.mxu0 0
    %483 = vmatprep.subr.bf16.mxu0 0
    %484 = vmatpush1.bf16.xpose.msra.mxu0 0
    %485 = vmatprep.subr.bf16.mxu0 0
    %486 = vmatpush1.bf16.xpose.msra.mxu0 0
    %487 = vmatprep.subr.bf16.mxu0 0
    %488 = vmatpush1.bf16.xpose.msra.mxu0 0
    %489 = vmatprep.subr.bf16.mxu0 0
    %490 = vmatpush1.bf16.xpose.msra.mxu0 0
    %491 = vmatprep.mubr.bf16.mxu0 0
    %492 = vmatmul.mubr.bf16.gmra.mrb[0].mxu0 %v454
    %v493 = vpop.f32.mrb[0].mxu0
    %v494 = vadd.f32 %v246, %v493
    %v495 = vpop.f32.mrb[0].mxu0
    %v496 = vpop.f32.mrb[0].mxu0
    %v497 = vpop.f32.mrb[0].mxu0
    %498 = vdwg.mxu0
    %500 = vrot.lane.b32.xlu0 %v240, 96
    %v501 = vpop.permute.xlu0 %500
    %v503 = vsel %vm256, %v240, 0
    %v506 = vsel %vm256, %v501, 0
    %508 = vmatprep.subr.bf16.mxu0 0
    %509 = vmatpush1.bf16.xpose.msra.mxu0 %v506
    %510 = vmatprep.subr.bf16.mxu0 0
    %511 = vmatpush1.bf16.xpose.msra.mxu0 0
    %512 = vmatprep.subr.bf16.mxu0 0
    %513 = vmatpush1.bf16.xpose.msra.mxu0 0
    %514 = vmatprep.subr.bf16.mxu0 0
    %515 = vmatpush1.bf16.xpose.msra.mxu0 0
    %516 = vmatprep.subr.bf16.mxu0 0
    %517 = vmatpush1.bf16.xpose.msra.mxu0 0
    %518 = vmatprep.subr.bf16.mxu0 0
    %519 = vmatpush1.bf16.xpose.msra.mxu0 0
    %520 = vmatprep.subr.bf16.mxu0 0
    %521 = vmatpush1.bf16.xpose.msra.mxu0 0
    %522 = vmatprep.subr.bf16.mxu0 0
    %523 = vmatpush1.bf16.xpose.msra.mxu0 0
    %524 = vmatprep.subr.bf16.mxu0 0
    %525 = vmatpush1.bf16.xpose.msra.mxu0 0
    %526 = vmatprep.subr.bf16.mxu0 0
    %527 = vmatpush1.bf16.xpose.msra.mxu0 0
    %528 = vmatprep.subr.bf16.mxu0 0
    %529 = vmatpush1.bf16.xpose.msra.mxu0 0
    %530 = vmatprep.subr.bf16.mxu0 0
    %531 = vmatpush1.bf16.xpose.msra.mxu0 0
    %532 = vmatprep.subr.bf16.mxu0 0
    %533 = vmatpush1.bf16.xpose.msra.mxu0 0
    %534 = vmatprep.subr.bf16.mxu0 0
    %535 = vmatpush1.bf16.xpose.msra.mxu0 0
    %536 = vmatprep.subr.bf16.mxu0 0
    %537 = vmatpush1.bf16.xpose.msra.mxu0 0
    %538 = vmatprep.subr.bf16.mxu0 0
    %539 = vmatpush1.bf16.xpose.msra.mxu0 0
    %540 = vmatprep.mubr.bf16.mxu0 0
    %541 = vmatmul.mubr.bf16.gmra.mrb[0].mxu0 %v503
    %v542 = vpop.f32.mrb[0].mxu0
    %v543 = vadd.f32 %v250, %v542
    %v544 = vpop.f32.mrb[0].mxu0
    %v545 = vpop.f32.mrb[0].mxu0
    %v546 = vpop.f32.mrb[0].mxu0
    %547 = vdwg.mxu0
    %549 = vrot.lane.b32.xlu0 %v241, 96
    %v550 = vpop.permute.xlu0 %549
    %v552 = vsel %vm256, %v241, 0
    %v555 = vsel %vm256, %v550, 0
    %557 = vmatprep.subr.bf16.mxu0 0
    %558 = vmatpush1.bf16.xpose.msra.mxu0 %v555
    %559 = vmatprep.subr.bf16.mxu0 0
    %560 = vmatpush1.bf16.xpose.msra.mxu0 0
    %561 = vmatprep.subr.bf16.mxu0 0
    %562 = vmatpush1.bf16.xpose.msra.mxu0 0
    %563 = vmatprep.subr.bf16.mxu0 0
    %564 = vmatpush1.bf16.xpose.msra.mxu0 0
    %565 = vmatprep.subr.bf16.mxu0 0
    %566 = vmatpush1.bf16.xpose.msra.mxu0 0
    %567 = vmatprep.subr.bf16.mxu0 0
    %568 = vmatpush1.bf16.xpose.msra.mxu0 0
    %569 = vmatprep.subr.bf16.mxu0 0
    %570 = vmatpush1.bf16.xpose.msra.mxu0 0
    %571 = vmatprep.subr.bf16.mxu0 0
    %572 = vmatpush1.bf16.xpose.msra.mxu0 0
    %573 = vmatprep.subr.bf16.mxu0 0
    %574 = vmatpush1.bf16.xpose.msra.mxu0 0
    %575 = vmatprep.subr.bf16.mxu0 0
    %576 = vmatpush1.bf16.xpose.msra.mxu0 0
    %577 = vmatprep.subr.bf16.mxu0 0
    %578 = vmatpush1.bf16.xpose.msra.mxu0 0
    %579 = vmatprep.subr.bf16.mxu0 0
    %580 = vmatpush1.bf16.xpose.msra.mxu0 0
    %581 = vmatprep.subr.bf16.mxu0 0
    %582 = vmatpush1.bf16.xpose.msra.mxu0 0
    %583 = vmatprep.subr.bf16.mxu0 0
    %584 = vmatpush1.bf16.xpose.msra.mxu0 0
    %585 = vmatprep.subr.bf16.mxu0 0
    %586 = vmatpush1.bf16.xpose.msra.mxu0 0
    %587 = vmatprep.subr.bf16.mxu0 0
    %588 = vmatpush1.bf16.xpose.msra.mxu0 0
    %589 = vmatprep.mubr.bf16.mxu0 0
    %590 = vmatmul.mubr.bf16.gmra.mrb[0].mxu0 %v552
    %v591 = vpop.f32.mrb[0].mxu0
    %v592 = vadd.f32 %v246, %v591
    %v593 = vpop.f32.mrb[0].mxu0
    %v594 = vpop.f32.mrb[0].mxu0
    %v595 = vpop.f32.mrb[0].mxu0
    %596 = vdwg.mxu0
    %598 = vrot.lane.b32.xlu0 %v242, 96
    %v599 = vpop.permute.xlu0 %598
    %v601 = vsel %vm256, %v242, 0
    %v604 = vsel %vm256, %v599, 0
    %606 = vmatprep.subr.bf16.mxu0 0
    %607 = vmatpush1.bf16.xpose.msra.mxu0 %v604
    %608 = vmatprep.subr.bf16.mxu0 0
    %609 = vmatpush1.bf16.xpose.msra.mxu0 0
    %610 = vmatprep.subr.bf16.mxu0 0
    %611 = vmatpush1.bf16.xpose.msra.mxu0 0
    %612 = vmatprep.subr.bf16.mxu0 0
    %613 = vmatpush1.bf16.xpose.msra.mxu0 0
    %614 = vmatprep.subr.bf16.mxu0 0
    %615 = vmatpush1.bf16.xpose.msra.mxu0 0
    %616 = vmatprep.subr.bf16.mxu0 0
    %617 = vmatpush1.bf16.xpose.msra.mxu0 0
    %618 = vmatprep.subr.bf16.mxu0 0
    %619 = vmatpush1.bf16.xpose.msra.mxu0 0
    %620 = vmatprep.subr.bf16.mxu0 0
    %621 = vmatpush1.bf16.xpose.msra.mxu0 0
    %622 = vmatprep.subr.bf16.mxu0 0
    %623 = vmatpush1.bf16.xpose.msra.mxu0 0
    %624 = vmatprep.subr.bf16.mxu0 0
    %625 = vmatpush1.bf16.xpose.msra.mxu0 0
    %626 = vmatprep.subr.bf16.mxu0 0
    %627 = vmatpush1.bf16.xpose.msra.mxu0 0
    %628 = vmatprep.subr.bf16.mxu0 0
    %629 = vmatpush1.bf16.xpose.msra.mxu0 0
    %630 = vmatprep.subr.bf16.mxu0 0
    %631 = vmatpush1.bf16.xpose.msra.mxu0 0
    %632 = vmatprep.subr.bf16.mxu0 0
    %633 = vmatpush1.bf16.xpose.msra.mxu0 0
    %634 = vmatprep.subr.bf16.mxu0 0
    %635 = vmatpush1.bf16.xpose.msra.mxu0 0
    %636 = vmatprep.subr.bf16.mxu0 0
    %637 = vmatpush1.bf16.xpose.msra.mxu0 0
    %638 = vmatprep.mubr.bf16.mxu0 0
    %639 = vmatmul.mubr.bf16.gmra.mrb[0].mxu0 %v601
    %v640 = vpop.f32.mrb[0].mxu0
    %v641 = vadd.f32 %v250, %v640
    %v642 = vpop.f32.mrb[0].mxu0
    %v643 = vpop.f32.mrb[0].mxu0
    %v644 = vpop.f32.mrb[0].mxu0
    %645 = vdwg.mxu0
    %v646 = vsel %vm256, %v298, -inf
    %647 = vmax.xlane.f32.xlu0 %v646
    %v648 = vpop.xlane.xlu0 %647
    %v649 = vsel %vm256, %v347, -inf
    %650 = vmax.xlane.f32.xlu0 %v649
    %v651 = vpop.xlane.xlu0 %650
    %v652 = vsel %vm256, %v396, -inf
    %653 = vmax.xlane.f32.xlu0 %v652
    %v654 = vpop.xlane.xlu0 %653
    %v655 = vsel %vm256, %v445, -inf
    %656 = vmax.xlane.f32.xlu0 %v655
    %v657 = vpop.xlane.xlu0 %656
    %v658 = vsel %vm256, %v494, -inf
    %659 = vmax.xlane.f32.xlu0 %v658
    %v660 = vpop.xlane.xlu0 %659
    %v661 = vsel %vm256, %v543, -inf
    %662 = vmax.xlane.f32.xlu0 %v661
    %v663 = vpop.xlane.xlu0 %662
    %v664 = vsel %vm256, %v592, -inf
    %665 = vmax.xlane.f32.xlu0 %v664
    %v666 = vpop.xlane.xlu0 %665
    %v667 = vsel %vm256, %v641, -inf
    %668 = vmax.xlane.f32.xlu0 %v667
    %v669 = vpop.xlane.xlu0 %668
    %v670 = vsub.f32 %v298, %v648
    %v671 = vsub.f32 %v347, %v651
    %v672 = vsub.f32 %v396, %v654
    %v673 = vsub.f32 %v445, %v657
    %v674 = vsub.f32 %v494, %v660
    %v675 = vsub.f32 %v543, %v663
    %v676 = vsub.f32 %v592, %v666
    %v677 = vsub.f32 %v641, %v669
    %v678 = vmul.f32 %v670, 1.442695
    %v679 = vpow.pop %v678
    %v680 = vmul.f32 %v671, 1.442695
    %v681 = vpow.pop %v680
    %v682 = vmul.f32 %v672, 1.442695
    %v683 = vpow.pop %v682
    %v684 = vmul.f32 %v673, 1.442695
    %v685 = vpow.pop %v684
    %v686 = vmul.f32 %v674, 1.442695
    %v687 = vpow.pop %v686
    %v688 = vmul.f32 %v675, 1.442695
    %v689 = vpow.pop %v688
    %v690 = vmul.f32 %v676, 1.442695
    %v691 = vpow.pop %v690
    %v692 = vmul.f32 %v677, 1.442695
    %v693 = vpow.pop %v692
    %v694 = vsel %vm256, %v679, 0.0
    %695 = vadd.xlane.f32.xlu0 %v694
    %v696 = vpop.xlane.xlu0 %695
    %v697 = vsel %vm256, %v681, 0.0
    %698 = vadd.xlane.f32.xlu0 %v697
    %v699 = vpop.xlane.xlu0 %698
    %v700 = vsel %vm256, %v683, 0.0
    %701 = vadd.xlane.f32.xlu0 %v700
    %v702 = vpop.xlane.xlu0 %701
    %v703 = vsel %vm256, %v685, 0.0
    %704 = vadd.xlane.f32.xlu0 %v703
    %v705 = vpop.xlane.xlu0 %704
    %v706 = vsel %vm256, %v687, 0.0
    %707 = vadd.xlane.f32.xlu0 %v706
    %v708 = vpop.xlane.xlu0 %707
    %v709 = vsel %vm256, %v689, 0.0
    %710 = vadd.xlane.f32.xlu0 %v709
    %v711 = vpop.xlane.xlu0 %710
    %v712 = vsel %vm256, %v691, 0.0
    %713 = vadd.xlane.f32.xlu0 %v712
    %v714 = vpop.xlane.xlu0 %713
    %v715 = vsel %vm256, %v693, 0.0
    %716 = vadd.xlane.f32.xlu0 %v715
    %v717 = vpop.xlane.xlu0 %716
    %v718 = vrcp.pop %v696
    %v719 = vrcp.pop %v699
    %v720 = vrcp.pop %v702
    %v721 = vrcp.pop %v705
    %v722 = vrcp.pop %v708
    %v723 = vrcp.pop %v711
    %v724 = vrcp.pop %v714
    %v725 = vrcp.pop %v717
    %v726 = vmul.f32 %v679, %v718
    %v727 = vmul.f32 %v681, %v719
    %v728 = vmul.f32 %v683, %v720
    %v729 = vmul.f32 %v685, %v721
    %v730 = vmul.f32 %v687, %v722
    %v731 = vmul.f32 %v689, %v723
    %v732 = vmul.f32 %v691, %v724
    %v733 = vmul.f32 %v693, %v725
    %v734 = vpack.c.bf16 %v726, %v726
    %v735 = vpack.c.bf16 %v727, %v727
    %v736 = vpack.c.bf16 %v728, %v728
    %v737 = vpack.c.bf16 %v729, %v729
    %v738 = vpack.c.bf16 %v730, %v730
    %v739 = vpack.c.bf16 %v731, %v731
    %v740 = vpack.c.bf16 %v732, %v732
    %v741 = vpack.c.bf16 %v733, %v733
    %742 = vrot.lane.b32.xlu0 %v235, 64
    %v743 = vpop.permute.xlu0 %742
    %v745 = vsel %vm256, %v734, 0
    %vm747 = vcmask 1043456
    %v749 = vsel %vm747, %v743, 0
    %751 = vmatprep.subr.bf16.mxu0 0
    %752 = vmatpush1.bf16.msra.mxu0 %v749
    %753 = vmatprep.subr.bf16.mxu0 0
    %754 = vmatpush1.bf16.msra.mxu0 0
    %755 = vmatprep.subr.bf16.mxu0 0
    %756 = vmatpush1.bf16.msra.mxu0 0
    %757 = vmatprep.subr.bf16.mxu0 0
    %758 = vmatpush1.bf16.msra.mxu0 0
    %759 = vmatprep.subr.bf16.mxu0 0
    %760 = vmatpush1.bf16.msra.mxu0 0
    %761 = vmatprep.subr.bf16.mxu0 0
    %762 = vmatpush1.bf16.msra.mxu0 0
    %763 = vmatprep.subr.bf16.mxu0 0
    %764 = vmatpush1.bf16.msra.mxu0 0
    %765 = vmatprep.subr.bf16.mxu0 0
    %766 = vmatpush1.bf16.msra.mxu0 0
    %767 = vmatprep.subr.bf16.mxu0 0
    %768 = vmatpush1.bf16.msra.mxu0 0
    %769 = vmatprep.subr.bf16.mxu0 0
    %770 = vmatpush1.bf16.msra.mxu0 0
    %771 = vmatprep.subr.bf16.mxu0 0
    %772 = vmatpush1.bf16.msra.mxu0 0
    %773 = vmatprep.subr.bf16.mxu0 0
    %774 = vmatpush1.bf16.msra.mxu0 0
    %775 = vmatprep.subr.bf16.mxu0 0
    %776 = vmatpush1.bf16.msra.mxu0 0
    %777 = vmatprep.subr.bf16.mxu0 0
    %778 = vmatpush1.bf16.msra.mxu0 0
    %779 = vmatprep.subr.bf16.mxu0 0
    %780 = vmatpush1.bf16.msra.mxu0 0
    %781 = vmatprep.subr.bf16.mxu0 0
    %782 = vmatpush1.bf16.msra.mxu0 0
    %783 = vmatprep.mubr.bf16.mxu0 0
    %784 = vmatmul.mubr.bf16.gmra.mrb[0].mxu0 %v745
    %v785 = vpop.f32.mrb[0].mxu0
    %v786 = vadd.f32 0.0, %v785
    %v787 = vpop.f32.mrb[0].mxu0
    %v788 = vpop.f32.mrb[0].mxu0
    %v789 = vpop.f32.mrb[0].mxu0
    %790 = vdwg.mxu0
    %791 = vrot.lane.b32.xlu0 %v236, 64
    %v792 = vpop.permute.xlu0 %791
    %v794 = vsel %vm256, %v735, 0
    %v797 = vsel %vm747, %v792, 0
    %799 = vmatprep.subr.bf16.mxu0 0
    %800 = vmatpush1.bf16.msra.mxu0 %v797
    %801 = vmatprep.subr.bf16.mxu0 0
    %802 = vmatpush1.bf16.msra.mxu0 0
    %803 = vmatprep.subr.bf16.mxu0 0
    %804 = vmatpush1.bf16.msra.mxu0 0
    %805 = vmatprep.subr.bf16.mxu0 0
    %806 = vmatpush1.bf16.msra.mxu0 0
    %807 = vmatprep.subr.bf16.mxu0 0
    %808 = vmatpush1.bf16.msra.mxu0 0
    %809 = vmatprep.subr.bf16.mxu0 0
    %810 = vmatpush1.bf16.msra.mxu0 0
    %811 = vmatprep.subr.bf16.mxu0 0
    %812 = vmatpush1.bf16.msra.mxu0 0
    %813 = vmatprep.subr.bf16.mxu0 0
    %814 = vmatpush1.bf16.msra.mxu0 0
    %815 = vmatprep.subr.bf16.mxu0 0
    %816 = vmatpush1.bf16.msra.mxu0 0
    %817 = vmatprep.subr.bf16.mxu0 0
    %818 = vmatpush1.bf16.msra.mxu0 0
    %819 = vmatprep.subr.bf16.mxu0 0
    %820 = vmatpush1.bf16.msra.mxu0 0
    %821 = vmatprep.subr.bf16.mxu0 0
    %822 = vmatpush1.bf16.msra.mxu0 0
    %823 = vmatprep.subr.bf16.mxu0 0
    %824 = vmatpush1.bf16.msra.mxu0 0
    %825 = vmatprep.subr.bf16.mxu0 0
    %826 = vmatpush1.bf16.msra.mxu0 0
    %827 = vmatprep.subr.bf16.mxu0 0
    %828 = vmatpush1.bf16.msra.mxu0 0
    %829 = vmatprep.subr.bf16.mxu0 0
    %830 = vmatpush1.bf16.msra.mxu0 0
    %831 = vmatprep.mubr.bf16.mxu0 0
    %832 = vmatmul.mubr.bf16.gmra.mrb[0].mxu0 %v794
    %v833 = vpop.f32.mrb[0].mxu0
    %v834 = vadd.f32 0.0, %v833
    %v835 = vpop.f32.mrb[0].mxu0
    %v836 = vpop.f32.mrb[0].mxu0
    %v837 = vpop.f32.mrb[0].mxu0
    %838 = vdwg.mxu0
    %839 = vrot.lane.b32.xlu0 %v237, 64
    %v840 = vpop.permute.xlu0 %839
    %v842 = vsel %vm256, %v736, 0
    %v845 = vsel %vm747, %v840, 0
    %847 = vmatprep.subr.bf16.mxu0 0
    %848 = vmatpush1.bf16.msra.mxu0 %v845
    %849 = vmatprep.subr.bf16.mxu0 0
    %850 = vmatpush1.bf16.msra.mxu0 0
    %851 = vmatprep.subr.bf16.mxu0 0
    %852 = vmatpush1.bf16.msra.mxu0 0
    %853 = vmatprep.subr.bf16.mxu0 0
    %854 = vmatpush1.bf16.msra.mxu0 0
    %855 = vmatprep.subr.bf16.mxu0 0
    %856 = vmatpush1.bf16.msra.mxu0 0
    %857 = vmatprep.subr.bf16.mxu0 0
    %858 = vmatpush1.bf16.msra.mxu0 0
    %859 = vmatprep.subr.bf16.mxu0 0
    %860 = vmatpush1.bf16.msra.mxu0 0
    %861 = vmatprep.subr.bf16.mxu0 0
    %862 = vmatpush1.bf16.msra.mxu0 0
    %863 = vmatprep.subr.bf16.mxu0 0
    %864 = vmatpush1.bf16.msra.mxu0 0
    %865 = vmatprep.subr.bf16.mxu0 0
    %866 = vmatpush1.bf16.msra.mxu0 0
    %867 = vmatprep.subr.bf16.mxu0 0
    %868 = vmatpush1.bf16.msra.mxu0 0
    %869 = vmatprep.subr.bf16.mxu0 0
    %870 = vmatpush1.bf16.msra.mxu0 0
    %871 = vmatprep.subr.bf16.mxu0 0
    %872 = vmatpush1.bf16.msra.mxu0 0
    %873 = vmatprep.subr.bf16.mxu0 0
    %874 = vmatpush1.bf16.msra.mxu0 0
    %875 = vmatprep.subr.bf16.mxu0 0
    %876 = vmatpush1.bf16.msra.mxu0 0
    %877 = vmatprep.subr.bf16.mxu0 0
    %878 = vmatpush1.bf16.msra.mxu0 0
    %879 = vmatprep.mubr.bf16.mxu0 0
    %880 = vmatmul.mubr.bf16.gmra.mrb[0].mxu0 %v842
    %v881 = vpop.f32.mrb[0].mxu0
    %v882 = vadd.f32 0.0, %v881
    %v883 = vpop.f32.mrb[0].mxu0
    %v884 = vpop.f32.mrb[0].mxu0
    %v885 = vpop.f32.mrb[0].mxu0
    %886 = vdwg.mxu0
    %887 = vrot.lane.b32.xlu0 %v238, 64
    %v888 = vpop.permute.xlu0 %887
    %v890 = vsel %vm256, %v737, 0
    %v893 = vsel %vm747, %v888, 0
    %895 = vmatprep.subr.bf16.mxu0 0
    %896 = vmatpush1.bf16.msra.mxu0 %v893
    %897 = vmatprep.subr.bf16.mxu0 0
    %898 = vmatpush1.bf16.msra.mxu0 0
    %899 = vmatprep.subr.bf16.mxu0 0
    %900 = vmatpush1.bf16.msra.mxu0 0
    %901 = vmatprep.subr.bf16.mxu0 0
    %902 = vmatpush1.bf16.msra.mxu0 0
    %903 = vmatprep.subr.bf16.mxu0 0
    %904 = vmatpush1.bf16.msra.mxu0 0
    %905 = vmatprep.subr.bf16.mxu0 0
    %906 = vmatpush1.bf16.msra.mxu0 0
    %907 = vmatprep.subr.bf16.mxu0 0
    %908 = vmatpush1.bf16.msra.mxu0 0
    %909 = vmatprep.subr.bf16.mxu0 0
    %910 = vmatpush1.bf16.msra.mxu0 0
    %911 = vmatprep.subr.bf16.mxu0 0
    %912 = vmatpush1.bf16.msra.mxu0 0
    %913 = vmatprep.subr.bf16.mxu0 0
    %914 = vmatpush1.bf16.msra.mxu0 0
    %915 = vmatprep.subr.bf16.mxu0 0
    %916 = vmatpush1.bf16.msra.mxu0 0
    %917 = vmatprep.subr.bf16.mxu0 0
    %918 = vmatpush1.bf16.msra.mxu0 0
    %919 = vmatprep.subr.bf16.mxu0 0
    %920 = vmatpush1.bf16.msra.mxu0 0
    %921 = vmatprep.subr.bf16.mxu0 0
    %922 = vmatpush1.bf16.msra.mxu0 0
    %923 = vmatprep.subr.bf16.mxu0 0
    %924 = vmatpush1.bf16.msra.mxu0 0
    %925 = vmatprep.subr.bf16.mxu0 0
    %926 = vmatpush1.bf16.msra.mxu0 0
    %927 = vmatprep.mubr.bf16.mxu0 0
    %928 = vmatmul.mubr.bf16.gmra.mrb[0].mxu0 %v890
    %v929 = vpop.f32.mrb[0].mxu0
    %v930 = vadd.f32 0.0, %v929
    %v931 = vpop.f32.mrb[0].mxu0
    %v932 = vpop.f32.mrb[0].mxu0
    %v933 = vpop.f32.mrb[0].mxu0
    %934 = vdwg.mxu0
    %935 = vrot.lane.b32.xlu0 %v239, 64
    %v936 = vpop.permute.xlu0 %935
    %v938 = vsel %vm256, %v738, 0
    %v941 = vsel %vm747, %v936, 0
    %943 = vmatprep.subr.bf16.mxu0 0
    %944 = vmatpush1.bf16.msra.mxu0 %v941
    %945 = vmatprep.subr.bf16.mxu0 0
    %946 = vmatpush1.bf16.msra.mxu0 0
    %947 = vmatprep.subr.bf16.mxu0 0
    %948 = vmatpush1.bf16.msra.mxu0 0
    %949 = vmatprep.subr.bf16.mxu0 0
    %950 = vmatpush1.bf16.msra.mxu0 0
    %951 = vmatprep.subr.bf16.mxu0 0
    %952 = vmatpush1.bf16.msra.mxu0 0
    %953 = vmatprep.subr.bf16.mxu0 0
    %954 = vmatpush1.bf16.msra.mxu0 0
    %955 = vmatprep.subr.bf16.mxu0 0
    %956 = vmatpush1.bf16.msra.mxu0 0
    %957 = vmatprep.subr.bf16.mxu0 0
    %958 = vmatpush1.bf16.msra.mxu0 0
    %959 = vmatprep.subr.bf16.mxu0 0
    %960 = vmatpush1.bf16.msra.mxu0 0
    %961 = vmatprep.subr.bf16.mxu0 0
    %962 = vmatpush1.bf16.msra.mxu0 0
    %963 = vmatprep.subr.bf16.mxu0 0
    %964 = vmatpush1.bf16.msra.mxu0 0
    %965 = vmatprep.subr.bf16.mxu0 0
    %966 = vmatpush1.bf16.msra.mxu0 0
    %967 = vmatprep.subr.bf16.mxu0 0
    %968 = vmatpush1.bf16.msra.mxu0 0
    %969 = vmatprep.subr.bf16.mxu0 0
    %970 = vmatpush1.bf16.msra.mxu0 0
    %971 = vmatprep.subr.bf16.mxu0 0
    %972 = vmatpush1.bf16.msra.mxu0 0
    %973 = vmatprep.subr.bf16.mxu0 0
    %974 = vmatpush1.bf16.msra.mxu0 0
    %975 = vmatprep.mubr.bf16.mxu0 0
    %976 = vmatmul.mubr.bf16.gmra.mrb[0].mxu0 %v938
    %v977 = vpop.f32.mrb[0].mxu0
    %v978 = vadd.f32 0.0, %v977
    %v979 = vpop.f32.mrb[0].mxu0
    %v980 = vpop.f32.mrb[0].mxu0
    %v981 = vpop.f32.mrb[0].mxu0
    %982 = vdwg.mxu0
    %983 = vrot.lane.b32.xlu0 %v240, 64
    %v984 = vpop.permute.xlu0 %983
    %v986 = vsel %vm256, %v739, 0
    %v989 = vsel %vm747, %v984, 0
    %991 = vmatprep.subr.bf16.mxu0 0
    %992 = vmatpush1.bf16.msra.mxu0 %v989
    %993 = vmatprep.subr.bf16.mxu0 0
    %994 = vmatpush1.bf16.msra.mxu0 0
    %995 = vmatprep.subr.bf16.mxu0 0
    %996 = vmatpush1.bf16.msra.mxu0 0
    %997 = vmatprep.subr.bf16.mxu0 0
    %998 = vmatpush1.bf16.msra.mxu0 0
    %999 = vmatprep.subr.bf16.mxu0 0
    %1000 = vmatpush1.bf16.msra.mxu0 0
    %1001 = vmatprep.subr.bf16.mxu0 0
    %1002 = vmatpush1.bf16.msra.mxu0 0
    %1003 = vmatprep.subr.bf16.mxu0 0
    %1004 = vmatpush1.bf16.msra.mxu0 0
    %1005 = vmatprep.subr.bf16.mxu0 0
    %1006 = vmatpush1.bf16.msra.mxu0 0
    %1007 = vmatprep.subr.bf16.mxu0 0
    %1008 = vmatpush1.bf16.msra.mxu0 0
    %1009 = vmatprep.subr.bf16.mxu0 0
    %1010 = vmatpush1.bf16.msra.mxu0 0
    %1011 = vmatprep.subr.bf16.mxu0 0
    %1012 = vmatpush1.bf16.msra.mxu0 0
    %1013 = vmatprep.subr.bf16.mxu0 0
    %1014 = vmatpush1.bf16.msra.mxu0 0
    %1015 = vmatprep.subr.bf16.mxu0 0
    %1016 = vmatpush1.bf16.msra.mxu0 0
    %1017 = vmatprep.subr.bf16.mxu0 0
    %1018 = vmatpush1.bf16.msra.mxu0 0
    %1019 = vmatprep.subr.bf16.mxu0 0
    %1020 = vmatpush1.bf16.msra.mxu0 0
    %1021 = vmatprep.subr.bf16.mxu0 0
    %1022 = vmatpush1.bf16.msra.mxu0 0
    %1023 = vmatprep.mubr.bf16.mxu0 0
    %1024 = vmatmul.mubr.bf16.gmra.mrb[0].mxu0 %v986
    %v1025 = vpop.f32.mrb[0].mxu0
    %v1026 = vadd.f32 0.0, %v1025
    %v1027 = vpop.f32.mrb[0].mxu0
    %v1028 = vpop.f32.mrb[0].mxu0
    %v1029 = vpop.f32.mrb[0].mxu0
    %1030 = vdwg.mxu0
    %1031 = vrot.lane.b32.xlu0 %v241, 64
    %v1032 = vpop.permute.xlu0 %1031
    %v1034 = vsel %vm256, %v740, 0
    %v1037 = vsel %vm747, %v1032, 0
    %1039 = vmatprep.subr.bf16.mxu0 0
    %1040 = vmatpush1.bf16.msra.mxu0 %v1037
    %1041 = vmatprep.subr.bf16.mxu0 0
    %1042 = vmatpush1.bf16.msra.mxu0 0
    %1043 = vmatprep.subr.bf16.mxu0 0
    %1044 = vmatpush1.bf16.msra.mxu0 0
    %1045 = vmatprep.subr.bf16.mxu0 0
    %1046 = vmatpush1.bf16.msra.mxu0 0
    %1047 = vmatprep.subr.bf16.mxu0 0
    %1048 = vmatpush1.bf16.msra.mxu0 0
    %1049 = vmatprep.subr.bf16.mxu0 0
    %1050 = vmatpush1.bf16.msra.mxu0 0
    %1051 = vmatprep.subr.bf16.mxu0 0
    %1052 = vmatpush1.bf16.msra.mxu0 0
    %1053 = vmatprep.subr.bf16.mxu0 0
    %1054 = vmatpush1.bf16.msra.mxu0 0
    %1055 = vmatprep.subr.bf16.mxu0 0
    %1056 = vmatpush1.bf16.msra.mxu0 0
    %1057 = vmatprep.subr.bf16.mxu0 0
    %1058 = vmatpush1.bf16.msra.mxu0 0
    %1059 = vmatprep.subr.bf16.mxu0 0
    %1060 = vmatpush1.bf16.msra.mxu0 0
    %1061 = vmatprep.subr.bf16.mxu0 0
    %1062 = vmatpush1.bf16.msra.mxu0 0
    %1063 = vmatprep.subr.bf16.mxu0 0
    %1064 = vmatpush1.bf16.msra.mxu0 0
    %1065 = vmatprep.subr.bf16.mxu0 0
    %1066 = vmatpush1.bf16.msra.mxu0 0
    %1067 = vmatprep.subr.bf16.mxu0 0
    %1068 = vmatpush1.bf16.msra.mxu0 0
    %1069 = vmatprep.subr.bf16.mxu0 0
    %1070 = vmatpush1.bf16.msra.mxu0 0
    %1071 = vmatprep.mubr.bf16.mxu0 0
    %1072 = vmatmul.mubr.bf16.gmra.mrb[0].mxu0 %v1034
    %v1073 = vpop.f32.mrb[0].mxu0
    %v1074 = vadd.f32 0.0, %v1073
    %v1075 = vpop.f32.mrb[0].mxu0
    %v1076 = vpop.f32.mrb[0].mxu0
    %v1077 = vpop.f32.mrb[0].mxu0
    %1078 = vdwg.mxu0
    %1079 = vrot.lane.b32.xlu0 %v242, 64
    %v1080 = vpop.permute.xlu0 %1079
    %v1082 = vsel %vm256, %v741, 0
    %v1085 = vsel %vm747, %v1080, 0
    %1087 = vmatprep.subr.bf16.mxu0 0
    %1088 = vmatpush1.bf16.msra.mxu0 %v1085
    %1089 = vmatprep.subr.bf16.mxu0 0
    %1090 = vmatpush1.bf16.msra.mxu0 0
    %1091 = vmatprep.subr.bf16.mxu0 0
    %1092 = vmatpush1.bf16.msra.mxu0 0
    %1093 = vmatprep.subr.bf16.mxu0 0
    %1094 = vmatpush1.bf16.msra.mxu0 0
    %1095 = vmatprep.subr.bf16.mxu0 0
    %1096 = vmatpush1.bf16.msra.mxu0 0
    %1097 = vmatprep.subr.bf16.mxu0 0
    %1098 = vmatpush1.bf16.msra.mxu0 0
    %1099 = vmatprep.subr.bf16.mxu0 0
    %1100 = vmatpush1.bf16.msra.mxu0 0
    %1101 = vmatprep.subr.bf16.mxu0 0
    %1102 = vmatpush1.bf16.msra.mxu0 0
    %1103 = vmatprep.subr.bf16.mxu0 0
    %1104 = vmatpush1.bf16.msra.mxu0 0
    %1105 = vmatprep.subr.bf16.mxu0 0
    %1106 = vmatpush1.bf16.msra.mxu0 0
    %1107 = vmatprep.subr.bf16.mxu0 0
    %1108 = vmatpush1.bf16.msra.mxu0 0
    %1109 = vmatprep.subr.bf16.mxu0 0
    %1110 = vmatpush1.bf16.msra.mxu0 0
    %1111 = vmatprep.subr.bf16.mxu0 0
    %1112 = vmatpush1.bf16.msra.mxu0 0
    %1113 = vmatprep.subr.bf16.mxu0 0
    %1114 = vmatpush1.bf16.msra.mxu0 0
    %1115 = vmatprep.subr.bf16.mxu0 0
    %1116 = vmatpush1.bf16.msra.mxu0 0
    %1117 = vmatprep.subr.bf16.mxu0 0
    %1118 = vmatpush1.bf16.msra.mxu0 0
    %1119 = vmatprep.mubr.bf16.mxu0 0
    %1120 = vmatmul.mubr.bf16.gmra.mrb[0].mxu0 %v1082
    %v1121 = vpop.f32.mrb[0].mxu0
    %v1122 = vadd.f32 0.0, %v1121
    %v1123 = vpop.f32.mrb[0].mxu0
    %v1124 = vpop.f32.mrb[0].mxu0
    %v1125 = vpop.f32.mrb[0].mxu0
    %1126 = vdwg.mxu0
    %1129 = vrot.lane.b32.xlu0 %v882, 8
    %v1130 = vpop.permute.xlu0 %1129
    %1131 = vrot.lane.b32.xlu0 %v930, 8
    %v1132 = vpop.permute.xlu0 %1131
    %1137 = vrot.lane.b32.xlu0 %v978, 16
    %v1138 = vpop.permute.xlu0 %1137
    %1139 = vrot.lane.b32.xlu0 %v1026, 16
    %v1140 = vpop.permute.xlu0 %1139
    %1145 = vrot.lane.b32.xlu0 %v1074, 24
    %v1146 = vpop.permute.xlu0 %1145
    %1147 = vrot.lane.b32.xlu0 %v1122, 24
    %v1148 = vpop.permute.xlu0 %1147
    %v1151 = vsel %vm256, %v786, %v1130
    %v1152 = vsel %vm256, %v834, %v1132
    %vm1153 = vcmask 130048
    %v1154 = vsel %vm1153, %v1151, %v1138
    %v1155 = vsel %vm1153, %v1152, %v1140
    %vm1156 = vcmask 195584
    %v1157 = vsel %vm1156, %v1154, %v1146
    %v1158 = vsel %vm1156, %v1155, %v1148
    %v1159 = vpack.c.bf16 %v1158, %v1157
    %v1160 = vlaneseq
    %v1161 = vshrl.u32 %v1160, 7
    %v1162 = vsub.s32 0, %v1161
    %v1163 = vrot.slane %v107, %v1162
    %v1168 = vunpack.c.l.b16 %v90
    %v1169 = vunpack.c.l.b16 %v91
    %v1170 = vunpack.c.l.b16 %v92
    %v1171 = vunpack.c.l.b16 %v93
    %v1172 = vpack.c.b16 %v1169, %v1168
    %v1173 = vpack.c.b16 %v1171, %v1170
    %v1177 = vsel %vm114, %v1159, 0
    %1179 = vmatprep.subr.bf16.mxu0 0
    %1180 = vmatpush1.bf16.msra.mxu0 %v1172
    %1181 = vmatprep.subr.bf16.mxu0 0
    %1182 = vmatpush1.bf16.msra.mxu0 %v1173
    %1183 = vmatprep.subr.bf16.mxu0 0
    %1184 = vmatpush1.bf16.msra.mxu0 0
    %1185 = vmatprep.subr.bf16.mxu0 0
    %1186 = vmatpush1.bf16.msra.mxu0 0
    %1187 = vmatprep.subr.bf16.mxu0 0
    %1188 = vmatpush1.bf16.msra.mxu0 0
    %1189 = vmatprep.subr.bf16.mxu0 0
    %1190 = vmatpush1.bf16.msra.mxu0 0
    %1191 = vmatprep.subr.bf16.mxu0 0
    %1192 = vmatpush1.bf16.msra.mxu0 0
    %1193 = vmatprep.subr.bf16.mxu0 0
    %1194 = vmatpush1.bf16.msra.mxu0 0
    %1195 = vmatprep.subr.bf16.mxu0 0
    %1196 = vmatpush1.bf16.msra.mxu0 0
    %1197 = vmatprep.subr.bf16.mxu0 0
    %1198 = vmatpush1.bf16.msra.mxu0 0
    %1199 = vmatprep.subr.bf16.mxu0 0
    %1200 = vmatpush1.bf16.msra.mxu0 0
    %1201 = vmatprep.subr.bf16.mxu0 0
    %1202 = vmatpush1.bf16.msra.mxu0 0
    %1203 = vmatprep.subr.bf16.mxu0 0
    %1204 = vmatpush1.bf16.msra.mxu0 0
    %1205 = vmatprep.subr.bf16.mxu0 0
    %1206 = vmatpush1.bf16.msra.mxu0 0
    %1207 = vmatprep.subr.bf16.mxu0 0
    %1208 = vmatpush1.bf16.msra.mxu0 0
    %1209 = vmatprep.subr.bf16.mxu0 0
    %1210 = vmatpush1.bf16.msra.mxu0 0
    %1211 = vmatprep.mubr.bf16.mxu0 0
    %1212 = vmatmul.mubr.bf16.gmra.mrb[0].mxu0 %v1177
    %v1213 = vpop.f32.mrb[0].mxu0
    %v1214 = vadd.f32 %v1163, %v1213
    %v1215 = vpop.f32.mrb[0].mxu0
    %v1216 = vpop.f32.mrb[0].mxu0
    %v1217 = vadd.f32 %v1163, %v1216
    %v1218 = vpop.f32.mrb[0].mxu0
    %1219 = vdwg.mxu0
    %v1220 = vadd.f32 %v60, %v1214
    %v1221 = vadd.f32 %v61, %v1217
    %v1222 = vpack.c.bf16 %v1221, %v1220
    %v1223 = vlaneseq
    %v1224 = vshrl.u32 %v1223, 7
    %v1225 = vsub.s32 0, %v1224
    %v1226 = vrot.slane %v112, %v1225
    %v1231 = vunpack.c.l.b16 %v94
    %v1232 = vunpack.c.l.b16 %v95
    %v1233 = vunpack.c.l.b16 %v96
    %v1234 = vunpack.c.l.b16 %v97
    %v1235 = vpack.c.b16 %v1232, %v1231
    %v1236 = vpack.c.b16 %v1234, %v1233
    %v1240 = vsel %vm114, %v1222, 0
    %1242 = vmatprep.subr.bf16.mxu0 0
    %1243 = vmatpush1.bf16.msra.mxu0 %v1235
    %1244 = vmatprep.subr.bf16.mxu0 0
    %1245 = vmatpush1.bf16.msra.mxu0 %v1236
    %1246 = vmatprep.subr.bf16.mxu0 0
    %1247 = vmatpush1.bf16.msra.mxu0 0
    %1248 = vmatprep.subr.bf16.mxu0 0
    %1249 = vmatpush1.bf16.msra.mxu0 0
    %1250 = vmatprep.subr.bf16.mxu0 0
    %1251 = vmatpush1.bf16.msra.mxu0 0
    %1252 = vmatprep.subr.bf16.mxu0 0
    %1253 = vmatpush1.bf16.msra.mxu0 0
    %1254 = vmatprep.subr.bf16.mxu0 0
    %1255 = vmatpush1.bf16.msra.mxu0 0
    %1256 = vmatprep.subr.bf16.mxu0 0
    %1257 = vmatpush1.bf16.msra.mxu0 0
    %1258 = vmatprep.subr.bf16.mxu0 0
    %1259 = vmatpush1.bf16.msra.mxu0 0
    %1260 = vmatprep.subr.bf16.mxu0 0
    %1261 = vmatpush1.bf16.msra.mxu0 0
    %1262 = vmatprep.subr.bf16.mxu0 0
    %1263 = vmatpush1.bf16.msra.mxu0 0
    %1264 = vmatprep.subr.bf16.mxu0 0
    %1265 = vmatpush1.bf16.msra.mxu0 0
    %1266 = vmatprep.subr.bf16.mxu0 0
    %1267 = vmatpush1.bf16.msra.mxu0 0
    %1268 = vmatprep.subr.bf16.mxu0 0
    %1269 = vmatpush1.bf16.msra.mxu0 0
    %1270 = vmatprep.subr.bf16.mxu0 0
    %1271 = vmatpush1.bf16.msra.mxu0 0
    %1272 = vmatprep.subr.bf16.mxu0 0
    %1273 = vmatpush1.bf16.msra.mxu0 0
    %1274 = vmatprep.mubr.bf16.mxu0 0
    %1275 = vmatmul.mubr.bf16.gmra.mrb[0].mxu0 %v1240
    %v1276 = vpop.f32.mrb[0].mxu0
    %v1277 = vadd.f32 %v1226, %v1276
    %v1278 = vpop.f32.mrb[0].mxu0
    %v1279 = vpop.f32.mrb[0].mxu0
    %v1280 = vadd.f32 %v1226, %v1279
    %v1281 = vpop.f32.mrb[0].mxu0
    %1282 = vdwg.mxu0
    %v1283 = vmul.f32 %v1277, 0.5
    %v1284 = vmul.f32 %v1280, 0.5
    %v1285 = vmul.f32 %v1277, 0.044715
    %v1286 = vmul.f32 %v1280, 0.044715
    %v1287 = vmul.f32 %v1285, %v1277
    %v1288 = vmul.f32 %v1286, %v1280
    %v1289 = vmul.f32 %v1287, %v1277
    %v1290 = vmul.f32 %v1288, %v1280
    %v1291 = vadd.f32 %v1277, %v1289
    %v1292 = vadd.f32 %v1280, %v1290
    %v1293 = vmul.f32 %v1291, 0.7978846
    %v1294 = vmul.f32 %v1292, 0.7978846
    %v1295 = vtanh.pop %v1293
    %v1296 = vtanh.pop %v1294
    %v1297 = vadd.f32 %v1295, 1.0
    %v1298 = vadd.f32 %v1296, 1.0
    %v1299 = vmul.f32 %v1283, %v1297
    %v1300 = vmul.f32 %v1284, %v1298
    %v1301 = vpack.c.bf16 %v1300, %v1299
    %v1302 = vlaneseq
    %v1303 = vshrl.u32 %v1302, 7
    %v1304 = vsub.s32 0, %v1303
    %v1305 = vrot.slane %v113, %v1304
    %v1314 = vunpack.c.l.b16 %v98
    %v1315 = vunpack.c.l.b16 %v99
    %v1316 = vunpack.c.l.b16 %v100
    %v1317 = vunpack.c.l.b16 %v101
    %v1318 = vunpack.c.l.b16 %v102
    %v1319 = vunpack.c.l.b16 %v103
    %v1320 = vunpack.c.l.b16 %v104
    %v1321 = vunpack.c.l.b16 %v105
    %v1322 = vpack.c.b16 %v1315, %v1314
    %v1323 = vpack.c.b16 %v1317, %v1316
    %v1324 = vpack.c.b16 %v1319, %v1318
    %v1325 = vpack.c.b16 %v1321, %v1320
    %vm1330 = vcmask 523264
    %v1332 = vsel %vm1330, %v1301, 0
    %1334 = vmatprep.subr.bf16.mxu0 0
    %1335 = vmatpush1.bf16.msra.mxu0 %v1322
    %1336 = vmatprep.subr.bf16.mxu0 0
    %1337 = vmatpush1.bf16.msra.mxu0 %v1323
    %1338 = vmatprep.subr.bf16.mxu0 0
    %1339 = vmatpush1.bf16.msra.mxu0 %v1324
    %1340 = vmatprep.subr.bf16.mxu0 0
    %1341 = vmatpush1.bf16.msra.mxu0 %v1325
    %1342 = vmatprep.subr.bf16.mxu0 0
    %1343 = vmatpush1.bf16.msra.mxu0 0
    %1344 = vmatprep.subr.bf16.mxu0 0
    %1345 = vmatpush1.bf16.msra.mxu0 0
    %1346 = vmatprep.subr.bf16.mxu0 0
    %1347 = vmatpush1.bf16.msra.mxu0 0
    %1348 = vmatprep.subr.bf16.mxu0 0
    %1349 = vmatpush1.bf16.msra.mxu0 0
    %1350 = vmatprep.subr.bf16.mxu0 0
    %1351 = vmatpush1.bf16.msra.mxu0 0
    %1352 = vmatprep.subr.bf16.mxu0 0
    %1353 = vmatpush1.bf16.msra.mxu0 0
    %1354 = vmatprep.subr.bf16.mxu0 0
    %1355 = vmatpush1.bf16.msra.mxu0 0
    %1356 = vmatprep.subr.bf16.mxu0 0
    %1357 = vmatpush1.bf16.msra.mxu0 0
    %1358 = vmatprep.subr.bf16.mxu0 0
    %1359 = vmatpush1.bf16.msra.mxu0 0
    %1360 = vmatprep.subr.bf16.mxu0 0
    %1361 = vmatpush1.bf16.msra.mxu0 0
    %1362 = vmatprep.subr.bf16.mxu0 0
    %1363 = vmatpush1.bf16.msra.mxu0 0
    %1364 = vmatprep.subr.bf16.mxu0 0
    %1365 = vmatpush1.bf16.msra.mxu0 0
    %1366 = vmatprep.mubr.bf16.mxu0 0
    %1367 = vmatmul.mubr.bf16.gmra.mrb[0].mxu0 %v1332
    %v1368 = vpop.f32.mrb[0].mxu0
    %v1369 = vadd.f32 %v1305, %v1368
    %v1370 = vpop.f32.mrb[0].mxu0
    %v1371 = vpop.f32.mrb[0].mxu0
    %v1372 = vadd.f32 %v1305, %v1371
    %v1373 = vpop.f32.mrb[0].mxu0
    %1374 = vdwg.mxu0
    %v1375 = vsel %vm114, %v1369, 0.0
    %1376 = vadd.xlane.f32.xlu0 %v1375
    %v1377 = vpop.xlane.xlu0 %1376
    %v1378 = vsel %vm114, %v1372, 0.0
    %1379 = vadd.xlane.f32.xlu0 %v1378
    %v1380 = vpop.xlane.xlu0 %1379
    %v1381 = vmul.f32 %v1377, %v121
    %v1382 = vmul.f32 %v1380, %v121
    %v1383 = vsub.f32 %v1369, %v1381
    %v1384 = vsub.f32 %v1372, %v1382
    %v1385 = vmul.f32 %v1383, %v1383
    %v1386 = vmul.f32 %v1384, %v1384
    %v1387 = vsel %vm114, %v1385, 0.0
    %1388 = vadd.xlane.f32.xlu0 %v1387
    %v1389 = vpop.xlane.xlu0 %1388
    %v1390 = vsel %vm114, %v1386, 0.0
    %1391 = vadd.xlane.f32.xlu0 %v1390
    %v1392 = vpop.xlane.xlu0 %1391
    %v1393 = vmul.f32 %v1389, %v121
    %v1394 = vmul.f32 %v1392, %v121
    %v1395 = vadd.f32 %v1393, 1e-05
    %v1396 = vadd.f32 %v1394, 1e-05
    %v1397 = vrsqrt.pop %v1395
    %v1398 = vrsqrt.pop %v1396
    %v1399 = vmul.f32 %v1383, %v1397
    %v1400 = vmul.f32 %v1384, %v1398
    %v1401 = vlaneseq
    %v1402 = vshrl.u32 %v1401, 7
    %v1403 = vsub.s32 0, %v1402
    %v1404 = vrot.slane %v110, %v1403
    %v1405 = vmul.f32 %v1399, %v1404
    %v1406 = vmul.f32 %v1400, %v1404
    %v1407 = vlaneseq
    %v1408 = vshrl.u32 %v1407, 7
    %v1409 = vsub.s32 0, %v1408
    %v1410 = vrot.slane %v111, %v1409
    %v1411 = vadd.f32 %v1405, %v1410
    %v1412 = vadd.f32 %v1406, %v1410
    %v1413 = vadd.f32 %v1220, %v1411
    %v1414 = vadd.f32 %v1221, %v1412
    %s1415 = scalar_lea.vmem [#allocation5], 80
    %v1416 = vld [vmem:[%s1415] sm:$0xf]
    %v1417 = vld [vmem:[%s1415 + $0x4] sm:$0xf]
    %v1418 = vld [vmem:[%s1415 + $0x8] sm:$0xf]
    %v1419 = vld [vmem:[%s1415 + $0xc] sm:$0xf]
    %v1420 = vld [vmem:[%s1415 + $0x10] sm:$0xf]
    %v1421 = vld [vmem:[%s1415 + $0x14] sm:$0xf]
    %v1422 = vld [vmem:[%s1415 + $0x18] sm:$0xf]
    %v1423 = vld [vmem:[%s1415 + $0x1c] sm:$0xf]
    %v1424 = vld [vmem:[%s1415 + $0x20] sm:$0xf]
    %v1425 = vld [vmem:[%s1415 + $0x24] sm:$0xf]
    %v1426 = vld [vmem:[%s1415 + $0x28] sm:$0xf]
    %v1427 = vld [vmem:[%s1415 + $0x2c] sm:$0xf]
    %v1428 = vld [vmem:[%s1415 + $0x30] sm:$0xf]
    %v1429 = vld [vmem:[%s1415 + $0x34] sm:$0xf]
    %v1430 = vld [vmem:[%s1415 + $0x38] sm:$0xf]
    %v1431 = vld [vmem:[%s1415 + $0x3c] sm:$0xf]
    %v1432 = vld [vmem:[%s1415 + $0x40] sm:$0xf]
    %v1433 = vld [vmem:[%s1415 + $0x44] sm:$0xf]
    %v1434 = vld [vmem:[%s1415 + $0x48] sm:$0xf]
    %v1435 = vld [vmem:[%s1415 + $0x4c] sm:$0xf]
    %v1436 = vld [vmem:[#allocation7 + $0x8] sm:$0x1]
    %v1437 = vld [vmem:[#allocation7 + $0x9] sm:$0x1]
    %v1438 = vld [vmem:[#allocation7 + $0xa] sm:$0x1]
    %v1439 = vld [vmem:[#allocation7 + $0xb] sm:$0x1]
    %v1440 = vld [vmem:[#allocation7 + $0xc] sm:$0x1]
    %v1441 = vld [vmem:[#allocation7 + $0xd] sm:$0x1]
    %v1442 = vld [vmem:[#allocation7 + $0xe] sm:$0x1]
    %v1443 = vld [vmem:[#allocation7 + $0xf] sm:$0x1]
    %v1444 = vsel %vm114, %v1413, 0.0
    %1445 = vadd.xlane.f32.xlu0 %v1444
    %v1446 = vpop.xlane.xlu0 %1445
    %v1447 = vsel %vm114, %v1414, 0.0
    %1448 = vadd.xlane.f32.xlu0 %v1447
    %v1449 = vpop.xlane.xlu0 %1448
    %v1450 = vmul.f32 %v1446, %v121
    %v1451 = vmul.f32 %v1449, %v121
    %v1452 = vsub.f32 %v1413, %v1450
    %v1453 = vsub.f32 %v1414, %v1451
    %v1454 = vmul.f32 %v1452, %v1452
    %v1455 = vmul.f32 %v1453, %v1453
    %v1456 = vsel %vm114, %v1454, 0.0
    %1457 = vadd.xlane.f32.xlu0 %v1456
    %v1458 = vpop.xlane.xlu0 %1457
    %v1459 = vsel %vm114, %v1455, 0.0
    %1460 = vadd.xlane.f32.xlu0 %v1459
    %v1461 = vpop.xlane.xlu0 %1460
    %v1462 = vmul.f32 %v1458, %v121
    %v1463 = vmul.f32 %v1461, %v121
    %v1464 = vadd.f32 %v1462, 1e-05
    %v1465 = vadd.f32 %v1463, 1e-05
    %v1466 = vrsqrt.pop %v1464
    %v1467 = vrsqrt.pop %v1465
    %v1468 = vmul.f32 %v1452, %v1466
    %v1469 = vmul.f32 %v1453, %v1467
    %v1470 = vlaneseq
    %v1471 = vshrl.u32 %v1470, 7
    %v1472 = vsub.s32 0, %v1471
    %v1473 = vrot.slane %v1438, %v1472
    %v1474 = vmul.f32 %v1468, %v1473
    %v1475 = vmul.f32 %v1469, %v1473
    %v1476 = vlaneseq
    %v1477 = vshrl.u32 %v1476, 7
    %v1478 = vsub.s32 0, %v1477
    %v1479 = vrot.slane %v1439, %v1478
    %v1480 = vadd.f32 %v1474, %v1479
    %v1481 = vadd.f32 %v1475, %v1479
    %v1482 = vpack.c.bf16 %v1481, %v1480
    %v1483 = vlaneseq
    %v1484 = vshrl.u32 %v1483, 7
    %v1485 = vsub.s32 0, %v1484
    %v1486 = vrot.slane %v1436, %v1485
    %v1491 = vunpack.c.l.b16 %v1416
    %v1492 = vunpack.c.l.b16 %v1417
    %v1493 = vunpack.c.l.b16 %v1418
    %v1494 = vunpack.c.l.b16 %v1419
    %v1495 = vpack.c.b16 %v1492, %v1491
    %v1496 = vpack.c.b16 %v1494, %v1493
    %v1500 = vsel %vm114, %v1482, 0
    %1502 = vmatprep.subr.bf16.mxu0 0
    %1503 = vmatpush1.bf16.msra.mxu0 %v1495
    %1504 = vmatprep.subr.bf16.mxu0 0
    %1505 = vmatpush1.bf16.msra.mxu0 %v1496
    %1506 = vmatprep.subr.bf16.mxu0 0
    %1507 = vmatpush1.bf16.msra.mxu0 0
    %1508 = vmatprep.subr.bf16.mxu0 0
    %1509 = vmatpush1.bf16.msra.mxu0 0
    %1510 = vmatprep.subr.bf16.mxu0 0
    %1511 = vmatpush1.bf16.msra.mxu0 0
    %1512 = vmatprep.subr.bf16.mxu0 0
    %1513 = vmatpush1.bf16.msra.mxu0 0
    %1514 = vmatprep.subr.bf16.mxu0 0
    %1515 = vmatpush1.bf16.msra.mxu0 0
    %1516 = vmatprep.subr.bf16.mxu0 0
    %1517 = vmatpush1.bf16.msra.mxu0 0
    %1518 = vmatprep.subr.bf16.mxu0 0
    %1519 = vmatpush1.bf16.msra.mxu0 0
    %1520 = vmatprep.subr.bf16.mxu0 0
    %1521 = vmatpush1.bf16.msra.mxu0 0
    %1522 = vmatprep.subr.bf16.mxu0 0
    %1523 = vmatpush1.bf16.msra.mxu0 0
    %1524 = vmatprep.subr.bf16.mxu0 0
    %1525 = vmatpush1.bf16.msra.mxu0 0
    %1526 = vmatprep.subr.bf16.mxu0 0
    %1527 = vmatpush1.bf16.msra.mxu0 0
    %1528 = vmatprep.subr.bf16.mxu0 0
    %1529 = vmatpush1.bf16.msra.mxu0 0
    %1530 = vmatprep.subr.bf16.mxu0 0
    %1531 = vmatpush1.bf16.msra.mxu0 0
    %1532 = vmatprep.subr.bf16.mxu0 0
    %1533 = vmatpush1.bf16.msra.mxu0 0
    %1534 = vmatprep.mubr.bf16.mxu0 0
    %1535 = vmatmul.mubr.bf16.gmra.mrb[0].mxu0 %v1500
    %v1536 = vpop.f32.mrb[0].mxu0
    %v1537 = vadd.f32 %v1486, %v1536
    %v1538 = vpop.f32.mrb[0].mxu0
    %v1539 = vpop.f32.mrb[0].mxu0
    %v1540 = vadd.f32 %v1486, %v1539
    %v1541 = vpop.f32.mrb[0].mxu0
    %1542 = vdwg.mxu0
    %1545 = vrot.lane.b32.xlu0 %v1537, 120
    %v1546 = vpop.permute.xlu0 %1545
    %1547 = vrot.lane.b32.xlu0 %v1540, 120
    %v1548 = vpop.permute.xlu0 %1547
    %1551 = vrot.lane.b32.xlu0 %v1537, 112
    %v1552 = vpop.permute.xlu0 %1551
    %1553 = vrot.lane.b32.xlu0 %v1540, 112
    %v1554 = vpop.permute.xlu0 %1553
    %1557 = vrot.lane.b32.xlu0 %v1537, 104
    %v1558 = vpop.permute.xlu0 %1557
    %1559 = vrot.lane.b32.xlu0 %v1540, 104
    %v1560 = vpop.permute.xlu0 %1559
    %v1563 = vpack.c.bf16 %v1537, %v1537
    %v1564 = vpack.c.bf16 %v1540, %v1540
    %v1565 = vpack.c.bf16 %v1546, %v1546
    %v1566 = vpack.c.bf16 %v1548, %v1548
    %v1567 = vpack.c.bf16 %v1552, %v1552
    %v1568 = vpack.c.bf16 %v1554, %v1554
    %v1569 = vpack.c.bf16 %v1558, %v1558
    %v1570 = vpack.c.bf16 %v1560, %v1560
    %1572 = vrot.lane.b32.xlu0 %v1563, 96
    %v1573 = vpop.permute.xlu0 %1572
    %v1575 = vsel %vm256, %v1563, 0
    %v1578 = vsel %vm256, %v1573, 0
    %1580 = vmatprep.subr.bf16.mxu0 0
    %1581 = vmatpush1.bf16.xpose.msra.mxu0 %v1578
    %1582 = vmatprep.subr.bf16.mxu0 0
    %1583 = vmatpush1.bf16.xpose.msra.mxu0 0
    %1584 = vmatprep.subr.bf16.mxu0 0
    %1585 = vmatpush1.bf16.xpose.msra.mxu0 0
    %1586 = vmatprep.subr.bf16.mxu0 0
    %1587 = vmatpush1.bf16.xpose.msra.mxu0 0
    %1588 = vmatprep.subr.bf16.mxu0 0
    %1589 = vmatpush1.bf16.xpose.msra.mxu0 0
    %1590 = vmatprep.subr.bf16.mxu0 0
    %1591 = vmatpush1.bf16.xpose.msra.mxu0 0
    %1592 = vmatprep.subr.bf16.mxu0 0
    %1593 = vmatpush1.bf16.xpose.msra.mxu0 0
    %1594 = vmatprep.subr.bf16.mxu0 0
    %1595 = vmatpush1.bf16.xpose.msra.mxu0 0
    %1596 = vmatprep.subr.bf16.mxu0 0
    %1597 = vmatpush1.bf16.xpose.msra.mxu0 0
    %1598 = vmatprep.subr.bf16.mxu0 0
    %1599 = vmatpush1.bf16.xpose.msra.mxu0 0
    %1600 = vmatprep.subr.bf16.mxu0 0
    %1601 = vmatpush1.bf16.xpose.msra.mxu0 0
    %1602 = vmatprep.subr.bf16.mxu0 0
    %1603 = vmatpush1.bf16.xpose.msra.mxu0 0
    %1604 = vmatprep.subr.bf16.mxu0 0
    %1605 = vmatpush1.bf16.xpose.msra.mxu0 0
    %1606 = vmatprep.subr.bf16.mxu0 0
    %1607 = vmatpush1.bf16.xpose.msra.mxu0 0
    %1608 = vmatprep.subr.bf16.mxu0 0
    %1609 = vmatpush1.bf16.xpose.msra.mxu0 0
    %1610 = vmatprep.subr.bf16.mxu0 0
    %1611 = vmatpush1.bf16.xpose.msra.mxu0 0
    %1612 = vmatprep.mubr.bf16.mxu0 0
    %1613 = vmatmul.mubr.bf16.gmra.mrb[0].mxu0 %v1575
    %v1614 = vpop.f32.mrb[0].mxu0
    %v1615 = vadd.f32 %v246, %v1614
    %v1616 = vpop.f32.mrb[0].mxu0
    %v1617 = vpop.f32.mrb[0].mxu0
    %v1618 = vpop.f32.mrb[0].mxu0
    %1619 = vdwg.mxu0
    %1621 = vrot.lane.b32.xlu0 %v1564, 96
    %v1622 = vpop.permute.xlu0 %1621
    %v1624 = vsel %vm256, %v1564, 0
    %v1627 = vsel %vm256, %v1622, 0
    %1629 = vmatprep.subr.bf16.mxu0 0
    %1630 = vmatpush1.bf16.xpose.msra.mxu0 %v1627
    %1631 = vmatprep.subr.bf16.mxu0 0
    %1632 = vmatpush1.bf16.xpose.msra.mxu0 0
    %1633 = vmatprep.subr.bf16.mxu0 0
    %1634 = vmatpush1.bf16.xpose.msra.mxu0 0
    %1635 = vmatprep.subr.bf16.mxu0 0
    %1636 = vmatpush1.bf16.xpose.msra.mxu0 0
    %1637 = vmatprep.subr.bf16.mxu0 0
    %1638 = vmatpush1.bf16.xpose.msra.mxu0 0
    %1639 = vmatprep.subr.bf16.mxu0 0
    %1640 = vmatpush1.bf16.xpose.msra.mxu0 0
    %1641 = vmatprep.subr.bf16.mxu0 0
    %1642 = vmatpush1.bf16.xpose.msra.mxu0 0
    %1643 = vmatprep.subr.bf16.mxu0 0
    %1644 = vmatpush1.bf16.xpose.msra.mxu0 0
    %1645 = vmatprep.subr.bf16.mxu0 0
    %1646 = vmatpush1.bf16.xpose.msra.mxu0 0
    %1647 = vmatprep.subr.bf16.mxu0 0
    %1648 = vmatpush1.bf16.xpose.msra.mxu0 0
    %1649 = vmatprep.subr.bf16.mxu0 0
    %1650 = vmatpush1.bf16.xpose.msra.mxu0 0
    %1651 = vmatprep.subr.bf16.mxu0 0
    %1652 = vmatpush1.bf16.xpose.msra.mxu0 0
    %1653 = vmatprep.subr.bf16.mxu0 0
    %1654 = vmatpush1.bf16.xpose.msra.mxu0 0
    %1655 = vmatprep.subr.bf16.mxu0 0
    %1656 = vmatpush1.bf16.xpose.msra.mxu0 0
    %1657 = vmatprep.subr.bf16.mxu0 0
    %1658 = vmatpush1.bf16.xpose.msra.mxu0 0
    %1659 = vmatprep.subr.bf16.mxu0 0
    %1660 = vmatpush1.bf16.xpose.msra.mxu0 0
    %1661 = vmatprep.mubr.bf16.mxu0 0
    %1662 = vmatmul.mubr.bf16.gmra.mrb[0].mxu0 %v1624
    %v1663 = vpop.f32.mrb[0].mxu0
    %v1664 = vadd.f32 %v250, %v1663
    %v1665 = vpop.f32.mrb[0].mxu0
    %v1666 = vpop.f32.mrb[0].mxu0
    %v1667 = vpop.f32.mrb[0].mxu0
    %1668 = vdwg.mxu0
    %1670 = vrot.lane.b32.xlu0 %v1565, 96
    %v1671 = vpop.permute.xlu0 %1670
    %v1673 = vsel %vm256, %v1565, 0
    %v1676 = vsel %vm256, %v1671, 0
    %1678 = vmatprep.subr.bf16.mxu0 0
    %1679 = vmatpush1.bf16.xpose.msra.mxu0 %v1676
    %1680 = vmatprep.subr.bf16.mxu0 0
    %1681 = vmatpush1.bf16.xpose.msra.mxu0 0
    %1682 = vmatprep.subr.bf16.mxu0 0
    %1683 = vmatpush1.bf16.xpose.msra.mxu0 0
    %1684 = vmatprep.subr.bf16.mxu0 0
    %1685 = vmatpush1.bf16.xpose.msra.mxu0 0
    %1686 = vmatprep.subr.bf16.mxu0 0
    %1687 = vmatpush1.bf16.xpose.msra.mxu0 0
    %1688 = vmatprep.subr.bf16.mxu0 0
    %1689 = vmatpush1.bf16.xpose.msra.mxu0 0
    %1690 = vmatprep.subr.bf16.mxu0 0
    %1691 = vmatpush1.bf16.xpose.msra.mxu0 0
    %1692 = vmatprep.subr.bf16.mxu0 0
    %1693 = vmatpush1.bf16.xpose.msra.mxu0 0
    %1694 = vmatprep.subr.bf16.mxu0 0
    %1695 = vmatpush1.bf16.xpose.msra.mxu0 0
    %1696 = vmatprep.subr.bf16.mxu0 0
    %1697 = vmatpush1.bf16.xpose.msra.mxu0 0
    %1698 = vmatprep.subr.bf16.mxu0 0
    %1699 = vmatpush1.bf16.xpose.msra.mxu0 0
    %1700 = vmatprep.subr.bf16.mxu0 0
    %1701 = vmatpush1.bf16.xpose.msra.mxu0 0
    %1702 = vmatprep.subr.bf16.mxu0 0
    %1703 = vmatpush1.bf16.xpose.msra.mxu0 0
    %1704 = vmatprep.subr.bf16.mxu0 0
    %1705 = vmatpush1.bf16.xpose.msra.mxu0 0
    %1706 = vmatprep.subr.bf16.mxu0 0
    %1707 = vmatpush1.bf16.xpose.msra.mxu0 0
    %1708 = vmatprep.subr.bf16.mxu0 0
    %1709 = vmatpush1.bf16.xpose.msra.mxu0 0
    %1710 = vmatprep.mubr.bf16.mxu0 0
    %1711 = vmatmul.mubr.bf16.gmra.mrb[0].mxu0 %v1673
    %v1712 = vpop.f32.mrb[0].mxu0
    %v1713 = vadd.f32 %v246, %v1712
    %v1714 = vpop.f32.mrb[0].mxu0
    %v1715 = vpop.f32.mrb[0].mxu0
    %v1716 = vpop.f32.mrb[0].mxu0
    %1717 = vdwg.mxu0
    %1719 = vrot.lane.b32.xlu0 %v1566, 96
    %v1720 = vpop.permute.xlu0 %1719
    %v1722 = vsel %vm256, %v1566, 0
    %v1725 = vsel %vm256, %v1720, 0
    %1727 = vmatprep.subr.bf16.mxu0 0
    %1728 = vmatpush1.bf16.xpose.msra.mxu0 %v1725
    %1729 = vmatprep.subr.bf16.mxu0 0
    %1730 = vmatpush1.bf16.xpose.msra.mxu0 0
    %1731 = vmatprep.subr.bf16.mxu0 0
    %1732 = vmatpush1.bf16.xpose.msra.mxu0 0
    %1733 = vmatprep.subr.bf16.mxu0 0
    %1734 = vmatpush1.bf16.xpose.msra.mxu0 0
    %1735 = vmatprep.subr.bf16.mxu0 0
    %1736 = vmatpush1.bf16.xpose.msra.mxu0 0
    %1737 = vmatprep.subr.bf16.mxu0 0
    %1738 = vmatpush1.bf16.xpose.msra.mxu0 0
    %1739 = vmatprep.subr.bf16.mxu0 0
    %1740 = vmatpush1.bf16.xpose.msra.mxu0 0
    %1741 = vmatprep.subr.bf16.mxu0 0
    %1742 = vmatpush1.bf16.xpose.msra.mxu0 0
    %1743 = vmatprep.subr.bf16.mxu0 0
    %1744 = vmatpush1.bf16.xpose.msra.mxu0 0
    %1745 = vmatprep.subr.bf16.mxu0 0
    %1746 = vmatpush1.bf16.xpose.msra.mxu0 0
    %1747 = vmatprep.subr.bf16.mxu0 0
    %1748 = vmatpush1.bf16.xpose.msra.mxu0 0
    %1749 = vmatprep.subr.bf16.mxu0 0
    %1750 = vmatpush1.bf16.xpose.msra.mxu0 0
    %1751 = vmatprep.subr.bf16.mxu0 0
    %1752 = vmatpush1.bf16.xpose.msra.mxu0 0
    %1753 = vmatprep.subr.bf16.mxu0 0
    %1754 = vmatpush1.bf16.xpose.msra.mxu0 0
    %1755 = vmatprep.subr.bf16.mxu0 0
    %1756 = vmatpush1.bf16.xpose.msra.mxu0 0
    %1757 = vmatprep.subr.bf16.mxu0 0
    %1758 = vmatpush1.bf16.xpose.msra.mxu0 0
    %1759 = vmatprep.mubr.bf16.mxu0 0
    %1760 = vmatmul.mubr.bf16.gmra.mrb[0].mxu0 %v1722
    %v1761 = vpop.f32.mrb[0].mxu0
    %v1762 = vadd.f32 %v250, %v1761
    %v1763 = vpop.f32.mrb[0].mxu0
    %v1764 = vpop.f32.mrb[0].mxu0
    %v1765 = vpop.f32.mrb[0].mxu0
    %1766 = vdwg.mxu0
    %1768 = vrot.lane.b32.xlu0 %v1567, 96
    %v1769 = vpop.permute.xlu0 %1768
    %v1771 = vsel %vm256, %v1567, 0
    %v1774 = vsel %vm256, %v1769, 0
    %1776 = vmatprep.subr.bf16.mxu0 0
    %1777 = vmatpush1.bf16.xpose.msra.mxu0 %v1774
    %1778 = vmatprep.subr.bf16.mxu0 0
    %1779 = vmatpush1.bf16.xpose.msra.mxu0 0
    %1780 = vmatprep.subr.bf16.mxu0 0
    %1781 = vmatpush1.bf16.xpose.msra.mxu0 0
    %1782 = vmatprep.subr.bf16.mxu0 0
    %1783 = vmatpush1.bf16.xpose.msra.mxu0 0
    %1784 = vmatprep.subr.bf16.mxu0 0
    %1785 = vmatpush1.bf16.xpose.msra.mxu0 0
    %1786 = vmatprep.subr.bf16.mxu0 0
    %1787 = vmatpush1.bf16.xpose.msra.mxu0 0
    %1788 = vmatprep.subr.bf16.mxu0 0
    %1789 = vmatpush1.bf16.xpose.msra.mxu0 0
    %1790 = vmatprep.subr.bf16.mxu0 0
    %1791 = vmatpush1.bf16.xpose.msra.mxu0 0
    %1792 = vmatprep.subr.bf16.mxu0 0
    %1793 = vmatpush1.bf16.xpose.msra.mxu0 0
    %1794 = vmatprep.subr.bf16.mxu0 0
    %1795 = vmatpush1.bf16.xpose.msra.mxu0 0
    %1796 = vmatprep.subr.bf16.mxu0 0
    %1797 = vmatpush1.bf16.xpose.msra.mxu0 0
    %1798 = vmatprep.subr.bf16.mxu0 0
    %1799 = vmatpush1.bf16.xpose.msra.mxu0 0
    %1800 = vmatprep.subr.bf16.mxu0 0
    %1801 = vmatpush1.bf16.xpose.msra.mxu0 0
    %1802 = vmatprep.subr.bf16.mxu0 0
    %1803 = vmatpush1.bf16.xpose.msra.mxu0 0
    %1804 = vmatprep.subr.bf16.mxu0 0
    %1805 = vmatpush1.bf16.xpose.msra.mxu0 0
    %1806 = vmatprep.subr.bf16.mxu0 0
    %1807 = vmatpush1.bf16.xpose.msra.mxu0 0
    %1808 = vmatprep.mubr.bf16.mxu0 0
    %1809 = vmatmul.mubr.bf16.gmra.mrb[0].mxu0 %v1771
    %v1810 = vpop.f32.mrb[0].mxu0
    %v1811 = vadd.f32 %v246, %v1810
    %v1812 = vpop.f32.mrb[0].mxu0
    %v1813 = vpop.f32.mrb[0].mxu0
    %v1814 = vpop.f32.mrb[0].mxu0
    %1815 = vdwg.mxu0
    %1817 = vrot.lane.b32.xlu0 %v1568, 96
    %v1818 = vpop.permute.xlu0 %1817
    %v1820 = vsel %vm256, %v1568, 0
    %v1823 = vsel %vm256, %v1818, 0
    %1825 = vmatprep.subr.bf16.mxu0 0
    %1826 = vmatpush1.bf16.xpose.msra.mxu0 %v1823
    %1827 = vmatprep.subr.bf16.mxu0 0
    %1828 = vmatpush1.bf16.xpose.msra.mxu0 0
    %1829 = vmatprep.subr.bf16.mxu0 0
    %1830 = vmatpush1.bf16.xpose.msra.mxu0 0
    %1831 = vmatprep.subr.bf16.mxu0 0
    %1832 = vmatpush1.bf16.xpose.msra.mxu0 0
    %1833 = vmatprep.subr.bf16.mxu0 0
    %1834 = vmatpush1.bf16.xpose.msra.mxu0 0
    %1835 = vmatprep.subr.bf16.mxu0 0
    %1836 = vmatpush1.bf16.xpose.msra.mxu0 0
    %1837 = vmatprep.subr.bf16.mxu0 0
    %1838 = vmatpush1.bf16.xpose.msra.mxu0 0
    %1839 = vmatprep.subr.bf16.mxu0 0
    %1840 = vmatpush1.bf16.xpose.msra.mxu0 0
    %1841 = vmatprep.subr.bf16.mxu0 0
    %1842 = vmatpush1.bf16.xpose.msra.mxu0 0
    %1843 = vmatprep.subr.bf16.mxu0 0
    %1844 = vmatpush1.bf16.xpose.msra.mxu0 0
    %1845 = vmatprep.subr.bf16.mxu0 0
    %1846 = vmatpush1.bf16.xpose.msra.mxu0 0
    %1847 = vmatprep.subr.bf16.mxu0 0
    %1848 = vmatpush1.bf16.xpose.msra.mxu0 0
    %1849 = vmatprep.subr.bf16.mxu0 0
    %1850 = vmatpush1.bf16.xpose.msra.mxu0 0
    %1851 = vmatprep.subr.bf16.mxu0 0
    %1852 = vmatpush1.bf16.xpose.msra.mxu0 0
    %1853 = vmatprep.subr.bf16.mxu0 0
    %1854 = vmatpush1.bf16.xpose.msra.mxu0 0
    %1855 = vmatprep.subr.bf16.mxu0 0
    %1856 = vmatpush1.bf16.xpose.msra.mxu0 0
    %1857 = vmatprep.mubr.bf16.mxu0 0
    %1858 = vmatmul.mubr.bf16.gmra.mrb[0].mxu0 %v1820
    %v1859 = vpop.f32.mrb[0].mxu0
    %v1860 = vadd.f32 %v250, %v1859
    %v1861 = vpop.f32.mrb[0].mxu0
    %v1862 = vpop.f32.mrb[0].mxu0
    %v1863 = vpop.f32.mrb[0].mxu0
    %1864 = vdwg.mxu0
    %1866 = vrot.lane.b32.xlu0 %v1569, 96
    %v1867 = vpop.permute.xlu0 %1866
    %v1869 = vsel %vm256, %v1569, 0
    %v1872 = vsel %vm256, %v1867, 0
    %1874 = vmatprep.subr.bf16.mxu0 0
    %1875 = vmatpush1.bf16.xpose.msra.mxu0 %v1872
    %1876 = vmatprep.subr.bf16.mxu0 0
    %1877 = vmatpush1.bf16.xpose.msra.mxu0 0
    %1878 = vmatprep.subr.bf16.mxu0 0
    %1879 = vmatpush1.bf16.xpose.msra.mxu0 0
    %1880 = vmatprep.subr.bf16.mxu0 0
    %1881 = vmatpush1.bf16.xpose.msra.mxu0 0
    %1882 = vmatprep.subr.bf16.mxu0 0
    %1883 = vmatpush1.bf16.xpose.msra.mxu0 0
    %1884 = vmatprep.subr.bf16.mxu0 0
    %1885 = vmatpush1.bf16.xpose.msra.mxu0 0
    %1886 = vmatprep.subr.bf16.mxu0 0
    %1887 = vmatpush1.bf16.xpose.msra.mxu0 0
    %1888 = vmatprep.subr.bf16.mxu0 0
    %1889 = vmatpush1.bf16.xpose.msra.mxu0 0
    %1890 = vmatprep.subr.bf16.mxu0 0
    %1891 = vmatpush1.bf16.xpose.msra.mxu0 0
    %1892 = vmatprep.subr.bf16.mxu0 0
    %1893 = vmatpush1.bf16.xpose.msra.mxu0 0
    %1894 = vmatprep.subr.bf16.mxu0 0
    %1895 = vmatpush1.bf16.xpose.msra.mxu0 0
    %1896 = vmatprep.subr.bf16.mxu0 0
    %1897 = vmatpush1.bf16.xpose.msra.mxu0 0
    %1898 = vmatprep.subr.bf16.mxu0 0
    %1899 = vmatpush1.bf16.xpose.msra.mxu0 0
    %1900 = vmatprep.subr.bf16.mxu0 0
    %1901 = vmatpush1.bf16.xpose.msra.mxu0 0
    %1902 = vmatprep.subr.bf16.mxu0 0
    %1903 = vmatpush1.bf16.xpose.msra.mxu0 0
    %1904 = vmatprep.subr.bf16.mxu0 0
    %1905 = vmatpush1.bf16.xpose.msra.mxu0 0
    %1906 = vmatprep.mubr.bf16.mxu0 0
    %1907 = vmatmul.mubr.bf16.gmra.mrb[0].mxu0 %v1869
    %v1908 = vpop.f32.mrb[0].mxu0
    %v1909 = vadd.f32 %v246, %v1908
    %v1910 = vpop.f32.mrb[0].mxu0
    %v1911 = vpop.f32.mrb[0].mxu0
    %v1912 = vpop.f32.mrb[0].mxu0
    %1913 = vdwg.mxu0
    %1915 = vrot.lane.b32.xlu0 %v1570, 96
    %v1916 = vpop.permute.xlu0 %1915
    %v1918 = vsel %vm256, %v1570, 0
    %v1921 = vsel %vm256, %v1916, 0
    %1923 = vmatprep.subr.bf16.mxu0 0
    %1924 = vmatpush1.bf16.xpose.msra.mxu0 %v1921
    %1925 = vmatprep.subr.bf16.mxu0 0
    %1926 = vmatpush1.bf16.xpose.msra.mxu0 0
    %1927 = vmatprep.subr.bf16.mxu0 0
    %1928 = vmatpush1.bf16.xpose.msra.mxu0 0
    %1929 = vmatprep.subr.bf16.mxu0 0
    %1930 = vmatpush1.bf16.xpose.msra.mxu0 0
    %1931 = vmatprep.subr.bf16.mxu0 0
    %1932 = vmatpush1.bf16.xpose.msra.mxu0 0
    %1933 = vmatprep.subr.bf16.mxu0 0
    %1934 = vmatpush1.bf16.xpose.msra.mxu0 0
    %1935 = vmatprep.subr.bf16.mxu0 0
    %1936 = vmatpush1.bf16.xpose.msra.mxu0 0
    %1937 = vmatprep.subr.bf16.mxu0 0
    %1938 = vmatpush1.bf16.xpose.msra.mxu0 0
    %1939 = vmatprep.subr.bf16.mxu0 0
    %1940 = vmatpush1.bf16.xpose.msra.mxu0 0
    %1941 = vmatprep.subr.bf16.mxu0 0
    %1942 = vmatpush1.bf16.xpose.msra.mxu0 0
    %1943 = vmatprep.subr.bf16.mxu0 0
    %1944 = vmatpush1.bf16.xpose.msra.mxu0 0
    %1945 = vmatprep.subr.bf16.mxu0 0
    %1946 = vmatpush1.bf16.xpose.msra.mxu0 0
    %1947 = vmatprep.subr.bf16.mxu0 0
    %1948 = vmatpush1.bf16.xpose.msra.mxu0 0
    %1949 = vmatprep.subr.bf16.mxu0 0
    %1950 = vmatpush1.bf16.xpose.msra.mxu0 0
    %1951 = vmatprep.subr.bf16.mxu0 0
    %1952 = vmatpush1.bf16.xpose.msra.mxu0 0
    %1953 = vmatprep.subr.bf16.mxu0 0
    %1954 = vmatpush1.bf16.xpose.msra.mxu0 0
    %1955 = vmatprep.mubr.bf16.mxu0 0
    %1956 = vmatmul.mubr.bf16.gmra.mrb[0].mxu0 %v1918
    %v1957 = vpop.f32.mrb[0].mxu0
    %v1958 = vadd.f32 %v250, %v1957
    %v1959 = vpop.f32.mrb[0].mxu0
    %v1960 = vpop.f32.mrb[0].mxu0
    %v1961 = vpop.f32.mrb[0].mxu0
    %1962 = vdwg.mxu0
    %v1963 = vsel %vm256, %v1615, -inf
    %1964 = vmax.xlane.f32.xlu0 %v1963
    %v1965 = vpop.xlane.xlu0 %1964
    %v1966 = vsel %vm256, %v1664, -inf
    %1967 = vmax.xlane.f32.xlu0 %v1966
    %v1968 = vpop.xlane.xlu0 %1967
    %v1969 = vsel %vm256, %v1713, -inf
    %1970 = vmax.xlane.f32.xlu0 %v1969
    %v1971 = vpop.xlane.xlu0 %1970
    %v1972 = vsel %vm256, %v1762, -inf
    %1973 = vmax.xlane.f32.xlu0 %v1972
    %v1974 = vpop.xlane.xlu0 %1973
    %v1975 = vsel %vm256, %v1811, -inf
    %1976 = vmax.xlane.f32.xlu0 %v1975
    %v1977 = vpop.xlane.xlu0 %1976
    %v1978 = vsel %vm256, %v1860, -inf
    %1979 = vmax.xlane.f32.xlu0 %v1978
    %v1980 = vpop.xlane.xlu0 %1979
    %v1981 = vsel %vm256, %v1909, -inf
    %1982 = vmax.xlane.f32.xlu0 %v1981
    %v1983 = vpop.xlane.xlu0 %1982
    %v1984 = vsel %vm256, %v1958, -inf
    %1985 = vmax.xlane.f32.xlu0 %v1984
    %v1986 = vpop.xlane.xlu0 %1985
    %v1987 = vsub.f32 %v1615, %v1965
    %v1988 = vsub.f32 %v1664, %v1968
    %v1989 = vsub.f32 %v1713, %v1971
    %v1990 = vsub.f32 %v1762, %v1974
    %v1991 = vsub.f32 %v1811, %v1977
    %v1992 = vsub.f32 %v1860, %v1980
    %v1993 = vsub.f32 %v1909, %v1983
    %v1994 = vsub.f32 %v1958, %v1986
    %v1995 = vmul.f32 %v1987, 1.442695
    %v1996 = vpow.pop %v1995
    %v1997 = vmul.f32 %v1988, 1.442695
    %v1998 = vpow.pop %v1997
    %v1999 = vmul.f32 %v1989, 1.442695
    %v2000 = vpow.pop %v1999
    %v2001 = vmul.f32 %v1990, 1.442695
    %v2002 = vpow.pop %v2001
    %v2003 = vmul.f32 %v1991, 1.442695
    %v2004 = vpow.pop %v2003
    %v2005 = vmul.f32 %v1992, 1.442695
    %v2006 = vpow.pop %v2005
    %v2007 = vmul.f32 %v1993, 1.442695
    %v2008 = vpow.pop %v2007
    %v2009 = vmul.f32 %v1994, 1.442695
    %v2010 = vpow.pop %v2009
    %v2011 = vsel %vm256, %v1996, 0.0
    %2012 = vadd.xlane.f32.xlu0 %v2011
    %v2013 = vpop.xlane.xlu0 %2012
    %v2014 = vsel %vm256, %v1998, 0.0
    %2015 = vadd.xlane.f32.xlu0 %v2014
    %v2016 = vpop.xlane.xlu0 %2015
    %v2017 = vsel %vm256, %v2000, 0.0
    %2018 = vadd.xlane.f32.xlu0 %v2017
    %v2019 = vpop.xlane.xlu0 %2018
    %v2020 = vsel %vm256, %v2002, 0.0
    %2021 = vadd.xlane.f32.xlu0 %v2020
    %v2022 = vpop.xlane.xlu0 %2021
    %v2023 = vsel %vm256, %v2004, 0.0
    %2024 = vadd.xlane.f32.xlu0 %v2023
    %v2025 = vpop.xlane.xlu0 %2024
    %v2026 = vsel %vm256, %v2006, 0.0
    %2027 = vadd.xlane.f32.xlu0 %v2026
    %v2028 = vpop.xlane.xlu0 %2027
    %v2029 = vsel %vm256, %v2008, 0.0
    %2030 = vadd.xlane.f32.xlu0 %v2029
    %v2031 = vpop.xlane.xlu0 %2030
    %v2032 = vsel %vm256, %v2010, 0.0
    %2033 = vadd.xlane.f32.xlu0 %v2032
    %v2034 = vpop.xlane.xlu0 %2033
    %v2035 = vrcp.pop %v2013
    %v2036 = vrcp.pop %v2016
    %v2037 = vrcp.pop %v2019
    %v2038 = vrcp.pop %v2022
    %v2039 = vrcp.pop %v2025
    %v2040 = vrcp.pop %v2028
    %v2041 = vrcp.pop %v2031
    %v2042 = vrcp.pop %v2034
    %v2043 = vmul.f32 %v1996, %v2035
    %v2044 = vmul.f32 %v1998, %v2036
    %v2045 = vmul.f32 %v2000, %v2037
    %v2046 = vmul.f32 %v2002, %v2038
    %v2047 = vmul.f32 %v2004, %v2039
    %v2048 = vmul.f32 %v2006, %v2040
    %v2049 = vmul.f32 %v2008, %v2041
    %v2050 = vmul.f32 %v2010, %v2042
    %v2051 = vpack.c.bf16 %v2043, %v2043
    %v2052 = vpack.c.bf16 %v2044, %v2044
    %v2053 = vpack.c.bf16 %v2045, %v2045
    %v2054 = vpack.c.bf16 %v2046, %v2046
    %v2055 = vpack.c.bf16 %v2047, %v2047
    %v2056 = vpack.c.bf16 %v2048, %v2048
    %v2057 = vpack.c.bf16 %v2049, %v2049
    %v2058 = vpack.c.bf16 %v2050, %v2050
    %2059 = vrot.lane.b32.xlu0 %v1563, 64
    %v2060 = vpop.permute.xlu0 %2059
    %v2062 = vsel %vm256, %v2051, 0
    %v2065 = vsel %vm747, %v2060, 0
    %2067 = vmatprep.subr.bf16.mxu0 0
    %2068 = vmatpush1.bf16.msra.mxu0 %v2065
    %2069 = vmatprep.subr.bf16.mxu0 0
    %2070 = vmatpush1.bf16.msra.mxu0 0
    %2071 = vmatprep.subr.bf16.mxu0 0
    %2072 = vmatpush1.bf16.msra.mxu0 0
    %2073 = vmatprep.subr.bf16.mxu0 0
    %2074 = vmatpush1.bf16.msra.mxu0 0
    %2075 = vmatprep.subr.bf16.mxu0 0
    %2076 = vmatpush1.bf16.msra.mxu0 0
    %2077 = vmatprep.subr.bf16.mxu0 0
    %2078 = vmatpush1.bf16.msra.mxu0 0
    %2079 = vmatprep.subr.bf16.mxu0 0
    %2080 = vmatpush1.bf16.msra.mxu0 0
    %2081 = vmatprep.subr.bf16.mxu0 0
    %2082 = vmatpush1.bf16.msra.mxu0 0
    %2083 = vmatprep.subr.bf16.mxu0 0
    %2084 = vmatpush1.bf16.msra.mxu0 0
    %2085 = vmatprep.subr.bf16.mxu0 0
    %2086 = vmatpush1.bf16.msra.mxu0 0
    %2087 = vmatprep.subr.bf16.mxu0 0
    %2088 = vmatpush1.bf16.msra.mxu0 0
    %2089 = vmatprep.subr.bf16.mxu0 0
    %2090 = vmatpush1.bf16.msra.mxu0 0
    %2091 = vmatprep.subr.bf16.mxu0 0
    %2092 = vmatpush1.bf16.msra.mxu0 0
    %2093 = vmatprep.subr.bf16.mxu0 0
    %2094 = vmatpush1.bf16.msra.mxu0 0
    %2095 = vmatprep.subr.bf16.mxu0 0
    %2096 = vmatpush1.bf16.msra.mxu0 0
    %2097 = vmatprep.subr.bf16.mxu0 0
    %2098 = vmatpush1.bf16.msra.mxu0 0
    %2099 = vmatprep.mubr.bf16.mxu0 0
    %2100 = vmatmul.mubr.bf16.gmra.mrb[0].mxu0 %v2062
    %v2101 = vpop.f32.mrb[0].mxu0
    %v2102 = vadd.f32 0.0, %v2101
    %v2103 = vpop.f32.mrb[0].mxu0
    %v2104 = vpop.f32.mrb[0].mxu0
    %v2105 = vpop.f32.mrb[0].mxu0
    %2106 = vdwg.mxu0
    %2107 = vrot.lane.b32.xlu0 %v1564, 64
    %v2108 = vpop.permute.xlu0 %2107
    %v2110 = vsel %vm256, %v2052, 0
    %v2113 = vsel %vm747, %v2108, 0
    %2115 = vmatprep.subr.bf16.mxu0 0
    %2116 = vmatpush1.bf16.msra.mxu0 %v2113
    %2117 = vmatprep.subr.bf16.mxu0 0
    %2118 = vmatpush1.bf16.msra.mxu0 0
    %2119 = vmatprep.subr.bf16.mxu0 0
    %2120 = vmatpush1.bf16.msra.mxu0 0
    %2121 = vmatprep.subr.bf16.mxu0 0
    %2122 = vmatpush1.bf16.msra.mxu0 0
    %2123 = vmatprep.subr.bf16.mxu0 0
    %2124 = vmatpush1.bf16.msra.mxu0 0
    %2125 = vmatprep.subr.bf16.mxu0 0
    %2126 = vmatpush1.bf16.msra.mxu0 0
    %2127 = vmatprep.subr.bf16.mxu0 0
    %2128 = vmatpush1.bf16.msra.mxu0 0
    %2129 = vmatprep.subr.bf16.mxu0 0
    %2130 = vmatpush1.bf16.msra.mxu0 0
    %2131 = vmatprep.subr.bf16.mxu0 0
    %2132 = vmatpush1.bf16.msra.mxu0 0
    %2133 = vmatprep.subr.bf16.mxu0 0
    %2134 = vmatpush1.bf16.msra.mxu0 0
    %2135 = vmatprep.subr.bf16.mxu0 0
    %2136 = vmatpush1.bf16.msra.mxu0 0
    %2137 = vmatprep.subr.bf16.mxu0 0
    %2138 = vmatpush1.bf16.msra.mxu0 0
    %2139 = vmatprep.subr.bf16.mxu0 0
    %2140 = vmatpush1.bf16.msra.mxu0 0
    %2141 = vmatprep.subr.bf16.mxu0 0
    %2142 = vmatpush1.bf16.msra.mxu0 0
    %2143 = vmatprep.subr.bf16.mxu0 0
    %2144 = vmatpush1.bf16.msra.mxu0 0
    %2145 = vmatprep.subr.bf16.mxu0 0
    %2146 = vmatpush1.bf16.msra.mxu0 0
    %2147 = vmatprep.mubr.bf16.mxu0 0
    %2148 = vmatmul.mubr.bf16.gmra.mrb[0].mxu0 %v2110
    %v2149 = vpop.f32.mrb[0].mxu0
    %v2150 = vadd.f32 0.0, %v2149
    %v2151 = vpop.f32.mrb[0].mxu0
    %v2152 = vpop.f32.mrb[0].mxu0
    %v2153 = vpop.f32.mrb[0].mxu0
    %2154 = vdwg.mxu0
    %2155 = vrot.lane.b32.xlu0 %v1565, 64
    %v2156 = vpop.permute.xlu0 %2155
    %v2158 = vsel %vm256, %v2053, 0
    %v2161 = vsel %vm747, %v2156, 0
    %2163 = vmatprep.subr.bf16.mxu0 0
    %2164 = vmatpush1.bf16.msra.mxu0 %v2161
    %2165 = vmatprep.subr.bf16.mxu0 0
    %2166 = vmatpush1.bf16.msra.mxu0 0
    %2167 = vmatprep.subr.bf16.mxu0 0
    %2168 = vmatpush1.bf16.msra.mxu0 0
    %2169 = vmatprep.subr.bf16.mxu0 0
    %2170 = vmatpush1.bf16.msra.mxu0 0
    %2171 = vmatprep.subr.bf16.mxu0 0
    %2172 = vmatpush1.bf16.msra.mxu0 0
    %2173 = vmatprep.subr.bf16.mxu0 0
    %2174 = vmatpush1.bf16.msra.mxu0 0
    %2175 = vmatprep.subr.bf16.mxu0 0
    %2176 = vmatpush1.bf16.msra.mxu0 0
    %2177 = vmatprep.subr.bf16.mxu0 0
    %2178 = vmatpush1.bf16.msra.mxu0 0
    %2179 = vmatprep.subr.bf16.mxu0 0
    %2180 = vmatpush1.bf16.msra.mxu0 0
    %2181 = vmatprep.subr.bf16.mxu0 0
    %2182 = vmatpush1.bf16.msra.mxu0 0
    %2183 = vmatprep.subr.bf16.mxu0 0
    %2184 = vmatpush1.bf16.msra.mxu0 0
    %2185 = vmatprep.subr.bf16.mxu0 0
    %2186 = vmatpush1.bf16.msra.mxu0 0
    %2187 = vmatprep.subr.bf16.mxu0 0
    %2188 = vmatpush1.bf16.msra.mxu0 0
    %2189 = vmatprep.subr.bf16.mxu0 0
    %2190 = vmatpush1.bf16.msra.mxu0 0
    %2191 = vmatprep.subr.bf16.mxu0 0
    %2192 = vmatpush1.bf16.msra.mxu0 0
    %2193 = vmatprep.subr.bf16.mxu0 0
    %2194 = vmatpush1.bf16.msra.mxu0 0
    %2195 = vmatprep.mubr.bf16.mxu0 0
    %2196 = vmatmul.mubr.bf16.gmra.mrb[0].mxu0 %v2158
    %v2197 = vpop.f32.mrb[0].mxu0
    %v2198 = vadd.f32 0.0, %v2197
    %v2199 = vpop.f32.mrb[0].mxu0
    %v2200 = vpop.f32.mrb[0].mxu0
    %v2201 = vpop.f32.mrb[0].mxu0
    %2202 = vdwg.mxu0
    %2203 = vrot.lane.b32.xlu0 %v1566, 64
    %v2204 = vpop.permute.xlu0 %2203
    %v2206 = vsel %vm256, %v2054, 0
    %v2209 = vsel %vm747, %v2204, 0
    %2211 = vmatprep.subr.bf16.mxu0 0
    %2212 = vmatpush1.bf16.msra.mxu0 %v2209
    %2213 = vmatprep.subr.bf16.mxu0 0
    %2214 = vmatpush1.bf16.msra.mxu0 0
    %2215 = vmatprep.subr.bf16.mxu0 0
    %2216 = vmatpush1.bf16.msra.mxu0 0
    %2217 = vmatprep.subr.bf16.mxu0 0
    %2218 = vmatpush1.bf16.msra.mxu0 0
    %2219 = vmatprep.subr.bf16.mxu0 0
    %2220 = vmatpush1.bf16.msra.mxu0 0
    %2221 = vmatprep.subr.bf16.mxu0 0
    %2222 = vmatpush1.bf16.msra.mxu0 0
    %2223 = vmatprep.subr.bf16.mxu0 0
    %2224 = vmatpush1.bf16.msra.mxu0 0
    %2225 = vmatprep.subr.bf16.mxu0 0
    %2226 = vmatpush1.bf16.msra.mxu0 0
    %2227 = vmatprep.subr.bf16.mxu0 0
    %2228 = vmatpush1.bf16.msra.mxu0 0
    %2229 = vmatprep.subr.bf16.mxu0 0
    %2230 = vmatpush1.bf16.msra.mxu0 0
    %2231 = vmatprep.subr.bf16.mxu0 0
    %2232 = vmatpush1.bf16.msra.mxu0 0
    %2233 = vmatprep.subr.bf16.mxu0 0
    %2234 = vmatpush1.bf16.msra.mxu0 0
    %2235 = vmatprep.subr.bf16.mxu0 0
    %2236 = vmatpush1.bf16.msra.mxu0 0
    %2237 = vmatprep.subr.bf16.mxu0 0
    %2238 = vmatpush1.bf16.msra.mxu0 0
    %2239 = vmatprep.subr.bf16.mxu0 0
    %2240 = vmatpush1.bf16.msra.mxu0 0
    %2241 = vmatprep.subr.bf16.mxu0 0
    %2242 = vmatpush1.bf16.msra.mxu0 0
    %2243 = vmatprep.mubr.bf16.mxu0 0
    %2244 = vmatmul.mubr.bf16.gmra.mrb[0].mxu0 %v2206
    %v2245 = vpop.f32.mrb[0].mxu0
    %v2246 = vadd.f32 0.0, %v2245
    %v2247 = vpop.f32.mrb[0].mxu0
    %v2248 = vpop.f32.mrb[0].mxu0
    %v2249 = vpop.f32.mrb[0].mxu0
    %2250 = vdwg.mxu0
    %2251 = vrot.lane.b32.xlu0 %v1567, 64
    %v2252 = vpop.permute.xlu0 %2251
    %v2254 = vsel %vm256, %v2055, 0
    %v2257 = vsel %vm747, %v2252, 0
    %2259 = vmatprep.subr.bf16.mxu0 0
    %2260 = vmatpush1.bf16.msra.mxu0 %v2257
    %2261 = vmatprep.subr.bf16.mxu0 0
    %2262 = vmatpush1.bf16.msra.mxu0 0
    %2263 = vmatprep.subr.bf16.mxu0 0
    %2264 = vmatpush1.bf16.msra.mxu0 0
    %2265 = vmatprep.subr.bf16.mxu0 0
    %2266 = vmatpush1.bf16.msra.mxu0 0
    %2267 = vmatprep.subr.bf16.mxu0 0
    %2268 = vmatpush1.bf16.msra.mxu0 0
    %2269 = vmatprep.subr.bf16.mxu0 0
    %2270 = vmatpush1.bf16.msra.mxu0 0
    %2271 = vmatprep.subr.bf16.mxu0 0
    %2272 = vmatpush1.bf16.msra.mxu0 0
    %2273 = vmatprep.subr.bf16.mxu0 0
    %2274 = vmatpush1.bf16.msra.mxu0 0
    %2275 = vmatprep.subr.bf16.mxu0 0
    %2276 = vmatpush1.bf16.msra.mxu0 0
    %2277 = vmatprep.subr.bf16.mxu0 0
    %2278 = vmatpush1.bf16.msra.mxu0 0
    %2279 = vmatprep.subr.bf16.mxu0 0
    %2280 = vmatpush1.bf16.msra.mxu0 0
    %2281 = vmatprep.subr.bf16.mxu0 0
    %2282 = vmatpush1.bf16.msra.mxu0 0
    %2283 = vmatprep.subr.bf16.mxu0 0
    %2284 = vmatpush1.bf16.msra.mxu0 0
    %2285 = vmatprep.subr.bf16.mxu0 0
    %2286 = vmatpush1.bf16.msra.mxu0 0
    %2287 = vmatprep.subr.bf16.mxu0 0
    %2288 = vmatpush1.bf16.msra.mxu0 0
    %2289 = vmatprep.subr.bf16.mxu0 0
    %2290 = vmatpush1.bf16.msra.mxu0 0
    %2291 = vmatprep.mubr.bf16.mxu0 0
    %2292 = vmatmul.mubr.bf16.gmra.mrb[0].mxu0 %v2254
    %v2293 = vpop.f32.mrb[0].mxu0
    %v2294 = vadd.f32 0.0, %v2293
    %v2295 = vpop.f32.mrb[0].mxu0
    %v2296 = vpop.f32.mrb[0].mxu0
    %v2297 = vpop.f32.mrb[0].mxu0
    %2298 = vdwg.mxu0
    %2299 = vrot.lane.b32.xlu0 %v1568, 64
    %v2300 = vpop.permute.xlu0 %2299
    %v2302 = vsel %vm256, %v2056, 0
    %v2305 = vsel %vm747, %v2300, 0
    %2307 = vmatprep.subr.bf16.mxu0 0
    %2308 = vmatpush1.bf16.msra.mxu0 %v2305
    %2309 = vmatprep.subr.bf16.mxu0 0
    %2310 = vmatpush1.bf16.msra.mxu0 0
    %2311 = vmatprep.subr.bf16.mxu0 0
    %2312 = vmatpush1.bf16.msra.mxu0 0
    %2313 = vmatprep.subr.bf16.mxu0 0
    %2314 = vmatpush1.bf16.msra.mxu0 0
    %2315 = vmatprep.subr.bf16.mxu0 0
    %2316 = vmatpush1.bf16.msra.mxu0 0
    %2317 = vmatprep.subr.bf16.mxu0 0
    %2318 = vmatpush1.bf16.msra.mxu0 0
    %2319 = vmatprep.subr.bf16.mxu0 0
    %2320 = vmatpush1.bf16.msra.mxu0 0
    %2321 = vmatprep.subr.bf16.mxu0 0
    %2322 = vmatpush1.bf16.msra.mxu0 0
    %2323 = vmatprep.subr.bf16.mxu0 0
    %2324 = vmatpush1.bf16.msra.mxu0 0
    %2325 = vmatprep.subr.bf16.mxu0 0
    %2326 = vmatpush1.bf16.msra.mxu0 0
    %2327 = vmatprep.subr.bf16.mxu0 0
    %2328 = vmatpush1.bf16.msra.mxu0 0
    %2329 = vmatprep.subr.bf16.mxu0 0
    %2330 = vmatpush1.bf16.msra.mxu0 0
    %2331 = vmatprep.subr.bf16.mxu0 0
    %2332 = vmatpush1.bf16.msra.mxu0 0
    %2333 = vmatprep.subr.bf16.mxu0 0
    %2334 = vmatpush1.bf16.msra.mxu0 0
    %2335 = vmatprep.subr.bf16.mxu0 0
    %2336 = vmatpush1.bf16.msra.mxu0 0
    %2337 = vmatprep.subr.bf16.mxu0 0
    %2338 = vmatpush1.bf16.msra.mxu0 0
    %2339 = vmatprep.mubr.bf16.mxu0 0
    %2340 = vmatmul.mubr.bf16.gmra.mrb[0].mxu0 %v2302
    %v2341 = vpop.f32.mrb[0].mxu0
    %v2342 = vadd.f32 0.0, %v2341
    %v2343 = vpop.f32.mrb[0].mxu0
    %v2344 = vpop.f32.mrb[0].mxu0
    %v2345 = vpop.f32.mrb[0].mxu0
    %2346 = vdwg.mxu0
    %2347 = vrot.lane.b32.xlu0 %v1569, 64
    %v2348 = vpop.permute.xlu0 %2347
    %v2350 = vsel %vm256, %v2057, 0
    %v2353 = vsel %vm747, %v2348, 0
    %2355 = vmatprep.subr.bf16.mxu0 0
    %2356 = vmatpush1.bf16.msra.mxu0 %v2353
    %2357 = vmatprep.subr.bf16.mxu0 0
    %2358 = vmatpush1.bf16.msra.mxu0 0
    %2359 = vmatprep.subr.bf16.mxu0 0
    %2360 = vmatpush1.bf16.msra.mxu0 0
    %2361 = vmatprep.subr.bf16.mxu0 0
    %2362 = vmatpush1.bf16.msra.mxu0 0
    %2363 = vmatprep.subr.bf16.mxu0 0
    %2364 = vmatpush1.bf16.msra.mxu0 0
    %2365 = vmatprep.subr.bf16.mxu0 0
    %2366 = vmatpush1.bf16.msra.mxu0 0
    %2367 = vmatprep.subr.bf16.mxu0 0
    %2368 = vmatpush1.bf16.msra.mxu0 0
    %2369 = vmatprep.subr.bf16.mxu0 0
    %2370 = vmatpush1.bf16.msra.mxu0 0
    %2371 = vmatprep.subr.bf16.mxu0 0
    %2372 = vmatpush1.bf16.msra.mxu0 0
    %2373 = vmatprep.subr.bf16.mxu0 0
    %2374 = vmatpush1.bf16.msra.mxu0 0
    %2375 = vmatprep.subr.bf16.mxu0 0
    %2376 = vmatpush1.bf16.msra.mxu0 0
    %2377 = vmatprep.subr.bf16.mxu0 0
    %2378 = vmatpush1.bf16.msra.mxu0 0
    %2379 = vmatprep.subr.bf16.mxu0 0
    %2380 = vmatpush1.bf16.msra.mxu0 0
    %2381 = vmatprep.subr.bf16.mxu0 0
    %2382 = vmatpush1.bf16.msra.mxu0 0
    %2383 = vmatprep.subr.bf16.mxu0 0
    %2384 = vmatpush1.bf16.msra.mxu0 0
    %2385 = vmatprep.subr.bf16.mxu0 0
    %2386 = vmatpush1.bf16.msra.mxu0 0
    %2387 = vmatprep.mubr.bf16.mxu0 0
    %2388 = vmatmul.mubr.bf16.gmra.mrb[0].mxu0 %v2350
    %v2389 = vpop.f32.mrb[0].mxu0
    %v2390 = vadd.f32 0.0, %v2389
    %v2391 = vpop.f32.mrb[0].mxu0
    %v2392 = vpop.f32.mrb[0].mxu0
    %v2393 = vpop.f32.mrb[0].mxu0
    %2394 = vdwg.mxu0
    %2395 = vrot.lane.b32.xlu0 %v1570, 64
    %v2396 = vpop.permute.xlu0 %2395
    %v2398 = vsel %vm256, %v2058, 0
    %v2401 = vsel %vm747, %v2396, 0
    %2403 = vmatprep.subr.bf16.mxu0 0
    %2404 = vmatpush1.bf16.msra.mxu0 %v2401
    %2405 = vmatprep.subr.bf16.mxu0 0
    %2406 = vmatpush1.bf16.msra.mxu0 0
    %2407 = vmatprep.subr.bf16.mxu0 0
    %2408 = vmatpush1.bf16.msra.mxu0 0
    %2409 = vmatprep.subr.bf16.mxu0 0
    %2410 = vmatpush1.bf16.msra.mxu0 0
    %2411 = vmatprep.subr.bf16.mxu0 0
    %2412 = vmatpush1.bf16.msra.mxu0 0
    %2413 = vmatprep.subr.bf16.mxu0 0
    %2414 = vmatpush1.bf16.msra.mxu0 0
    %2415 = vmatprep.subr.bf16.mxu0 0
    %2416 = vmatpush1.bf16.msra.mxu0 0
    %2417 = vmatprep.subr.bf16.mxu0 0
    %2418 = vmatpush1.bf16.msra.mxu0 0
    %2419 = vmatprep.subr.bf16.mxu0 0
    %2420 = vmatpush1.bf16.msra.mxu0 0
    %2421 = vmatprep.subr.bf16.mxu0 0
    %2422 = vmatpush1.bf16.msra.mxu0 0
    %2423 = vmatprep.subr.bf16.mxu0 0
    %2424 = vmatpush1.bf16.msra.mxu0 0
    %2425 = vmatprep.subr.bf16.mxu0 0
    %2426 = vmatpush1.bf16.msra.mxu0 0
    %2427 = vmatprep.subr.bf16.mxu0 0
    %2428 = vmatpush1.bf16.msra.mxu0 0
    %2429 = vmatprep.subr.bf16.mxu0 0
    %2430 = vmatpush1.bf16.msra.mxu0 0
    %2431 = vmatprep.subr.bf16.mxu0 0
    %2432 = vmatpush1.bf16.msra.mxu0 0
    %2433 = vmatprep.subr.bf16.mxu0 0
    %2434 = vmatpush1.bf16.msra.mxu0 0
    %2435 = vmatprep.mubr.bf16.mxu0 0
    %2436 = vmatmul.mubr.bf16.gmra.mrb[0].mxu0 %v2398
    %v2437 = vpop.f32.mrb[0].mxu0
    %v2438 = vadd.f32 0.0, %v2437
    %v2439 = vpop.f32.mrb[0].mxu0
    %v2440 = vpop.f32.mrb[0].mxu0
    %v2441 = vpop.f32.mrb[0].mxu0
    %2442 = vdwg.mxu0
    %2445 = vrot.lane.b32.xlu0 %v2198, 8
    %v2446 = vpop.permute.xlu0 %2445
    %2447 = vrot.lane.b32.xlu0 %v2246, 8
    %v2448 = vpop.permute.xlu0 %2447
    %2453 = vrot.lane.b32.xlu0 %v2294, 16
    %v2454 = vpop.permute.xlu0 %2453
    %2455 = vrot.lane.b32.xlu0 %v2342, 16
    %v2456 = vpop.permute.xlu0 %2455
    %2461 = vrot.lane.b32.xlu0 %v2390, 24
    %v2462 = vpop.permute.xlu0 %2461
    %2463 = vrot.lane.b32.xlu0 %v2438, 24
    %v2464 = vpop.permute.xlu0 %2463
    %v2467 = vsel %vm256, %v2102, %v2446
    %v2468 = vsel %vm256, %v2150, %v2448
    %v2469 = vsel %vm1153, %v2467, %v2454
    %v2470 = vsel %vm1153, %v2468, %v2456
    %v2471 = vsel %vm1156, %v2469, %v2462
    %v2472 = vsel %vm1156, %v2470, %v2464
    %v2473 = vpack.c.bf16 %v2472, %v2471
    %v2474 = vlaneseq
    %v2475 = vshrl.u32 %v2474, 7
    %v2476 = vsub.s32 0, %v2475
    %v2477 = vrot.slane %v1437, %v2476
    %v2482 = vunpack.c.l.b16 %v1420
    %v2483 = vunpack.c.l.b16 %v1421
    %v2484 = vunpack.c.l.b16 %v1422
    %v2485 = vunpack.c.l.b16 %v1423
    %v2486 = vpack.c.b16 %v2483, %v2482
    %v2487 = vpack.c.b16 %v2485, %v2484
    %v2491 = vsel %vm114, %v2473, 0
    %2493 = vmatprep.subr.bf16.mxu0 0
    %2494 = vmatpush1.bf16.msra.mxu0 %v2486
    %2495 = vmatprep.subr.bf16.mxu0 0
    %2496 = vmatpush1.bf16.msra.mxu0 %v2487
    %2497 = vmatprep.subr.bf16.mxu0 0
    %2498 = vmatpush1.bf16.msra.mxu0 0
    %2499 = vmatprep.subr.bf16.mxu0 0
    %2500 = vmatpush1.bf16.msra.mxu0 0
    %2501 = vmatprep.subr.bf16.mxu0 0
    %2502 = vmatpush1.bf16.msra.mxu0 0
    %2503 = vmatprep.subr.bf16.mxu0 0
    %2504 = vmatpush1.bf16.msra.mxu0 0
    %2505 = vmatprep.subr.bf16.mxu0 0
    %2506 = vmatpush1.bf16.msra.mxu0 0
    %2507 = vmatprep.subr.bf16.mxu0 0
    %2508 = vmatpush1.bf16.msra.mxu0 0
    %2509 = vmatprep.subr.bf16.mxu0 0
    %2510 = vmatpush1.bf16.msra.mxu0 0
    %2511 = vmatprep.subr.bf16.mxu0 0
    %2512 = vmatpush1.bf16.msra.mxu0 0
    %2513 = vmatprep.subr.bf16.mxu0 0
    %2514 = vmatpush1.bf16.msra.mxu0 0
    %2515 = vmatprep.subr.bf16.mxu0 0
    %2516 = vmatpush1.bf16.msra.mxu0 0
    %2517 = vmatprep.subr.bf16.mxu0 0
    %2518 = vmatpush1.bf16.msra.mxu0 0
    %2519 = vmatprep.subr.bf16.mxu0 0
    %2520 = vmatpush1.bf16.msra.mxu0 0
    %2521 = vmatprep.subr.bf16.mxu0 0
    %2522 = vmatpush1.bf16.msra.mxu0 0
    %2523 = vmatprep.subr.bf16.mxu0 0
    %2524 = vmatpush1.bf16.msra.mxu0 0
    %2525 = vmatprep.mubr.bf16.mxu0 0
    %2526 = vmatmul.mubr.bf16.gmra.mrb[0].mxu0 %v2491
    %v2527 = vpop.f32.mrb[0].mxu0
    %v2528 = vadd.f32 %v2477, %v2527
    %v2529 = vpop.f32.mrb[0].mxu0
    %v2530 = vpop.f32.mrb[0].mxu0
    %v2531 = vadd.f32 %v2477, %v2530
    %v2532 = vpop.f32.mrb[0].mxu0
    %2533 = vdwg.mxu0
    %v2534 = vadd.f32 %v1413, %v2528
    %v2535 = vadd.f32 %v1414, %v2531
    %v2536 = vpack.c.bf16 %v2535, %v2534
    %v2537 = vlaneseq
    %v2538 = vshrl.u32 %v2537, 7
    %v2539 = vsub.s32 0, %v2538
    %v2540 = vrot.slane %v1442, %v2539
    %v2545 = vunpack.c.l.b16 %v1424
    %v2546 = vunpack.c.l.b16 %v1425
    %v2547 = vunpack.c.l.b16 %v1426
    %v2548 = vunpack.c.l.b16 %v1427
    %v2549 = vpack.c.b16 %v2546, %v2545
    %v2550 = vpack.c.b16 %v2548, %v2547
    %v2554 = vsel %vm114, %v2536, 0
    %2556 = vmatprep.subr.bf16.mxu0 0
    %2557 = vmatpush1.bf16.msra.mxu0 %v2549
    %2558 = vmatprep.subr.bf16.mxu0 0
    %2559 = vmatpush1.bf16.msra.mxu0 %v2550
    %2560 = vmatprep.subr.bf16.mxu0 0
    %2561 = vmatpush1.bf16.msra.mxu0 0
    %2562 = vmatprep.subr.bf16.mxu0 0
    %2563 = vmatpush1.bf16.msra.mxu0 0
    %2564 = vmatprep.subr.bf16.mxu0 0
    %2565 = vmatpush1.bf16.msra.mxu0 0
    %2566 = vmatprep.subr.bf16.mxu0 0
    %2567 = vmatpush1.bf16.msra.mxu0 0
    %2568 = vmatprep.subr.bf16.mxu0 0
    %2569 = vmatpush1.bf16.msra.mxu0 0
    %2570 = vmatprep.subr.bf16.mxu0 0
    %2571 = vmatpush1.bf16.msra.mxu0 0
    %2572 = vmatprep.subr.bf16.mxu0 0
    %2573 = vmatpush1.bf16.msra.mxu0 0
    %2574 = vmatprep.subr.bf16.mxu0 0
    %2575 = vmatpush1.bf16.msra.mxu0 0
    %2576 = vmatprep.subr.bf16.mxu0 0
    %2577 = vmatpush1.bf16.msra.mxu0 0
    %2578 = vmatprep.subr.bf16.mxu0 0
    %2579 = vmatpush1.bf16.msra.mxu0 0
    %2580 = vmatprep.subr.bf16.mxu0 0
    %2581 = vmatpush1.bf16.msra.mxu0 0
    %2582 = vmatprep.subr.bf16.mxu0 0
    %2583 = vmatpush1.bf16.msra.mxu0 0
    %2584 = vmatprep.subr.bf16.mxu0 0
    %2585 = vmatpush1.bf16.msra.mxu0 0
    %2586 = vmatprep.subr.bf16.mxu0 0
    %2587 = vmatpush1.bf16.msra.mxu0 0
    %2588 = vmatprep.mubr.bf16.mxu0 0
    %2589 = vmatmul.mubr.bf16.gmra.mrb[0].mxu0 %v2554
    %v2590 = vpop.f32.mrb[0].mxu0
    %v2591 = vadd.f32 %v2540, %v2590
    %v2592 = vpop.f32.mrb[0].mxu0
    %v2593 = vpop.f32.mrb[0].mxu0
    %v2594 = vadd.f32 %v2540, %v2593
    %v2595 = vpop.f32.mrb[0].mxu0
    %2596 = vdwg.mxu0
    %v2597 = vmul.f32 %v2591, 0.5
    %v2598 = vmul.f32 %v2594, 0.5
    %v2599 = vmul.f32 %v2591, 0.044715
    %v2600 = vmul.f32 %v2594, 0.044715
    %v2601 = vmul.f32 %v2599, %v2591
    %v2602 = vmul.f32 %v2600, %v2594
    %v2603 = vmul.f32 %v2601, %v2591
    %v2604 = vmul.f32 %v2602, %v2594
    %v2605 = vadd.f32 %v2591, %v2603
    %v2606 = vadd.f32 %v2594, %v2604
    %v2607 = vmul.f32 %v2605, 0.7978846
    %v2608 = vmul.f32 %v2606, 0.7978846
    %v2609 = vtanh.pop %v2607
    %v2610 = vtanh.pop %v2608
    %v2611 = vadd.f32 %v2609, 1.0
    %v2612 = vadd.f32 %v2610, 1.0
    %v2613 = vmul.f32 %v2597, %v2611
    %v2614 = vmul.f32 %v2598, %v2612
    %v2615 = vpack.c.bf16 %v2614, %v2613
    %v2616 = vlaneseq
    %v2617 = vshrl.u32 %v2616, 7
    %v2618 = vsub.s32 0, %v2617
    %v2619 = vrot.slane %v1443, %v2618
    %v2628 = vunpack.c.l.b16 %v1428
    %v2629 = vunpack.c.l.b16 %v1429
    %v2630 = vunpack.c.l.b16 %v1430
    %v2631 = vunpack.c.l.b16 %v1431
    %v2632 = vunpack.c.l.b16 %v1432
    %v2633 = vunpack.c.l.b16 %v1433
    %v2634 = vunpack.c.l.b16 %v1434
    %v2635 = vunpack.c.l.b16 %v1435
    %v2636 = vpack.c.b16 %v2629, %v2628
    %v2637 = vpack.c.b16 %v2631, %v2630
    %v2638 = vpack.c.b16 %v2633, %v2632
    %v2639 = vpack.c.b16 %v2635, %v2634
    %v2645 = vsel %vm1330, %v2615, 0
    %2647 = vmatprep.subr.bf16.mxu0 0
    %2648 = vmatpush1.bf16.msra.mxu0 %v2636
    %2649 = vmatprep.subr.bf16.mxu0 0
    %2650 = vmatpush1.bf16.msra.mxu0 %v2637
    %2651 = vmatprep.subr.bf16.mxu0 0
    %2652 = vmatpush1.bf16.msra.mxu0 %v2638
    %2653 = vmatprep.subr.bf16.mxu0 0
    %2654 = vmatpush1.bf16.msra.mxu0 %v2639
    %2655 = vmatprep.subr.bf16.mxu0 0
    %2656 = vmatpush1.bf16.msra.mxu0 0
    %2657 = vmatprep.subr.bf16.mxu0 0
    %2658 = vmatpush1.bf16.msra.mxu0 0
    %2659 = vmatprep.subr.bf16.mxu0 0
    %2660 = vmatpush1.bf16.msra.mxu0 0
    %2661 = vmatprep.subr.bf16.mxu0 0
    %2662 = vmatpush1.bf16.msra.mxu0 0
    %2663 = vmatprep.subr.bf16.mxu0 0
    %2664 = vmatpush1.bf16.msra.mxu0 0
    %2665 = vmatprep.subr.bf16.mxu0 0
    %2666 = vmatpush1.bf16.msra.mxu0 0
    %2667 = vmatprep.subr.bf16.mxu0 0
    %2668 = vmatpush1.bf16.msra.mxu0 0
    %2669 = vmatprep.subr.bf16.mxu0 0
    %2670 = vmatpush1.bf16.msra.mxu0 0
    %2671 = vmatprep.subr.bf16.mxu0 0
    %2672 = vmatpush1.bf16.msra.mxu0 0
    %2673 = vmatprep.subr.bf16.mxu0 0
    %2674 = vmatpush1.bf16.msra.mxu0 0
    %2675 = vmatprep.subr.bf16.mxu0 0
    %2676 = vmatpush1.bf16.msra.mxu0 0
    %2677 = vmatprep.subr.bf16.mxu0 0
    %2678 = vmatpush1.bf16.msra.mxu0 0
    %2679 = vmatprep.mubr.bf16.mxu0 0
    %2680 = vmatmul.mubr.bf16.gmra.mrb[0].mxu0 %v2645
    %v2681 = vpop.f32.mrb[0].mxu0
    %v2682 = vadd.f32 %v2619, %v2681
    %v2683 = vpop.f32.mrb[0].mxu0
    %v2684 = vpop.f32.mrb[0].mxu0
    %v2685 = vadd.f32 %v2619, %v2684
    %v2686 = vpop.f32.mrb[0].mxu0
    %2687 = vdwg.mxu0
    %v2688 = vsel %vm114, %v2682, 0.0
    %2689 = vadd.xlane.f32.xlu0 %v2688
    %v2690 = vpop.xlane.xlu0 %2689
    %v2691 = vsel %vm114, %v2685, 0.0
    %2692 = vadd.xlane.f32.xlu0 %v2691
    %v2693 = vpop.xlane.xlu0 %2692
    %v2694 = vmul.f32 %v2690, %v121
    %v2695 = vmul.f32 %v2693, %v121
    %v2696 = vsub.f32 %v2682, %v2694
    %v2697 = vsub.f32 %v2685, %v2695
    %v2698 = vmul.f32 %v2696, %v2696
    %v2699 = vmul.f32 %v2697, %v2697
    %v2700 = vsel %vm114, %v2698, 0.0
    %2701 = vadd.xlane.f32.xlu0 %v2700
    %v2702 = vpop.xlane.xlu0 %2701
    %v2703 = vsel %vm114, %v2699, 0.0
    %2704 = vadd.xlane.f32.xlu0 %v2703
    %v2705 = vpop.xlane.xlu0 %2704
    %v2706 = vmul.f32 %v2702, %v121
    %v2707 = vmul.f32 %v2705, %v121
    %v2708 = vadd.f32 %v2706, 1e-05
    %v2709 = vadd.f32 %v2707, 1e-05
    %v2710 = vrsqrt.pop %v2708
    %v2711 = vrsqrt.pop %v2709
    %v2712 = vmul.f32 %v2696, %v2710
    %v2713 = vmul.f32 %v2697, %v2711
    %v2714 = vlaneseq
    %v2715 = vshrl.u32 %v2714, 7
    %v2716 = vsub.s32 0, %v2715
    %v2717 = vrot.slane %v1440, %v2716
    %v2718 = vmul.f32 %v2712, %v2717
    %v2719 = vmul.f32 %v2713, %v2717
    %v2720 = vlaneseq
    %v2721 = vshrl.u32 %v2720, 7
    %v2722 = vsub.s32 0, %v2721
    %v2723 = vrot.slane %v1441, %v2722
    %v2724 = vadd.f32 %v2718, %v2723
    %v2725 = vadd.f32 %v2719, %v2723
    %v2726 = vadd.f32 %v2534, %v2724
    %v2727 = vadd.f32 %v2535, %v2725
    %v2728 = vld [vmem:[#allocation7 + $0x10] sm:$0x1]
    %v2729 = vld [vmem:[#allocation7 + $0x11] sm:$0x1]
    %v2730 = vsel %vm114, %v2726, 0.0
    %2731 = vadd.xlane.f32.xlu0 %v2730
    %v2732 = vpop.xlane.xlu0 %2731
    %v2733 = vsel %vm114, %v2727, 0.0
    %2734 = vadd.xlane.f32.xlu0 %v2733
    %v2735 = vpop.xlane.xlu0 %2734
    %v2736 = vmul.f32 %v2732, %v121
    %v2737 = vmul.f32 %v2735, %v121
    %v2738 = vsub.f32 %v2726, %v2736
    %v2739 = vsub.f32 %v2727, %v2737
    %v2740 = vmul.f32 %v2738, %v2738
    %v2741 = vmul.f32 %v2739, %v2739
    %v2742 = vsel %vm114, %v2740, 0.0
    %2743 = vadd.xlane.f32.xlu0 %v2742
    %v2744 = vpop.xlane.xlu0 %2743
    %v2745 = vsel %vm114, %v2741, 0.0
    %2746 = vadd.xlane.f32.xlu0 %v2745
    %v2747 = vpop.xlane.xlu0 %2746
    %v2748 = vmul.f32 %v2744, %v121
    %v2749 = vmul.f32 %v2747, %v121
    %v2750 = vadd.f32 %v2748, 1e-05
    %v2751 = vadd.f32 %v2749, 1e-05
    %v2752 = vrsqrt.pop %v2750
    %v2753 = vrsqrt.pop %v2751
    %v2754 = vmul.f32 %v2738, %v2752
    %v2755 = vmul.f32 %v2739, %v2753
    %v2756 = vlaneseq
    %v2757 = vshrl.u32 %v2756, 7
    %v2758 = vsub.s32 0, %v2757
    %v2759 = vrot.slane %v2728, %v2758
    %v2760 = vmul.f32 %v2754, %v2759
    %v2761 = vmul.f32 %v2755, %v2759
    %v2762 = vlaneseq
    %v2763 = vshrl.u32 %v2762, 7
    %v2764 = vsub.s32 0, %v2763
    %v2765 = vrot.slane %v2729, %v2764
    %v2766 = vadd.f32 %v2760, %v2765
    %v2767 = vadd.f32 %v2761, %v2765
    %2768 = vst.msk [vmem:[#allocation8] sm:$0xff] %vm114, %v2766
    %2769 = vst.msk [vmem:[#allocation8 + $0x8] sm:$0xff] %vm114, %v2767
    // Predicated region
    $region30: #{tpu_custom_call.1} parent=1 // pred_check
      _
    $region31: #{tpu_custom_call.1} parent=1 // pred_check_branch
      %2771 = sbr.rel (0) target = $region33
    $region32: #{tpu_custom_call.1} parent=1 // pred_region
      %s2773 = ssub.s32 256, 256
      %2774 = vsyncadd [#allocation4], %s2773
      %s2775 = sshll.u32 [#allocation8], 4
      %s2776 = int_to_ptr.vmem [resolvable:$true] %s2775
      %2781 = dma.vmem_to_hbm [thread:$0]  %s2776, 256, %s4, [#allocation4], 128, 128, 8
    $region33: #{tpu_custom_call.1} parent=1 // pred_fallthru
      _
    // Predicated region
    $region34: #{tpu_custom_call.1} parent=1 // pred_check
      _
    $region35: #{tpu_custom_call.1} parent=1 // pred_check_branch
      %2783 = sbr.rel (0) target = $region37
    $region36: #{tpu_custom_call.1} parent=1 // pred_region
      %2784 = dma.done [#allocation4], 256
    $region37: #{tpu_custom_call.1} parent=1 // pred_fallthru
      _
    %2785 = vsyncpa [#allocation3], 1
    %2786 = vsyncpa [#allocation6], 1
    %2787 = vsyncpa [#allocation4], 1

</llo_original>
